<compile_context>
chip_gen: v6e
topology: v6e:2x2x1
jax: 0.10.0
libtpu: 0.0.40
codegen_flags: <defaults>
</compile_context>

<pallas_src>
import functools

import jax
import jax.numpy as jnp
from jax.experimental import pallas as pl
from jax.experimental.pallas import tpu as pltpu

# ----------------------------- config ---------------------------------------
INPUT_FEATURES = 4
HIDDEN_DIM_G = 32
LAYERS_G = 2
BIDIRECTIONAL_G = True
NUM_DIRS = 2 if BIDIRECTIONAL_G else 1
DENSE_IN = NUM_DIRS * HIDDEN_DIM_G          # 64


# ----------------------------- fused kernel ----------------------------------
def gan_generator_kernel(x_ref,                     # (B, T, F)
                         w0_ref,                    # (F, 2G)  [Wih0_f | Wih0_b]
                         w1_ref,                    # (2H, 2G) [Wih1_f | Wih1_b], rows: [from h_f; from h_b]
                         whhb_ref,                  # (2, H+1, 2G): per layer [Whh_f|Whh_b] + fused bias row
                         wdb_ref,                   # (2H+1, F): dense weight rows + bias row
                         out_ref,                   # (B, T, F) or (B, F)
                         *, pretraining):
    B, T, F = x_ref.shape
    H = HIDDEN_DIM_G
    G = 4 * H                      # 128 -> one direction's gates = one lane-vreg
    R = 2 * B                      # row-stacked [fwd batch rows ; bwd batch rows]

    # Hoisted constant: rows [0, B) carry the forward direction.
    row_is_fwd = jax.lax.broadcasted_iota(jnp.int32, (R, G), 0) < B

    def run_layer(gi_cat, whh_cat):
        """One bidirectional LSTM layer, both directions in one unrolled loop.

        gi_cat : (T*B, 2G) time-major input projections (+bias);
                 cols [0:G] = forward gates, [G:2G] = backward gates.
        whh_cat: (H, 2G) = [Whh_fwd | Whh_bwd].
        Returns hs (Python list, length T) of (2B, H) values:
            hs[s][0:B]  = forward hidden at time s
            hs[s][B:2B] = backward hidden at time T-1-s
        """
        h = jnp.zeros((R, H), jnp.float32)
        c = jnp.zeros((R, H), jnp.float32)
        hs = []
        for s in range(T):                               # static full unroll
            # Input-projection gates for this step (independent of h, so the
            # scheduler can overlap them with the previous step's chain).
            g_f = gi_cat[s * B:(s + 1) * B, :G]
            g_b = gi_cat[(T - 1 - s) * B:(T - s) * B, G:]
            gin = jnp.concatenate([g_f, g_b], axis=0)     # (2B, G)

            # ONE MXU matmul for BOTH directions: (2B, H) @ (H, 2G) -> (2B, 2G),
            # then a per-row select between the fwd / bwd column blocks.  The
            # column blocks sit on a 128-lane boundary -> vreg-granular, no
            # lane shuffles on the recurrence chain.
            hh = jnp.dot(h, whh_cat, preferred_element_type=jnp.float32)
            gates = gin + jnp.where(row_is_fwd, hh[:, :G], hh[:, G:])

            # One full-width EUP pass per nonlinearity (gate order [i, f, g, o]).
            sig = jax.nn.sigmoid(gates)
            tnh = jnp.tanh(gates)
            c = sig[:, H:2 * H] * c + sig[:, :H] * tnh[:, 2 * H:3 * H]
            h = sig[:, 3 * H:] * jnp.tanh(c)
            hs.append(h)                                  # stays in vregs
        return hs

    # ---------------- time-major flattened input (rows ordered (t, b)) -------
    xv = x_ref[...]
    x_tm = jnp.concatenate([xv[:, t, :] for t in range(T)], axis=0)   # (T*B, F)

    # ---------------- layer 0 (hoisted input projection) ----------------
    l0 = whhb_ref[0]                                      # (H+1, 2G)
    gi0 = (jnp.dot(x_tm, w0_ref[...], preferred_element_type=jnp.float32)
           + l0[H:H + 1, :])
    hs0 = run_layer(gi0, l0[:H, :])

    # layer-0 outputs -> time-major slabs (one-time register packing, no scratch)
    h0f = jnp.concatenate([hs0[t][:B, :] for t in range(T)], axis=0)          # (T*B, H)
    h0b = jnp.concatenate([hs0[T - 1 - t][B:, :] for t in range(T)], axis=0)  # (T*B, H)

    # ---------------- layer 1 ----------------
    l1 = whhb_ref[1]
    w1 = w1_ref[...]
    gi1 = (jnp.dot(h0f, w1[:H, :], preferred_element_type=jnp.float32)
           + jnp.dot(h0b, w1[H:, :], preferred_element_type=jnp.float32)
           + l1[H:H + 1, :])
    hs1 = run_layer(gi1, l1[:H, :])

    # ---------------- dense + ReLU epilogue (VMEM/vreg resident) ----------------
    wdb = wdb_ref[...]
    wd_f = wdb[:H, :]
    wd_b = wdb[H:2 * H, :]
    bd = wdb[2 * H:2 * H + 1, :]

    if pretraining:
        # h_n of the last layer = (fwd state at t=T-1, bwd state at t=0) == hs1[-1]
        ypre = (jnp.dot(hs1[-1][:B, :], wd_f, preferred_element_type=jnp.float32)
                + jnp.dot(hs1[-1][B:, :], wd_b, preferred_element_type=jnp.float32)
                + bd)
        out_ref[...] = jnp.maximum(ypre, 0.0)
    else:
        h1f = jnp.concatenate([hs1[t][:B, :] for t in range(T)], axis=0)
        h1b = jnp.concatenate([hs1[T - 1 - t][B:, :] for t in range(T)], axis=0)
        y = (jnp.dot(h1f, wd_f, preferred_element_type=jnp.float32)
             + jnp.dot(h1b, wd_b, preferred_element_type=jnp.float32) + bd)
        y = jnp.maximum(y, 0.0)                           # (T*B, F), time-major
        for t in range(T):                                # tiny batch-first writeback
            out_ref[:, t, :] = y[t * B:(t + 1) * B, :]


# ----------------------------- wrapper ---------------------------------------
_VMEM = pl.BlockSpec(memory_space=pltpu.MemorySpace.VMEM)


@functools.partial(jax.jit, static_argnames=("pretraining",))
def gan_generator_forward(x, packed, pretraining=False):
    """x: (B, T, INPUT_FEATURES) float32; packed = pack_params(init_params(...)).

    Returns (B, T, INPUT_FEATURES) (normal) or (B, INPUT_FEATURES) (pretraining).
    The whole forward is ONE pallas_call; no XLA glue between stages.
    """
    B, T, _ = x.shape
    out_shape = (jax.ShapeDtypeStruct((B, INPUT_FEATURES), jnp.float32) if pretraining
                 else jax.ShapeDtypeStruct((B, T, INPUT_FEATURES), jnp.float32))
    return pl.pallas_call(
        functools.partial(gan_generator_kernel, pretraining=pretraining),
        out_shape=out_shape,
        in_specs=[_VMEM] * 5,
        out_specs=_VMEM,
    )(x, packed["w0"], packed["w1"], packed["whhb"], packed["wdb"])


# ----------------------------- param init / packing --------------------------
def init_params(key):
    """Deterministic synthetic parameters (PyTorch-style uniform(-1/sqrt(H), 1/sqrt(H))).

    LSTM weights per layer, stacked per direction: w_ih (2, Fin, 4H),
    w_hh (2, H, 4H), b (2, 1, 4H) with gate order [i, f, g, o] and
    b = b_ih + b_hh folded.
    """
    k = 1.0 / jnp.sqrt(jnp.float32(HIDDEN_DIM_G))
    lstm = []
    for layer in range(LAYERS_G):
        fin = INPUT_FEATURES if layer == 0 else DENSE_IN
        key, k1, k2, k3 = jax.random.split(key, 4)
        w_ih = jax.random.uniform(k1, (NUM_DIRS, fin, 4 * HIDDEN_DIM_G), jnp.float32, -k, k)
        w_hh = jax.random.uniform(k2, (NUM_DIRS, HIDDEN_DIM_G, 4 * HIDDEN_DIM_G), jnp.float32, -k, k)
        b = jax.random.uniform(k3, (NUM_DIRS, 1, 4 * HIDDEN_DIM_G), jnp.float32, -k, k)
        lstm.append((w_ih, w_hh, b))
    key, k1, k2 = jax.random.split(key, 3)
    kd = 1.0 / jnp.sqrt(jnp.float32(DENSE_IN))
    w_d = jax.random.uniform(k1, (DENSE_IN, INPUT_FEATURES), jnp.float32, -kd, kd)
    b_d = jax.random.uniform(k2, (1, INPUT_FEATURES), jnp.float32, -kd, kd)
    return {"lstm": lstm, "dense": (w_d, b_d)}


def pack_params(params):
    """Pack per-direction weights into the few lane-concatenated buffers the
    kernel consumes (reduces input DMA descriptor count and in-kernel slicing)."""
    (wih0, whh0, b0), (wih1, whh1, b1) = params["lstm"]
    wd, bd = params["dense"]
    H = HIDDEN_DIM_G

    w0 = jnp.concatenate([wih0[0], wih0[1]], axis=1)          # (F, 2G)
    w1 = jnp.concatenate([wih1[0], wih1[1]], axis=1)          # (2H, 2G)

    def layer_pack(w_hh, b):
        whh_cat = jnp.concatenate([w_hh[0], w_hh[1]], axis=1)  # (H, 2G)
        b_cat = jnp.concatenate([b[0], b[1]], axis=1)          # (1, 2G)
        return jnp.concatenate([whh_cat, b_cat], axis=0)       # (H+1, 2G)

    whhb = jnp.stack([layer_pack(whh0, b0), layer_pack(whh1, b1)], axis=0)  # (2, H+1, 2G)
    wdb = jnp.concatenate([wd, bd], axis=0)                    # (2H+1, F)
    return {"w0": w0, "w1": w1, "whhb": whhb, "wdb": wdb}


# ----------------------------- pure-JAX reference ----------------------------
def _ref_lstm_direction(x_tm, w_ih, w_hh, b):
    T, B, _ = x_tm.shape
    H = w_hh.shape[0]

    def step(carry, x_t):
        h, c = carry
        gates = x_t @ w_ih + h @ w_hh + b
        i_g = jax.nn.sigmoid(gates[:, :H])
        f_g = jax.nn.sigmoid(gates[:, H:2 * H])
        g_g = jnp.tanh(gates[:, 2 * H:3 * H])
        o_g = jax.nn.sigmoid(gates[:, 3 * H:])
        c_new = f_g * c + i_g * g_g
        h_new = o_g * jnp.tanh(c_new)
        return (h_new, c_new), h_new

    init = (jnp.zeros((B, H), jnp.float32), jnp.zeros((B, H), jnp.float32))
    _, outs = jax.lax.scan(step, init, x_tm)
    return outs


def ref_forward(x, params, pretraining=False):
    layer_in = x
    out = None
    for layer in range(LAYERS_G):
        w_ih, w_hh, b = params["lstm"][layer]
        x_tm = jnp.transpose(layer_in, (1, 0, 2))
        dir_outs = []
        for d in range(NUM_DIRS):
            if d == 0:
                o = _ref_lstm_direction(x_tm, w_ih[d], w_hh[d], b[d])
            else:
                o = jnp.flip(_ref_lstm_direction(jnp.flip(x_tm, 0), w_ih[d], w_hh[d], b[d]), 0)
            dir_outs.append(o)
        out = jnp.transpose(jnp.concatenate(dir_outs, -1), (1, 0, 2))
        layer_in = out
    w_d, b_d = params["dense"]
    if pretraining:
        # h_n of the last layer: per-sample [fwd final (t=T-1) | bwd final (t=0)]
        h_fwd = out[:, -1, :HIDDEN_DIM_G]
        h_bwd = out[:, 0, HIDDEN_DIM_G:]
        h_last = jnp.concatenate([h_fwd, h_bwd], axis=-1)
        return jnp.maximum(h_last @ w_d + b_d, 0.0)
    return jnp.maximum(out @ w_d + b_d, 0.0)


# ----------------------------- main ------------------------------------------
if __name__ == "__main__":
    key = jax.random.PRNGKey(0)
    key, kx, kp = jax.random.split(key, 3)

    B, T = 2, 8
    x = jax.random.uniform(kx, (B, T, INPUT_FEATURES), jnp.float32)  # noise-like input
    params = init_params(kp)
    packed = pack_params(params)

    # normal path
    y = jax.block_until_ready(gan_generator_forward(x, packed, pretraining=False))
    y_ref = jax.block_until_ready(ref_forward(x, params, pretraining=False))
    assert y.shape == (B, T, INPUT_FEATURES)
    assert jnp.allclose(y, y_ref, atol=1e-5, rtol=1e-5), "mismatch vs pure-JAX reference"

    # pretraining path
    y_pre = jax.block_until_ready(gan_generator_forward(x, packed, pretraining=True))
    y_pre_ref = jax.block_until_ready(ref_forward(x, params, pretraining=True))
    assert y_pre.shape == (B, INPUT_FEATURES)
    assert jnp.allclose(y_pre, y_pre_ref, atol=1e-5, rtol=1e-5), "pretraining mismatch vs reference"

    print("KERNEL_OK")
</pallas_src>

<mosaic_0001>
module attributes {stable_mosaic.version = 11 : i64} {
  func.func @gan_generator_kernel(%arg0: memref<2x8x4xf32, #tpu.memory_space<vmem>>, %arg1: memref<4x256xf32, #tpu.memory_space<vmem>>, %arg2: memref<64x256xf32, #tpu.memory_space<vmem>>, %arg3: memref<2x33x256xf32, #tpu.memory_space<vmem>>, %arg4: memref<65x4xf32, #tpu.memory_space<vmem>>, %arg5: memref<2x8x4xf32, #tpu.memory_space<vmem>>) attributes {dimension_semantics = [], scalar_prefetch = 0 : i64, scratch_operands = 0 : i64, tpu.core_type = #tpu.core_type<tc>} {
    %0 = tpu.iota {dimensions = array<i32: 0>} : vector<4x128xi32>
    %c2_i32 = arith.constant 2 : i32
    %1 = vector.broadcast %c2_i32 : i32 to vector<4x128xi32>
    %2 = arith.cmpi slt, %0, %1 : vector<4x128xi32>
    %c0 = arith.constant 0 : index
    %c0_0 = arith.constant 0 : index
    %c0_1 = arith.constant 0 : index
    %3 = vector.load %arg0[%c0, %c0_0, %c0_1] : memref<2x8x4xf32, #tpu.memory_space<vmem>>, vector<2x8x4xf32>
    %4 = vector.extract_strided_slice %3 {offsets = [0, 0, 0], sizes = [2, 1, 4], strides = [1, 1, 1]} : vector<2x8x4xf32> to vector<2x1x4xf32>
    %5 = vector.shape_cast %4 : vector<2x1x4xf32> to vector<2x4xf32>
    %6 = vector.extract_strided_slice %3 {offsets = [0, 1, 0], sizes = [2, 1, 4], strides = [1, 1, 1]} : vector<2x8x4xf32> to vector<2x1x4xf32>
    %7 = vector.shape_cast %6 : vector<2x1x4xf32> to vector<2x4xf32>
    %8 = vector.extract_strided_slice %3 {offsets = [0, 2, 0], sizes = [2, 1, 4], strides = [1, 1, 1]} : vector<2x8x4xf32> to vector<2x1x4xf32>
    %9 = vector.shape_cast %8 : vector<2x1x4xf32> to vector<2x4xf32>
    %10 = vector.extract_strided_slice %3 {offsets = [0, 3, 0], sizes = [2, 1, 4], strides = [1, 1, 1]} : vector<2x8x4xf32> to vector<2x1x4xf32>
    %11 = vector.shape_cast %10 : vector<2x1x4xf32> to vector<2x4xf32>
    %12 = vector.extract_strided_slice %3 {offsets = [0, 4, 0], sizes = [2, 1, 4], strides = [1, 1, 1]} : vector<2x8x4xf32> to vector<2x1x4xf32>
    %13 = vector.shape_cast %12 : vector<2x1x4xf32> to vector<2x4xf32>
    %14 = vector.extract_strided_slice %3 {offsets = [0, 5, 0], sizes = [2, 1, 4], strides = [1, 1, 1]} : vector<2x8x4xf32> to vector<2x1x4xf32>
    %15 = vector.shape_cast %14 : vector<2x1x4xf32> to vector<2x4xf32>
    %16 = vector.extract_strided_slice %3 {offsets = [0, 6, 0], sizes = [2, 1, 4], strides = [1, 1, 1]} : vector<2x8x4xf32> to vector<2x1x4xf32>
    %17 = vector.shape_cast %16 : vector<2x1x4xf32> to vector<2x4xf32>
    %18 = vector.extract_strided_slice %3 {offsets = [0, 7, 0], sizes = [2, 1, 4], strides = [1, 1, 1]} : vector<2x8x4xf32> to vector<2x1x4xf32>
    %19 = vector.shape_cast %18 : vector<2x1x4xf32> to vector<2x4xf32>
    %20 = tpu.concatenate %5, %7, %9, %11, %13, %15, %17, %19 in 0 : vector<2x4xf32>, vector<2x4xf32>, vector<2x4xf32>, vector<2x4xf32>, vector<2x4xf32>, vector<2x4xf32>, vector<2x4xf32>, vector<2x4xf32> -> vector<16x4xf32>
    %c0_2 = arith.constant 0 : index
    %c0_3 = arith.constant 0 : index
    %c0_4 = arith.constant 0 : index
    %21 = vector.load %arg3[%c0_2, %c0_3, %c0_4] : memref<2x33x256xf32, #tpu.memory_space<vmem>>, vector<1x33x256xf32>
    %22 = vector.shape_cast %21 : vector<1x33x256xf32> to vector<33x256xf32>
    %c0_5 = arith.constant 0 : index
    %c0_6 = arith.constant 0 : index
    %23 = vector.load %arg1[%c0_5, %c0_6] : memref<4x256xf32, #tpu.memory_space<vmem>>, vector<4x256xf32>
    %cst = arith.constant dense<0.000000e+00> : vector<16x256xf32>
    %24 = tpu.matmul %20, %23, %cst {dimension_numbers = #tpu.dot_dimension_numbers<[1], [0], [0], [1], [0, 0, 1, 1], [], []>} : vector<16x4xf32>, vector<4x256xf32>, vector<16x256xf32> -> vector<16x256xf32>
    %25 = vector.extract_strided_slice %22 {offsets = [32, 0], sizes = [1, 256], strides = [1, 1]} : vector<33x256xf32> to vector<1x256xf32>
    %26 = vector.broadcast %25 : vector<1x256xf32> to vector<16x256xf32>
    %27 = arith.addf %24, %26 : vector<16x256xf32>
    %28 = vector.extract_strided_slice %22 {offsets = [0, 0], sizes = [32, 256], strides = [1, 1]} : vector<33x256xf32> to vector<32x256xf32>
    %cst_7 = arith.constant 0.000000e+00 : f32
    %29 = vector.broadcast %cst_7 : f32 to vector<4x32xf32>
    %cst_8 = arith.constant 0.000000e+00 : f32
    %30 = vector.broadcast %cst_8 : f32 to vector<4x32xf32>
    %31 = vector.extract_strided_slice %27 {offsets = [0, 0], sizes = [2, 128], strides = [1, 1]} : vector<16x256xf32> to vector<2x128xf32>
    %32 = vector.extract_strided_slice %27 {offsets = [14, 128], sizes = [2, 128], strides = [1, 1]} : vector<16x256xf32> to vector<2x128xf32>
    %33 = tpu.concatenate %31, %32 in 0 : vector<2x128xf32>, vector<2x128xf32> -> vector<4x128xf32>
    %cst_9 = arith.constant dense<0.000000e+00> : vector<4x256xf32>
    %34 = tpu.matmul %29, %28, %cst_9 {dimension_numbers = #tpu.dot_dimension_numbers<[1], [0], [0], [1], [0, 0, 1, 1], [], []>} : vector<4x32xf32>, vector<32x256xf32>, vector<4x256xf32> -> vector<4x256xf32>
    %35 = vector.extract_strided_slice %34 {offsets = [0, 0], sizes = [4, 128], strides = [1, 1]} : vector<4x256xf32> to vector<4x128xf32>
    %36 = vector.extract_strided_slice %34 {offsets = [0, 128], sizes = [4, 128], strides = [1, 1]} : vector<4x256xf32> to vector<4x128xf32>
    %37 = arith.select %2, %35, %36 : vector<4x128xi1>, vector<4x128xf32>
    %38 = arith.addf %33, %37 : vector<4x128xf32>
    %39 = arith.negf %38 : vector<4x128xf32>
    %40 = math.exp %39 : vector<4x128xf32>
    %cst_10 = arith.constant 1.000000e+00 : f32
    %41 = vector.broadcast %cst_10 : f32 to vector<4x128xf32>
    %42 = arith.addf %41, %40 : vector<4x128xf32>
    %43 = arith.divf %41, %42 : vector<4x128xf32>
    %44 = math.tanh %38 : vector<4x128xf32>
    %45 = vector.extract_strided_slice %43 {offsets = [0, 32], sizes = [4, 32], strides = [1, 1]} : vector<4x128xf32> to vector<4x32xf32>
    %46 = arith.mulf %45, %30 : vector<4x32xf32>
    %47 = vector.extract_strided_slice %43 {offsets = [0, 0], sizes = [4, 32], strides = [1, 1]} : vector<4x128xf32> to vector<4x32xf32>
    %48 = vector.extract_strided_slice %44 {offsets = [0, 64], sizes = [4, 32], strides = [1, 1]} : vector<4x128xf32> to vector<4x32xf32>
    %49 = arith.mulf %47, %48 : vector<4x32xf32>
    %50 = arith.addf %46, %49 : vector<4x32xf32>
    %51 = vector.extract_strided_slice %43 {offsets = [0, 96], sizes = [4, 32], strides = [1, 1]} : vector<4x128xf32> to vector<4x32xf32>
    %52 = math.tanh %50 : vector<4x32xf32>
    %53 = arith.mulf %51, %52 : vector<4x32xf32>
    %54 = vector.extract_strided_slice %27 {offsets = [2, 0], sizes = [2, 128], strides = [1, 1]} : vector<16x256xf32> to vector<2x128xf32>
    %55 = vector.extract_strided_slice %27 {offsets = [12, 128], sizes = [2, 128], strides = [1, 1]} : vector<16x256xf32> to vector<2x128xf32>
    %56 = tpu.concatenate %54, %55 in 0 : vector<2x128xf32>, vector<2x128xf32> -> vector<4x128xf32>
    %cst_11 = arith.constant dense<0.000000e+00> : vector<4x256xf32>
    %57 = tpu.matmul %53, %28, %cst_11 {dimension_numbers = #tpu.dot_dimension_numbers<[1], [0], [0], [1], [0, 0, 1, 1], [], []>} : vector<4x32xf32>, vector<32x256xf32>, vector<4x256xf32> -> vector<4x256xf32>
    %58 = vector.extract_strided_slice %57 {offsets = [0, 0], sizes = [4, 128], strides = [1, 1]} : vector<4x256xf32> to vector<4x128xf32>
    %59 = vector.extract_strided_slice %57 {offsets = [0, 128], sizes = [4, 128], strides = [1, 1]} : vector<4x256xf32> to vector<4x128xf32>
    %60 = arith.select %2, %58, %59 : vector<4x128xi1>, vector<4x128xf32>
    %61 = arith.addf %56, %60 : vector<4x128xf32>
    %62 = arith.negf %61 : vector<4x128xf32>
    %63 = math.exp %62 : vector<4x128xf32>
    %cst_12 = arith.constant 1.000000e+00 : f32
    %64 = vector.broadcast %cst_12 : f32 to vector<4x128xf32>
    %65 = arith.addf %64, %63 : vector<4x128xf32>
    %66 = arith.divf %64, %65 : vector<4x128xf32>
    %67 = math.tanh %61 : vector<4x128xf32>
    %68 = vector.extract_strided_slice %66 {offsets = [0, 32], sizes = [4, 32], strides = [1, 1]} : vector<4x128xf32> to vector<4x32xf32>
    %69 = arith.mulf %68, %50 : vector<4x32xf32>
    %70 = vector.extract_strided_slice %66 {offsets = [0, 0], sizes = [4, 32], strides = [1, 1]} : vector<4x128xf32> to vector<4x32xf32>
    %71 = vector.extract_strided_slice %67 {offsets = [0, 64], sizes = [4, 32], strides = [1, 1]} : vector<4x128xf32> to vector<4x32xf32>
    %72 = arith.mulf %70, %71 : vector<4x32xf32>
    %73 = arith.addf %69, %72 : vector<4x32xf32>
    %74 = vector.extract_strided_slice %66 {offsets = [0, 96], sizes = [4, 32], strides = [1, 1]} : vector<4x128xf32> to vector<4x32xf32>
    %75 = math.tanh %73 : vector<4x32xf32>
    %76 = arith.mulf %74, %75 : vector<4x32xf32>
    %77 = vector.extract_strided_slice %27 {offsets = [4, 0], sizes = [2, 128], strides = [1, 1]} : vector<16x256xf32> to vector<2x128xf32>
    %78 = vector.extract_strided_slice %27 {offsets = [10, 128], sizes = [2, 128], strides = [1, 1]} : vector<16x256xf32> to vector<2x128xf32>
    %79 = tpu.concatenate %77, %78 in 0 : vector<2x128xf32>, vector<2x128xf32> -> vector<4x128xf32>
    %cst_13 = arith.constant dense<0.000000e+00> : vector<4x256xf32>
    %80 = tpu.matmul %76, %28, %cst_13 {dimension_numbers = #tpu.dot_dimension_numbers<[1], [0], [0], [1], [0, 0, 1, 1], [], []>} : vector<4x32xf32>, vector<32x256xf32>, vector<4x256xf32> -> vector<4x256xf32>
    %81 = vector.extract_strided_slice %80 {offsets = [0, 0], sizes = [4, 128], strides = [1, 1]} : vector<4x256xf32> to vector<4x128xf32>
    %82 = vector.extract_strided_slice %80 {offsets = [0, 128], sizes = [4, 128], strides = [1, 1]} : vector<4x256xf32> to vector<4x128xf32>
    %83 = arith.select %2, %81, %82 : vector<4x128xi1>, vector<4x128xf32>
    %84 = arith.addf %79, %83 : vector<4x128xf32>
    %85 = arith.negf %84 : vector<4x128xf32>
    %86 = math.exp %85 : vector<4x128xf32>
    %cst_14 = arith.constant 1.000000e+00 : f32
    %87 = vector.broadcast %cst_14 : f32 to vector<4x128xf32>
    %88 = arith.addf %87, %86 : vector<4x128xf32>
    %89 = arith.divf %87, %88 : vector<4x128xf32>
    %90 = math.tanh %84 : vector<4x128xf32>
    %91 = vector.extract_strided_slice %89 {offsets = [0, 32], sizes = [4, 32], strides = [1, 1]} : vector<4x128xf32> to vector<4x32xf32>
    %92 = arith.mulf %91, %73 : vector<4x32xf32>
    %93 = vector.extract_strided_slice %89 {offsets = [0, 0], sizes = [4, 32], strides = [1, 1]} : vector<4x128xf32> to vector<4x32xf32>
    %94 = vector.extract_strided_slice %90 {offsets = [0, 64], sizes = [4, 32], strides = [1, 1]} : vector<4x128xf32> to vector<4x32xf32>
    %95 = arith.mulf %93, %94 : vector<4x32xf32>
    %96 = arith.addf %92, %95 : vector<4x32xf32>
    %97 = vector.extract_strided_slice %89 {offsets = [0, 96], sizes = [4, 32], strides = [1, 1]} : vector<4x128xf32> to vector<4x32xf32>
    %98 = math.tanh %96 : vector<4x32xf32>
    %99 = arith.mulf %97, %98 : vector<4x32xf32>
    %100 = vector.extract_strided_slice %27 {offsets = [6, 0], sizes = [2, 128], strides = [1, 1]} : vector<16x256xf32> to vector<2x128xf32>
    %101 = vector.extract_strided_slice %27 {offsets = [8, 128], sizes = [2, 128], strides = [1, 1]} : vector<16x256xf32> to vector<2x128xf32>
    %102 = tpu.concatenate %100, %101 in 0 : vector<2x128xf32>, vector<2x128xf32> -> vector<4x128xf32>
    %cst_15 = arith.constant dense<0.000000e+00> : vector<4x256xf32>
    %103 = tpu.matmul %99, %28, %cst_15 {dimension_numbers = #tpu.dot_dimension_numbers<[1], [0], [0], [1], [0, 0, 1, 1], [], []>} : vector<4x32xf32>, vector<32x256xf32>, vector<4x256xf32> -> vector<4x256xf32>
    %104 = vector.extract_strided_slice %103 {offsets = [0, 0], sizes = [4, 128], strides = [1, 1]} : vector<4x256xf32> to vector<4x128xf32>
    %105 = vector.extract_strided_slice %103 {offsets = [0, 128], sizes = [4, 128], strides = [1, 1]} : vector<4x256xf32> to vector<4x128xf32>
    %106 = arith.select %2, %104, %105 : vector<4x128xi1>, vector<4x128xf32>
    %107 = arith.addf %102, %106 : vector<4x128xf32>
    %108 = arith.negf %107 : vector<4x128xf32>
    %109 = math.exp %108 : vector<4x128xf32>
    %cst_16 = arith.constant 1.000000e+00 : f32
    %110 = vector.broadcast %cst_16 : f32 to vector<4x128xf32>
    %111 = arith.addf %110, %109 : vector<4x128xf32>
    %112 = arith.divf %110, %111 : vector<4x128xf32>
    %113 = math.tanh %107 : vector<4x128xf32>
    %114 = vector.extract_strided_slice %112 {offsets = [0, 32], sizes = [4, 32], strides = [1, 1]} : vector<4x128xf32> to vector<4x32xf32>
    %115 = arith.mulf %114, %96 : vector<4x32xf32>
    %116 = vector.extract_strided_slice %112 {offsets = [0, 0], sizes = [4, 32], strides = [1, 1]} : vector<4x128xf32> to vector<4x32xf32>
    %117 = vector.extract_strided_slice %113 {offsets = [0, 64], sizes = [4, 32], strides = [1, 1]} : vector<4x128xf32> to vector<4x32xf32>
    %118 = arith.mulf %116, %117 : vector<4x32xf32>
    %119 = arith.addf %115, %118 : vector<4x32xf32>
    %120 = vector.extract_strided_slice %112 {offsets = [0, 96], sizes = [4, 32], strides = [1, 1]} : vector<4x128xf32> to vector<4x32xf32>
    %121 = math.tanh %119 : vector<4x32xf32>
    %122 = arith.mulf %120, %121 : vector<4x32xf32>
    %123 = vector.extract_strided_slice %27 {offsets = [8, 0], sizes = [2, 128], strides = [1, 1]} : vector<16x256xf32> to vector<2x128xf32>
    %124 = vector.extract_strided_slice %27 {offsets = [6, 128], sizes = [2, 128], strides = [1, 1]} : vector<16x256xf32> to vector<2x128xf32>
    %125 = tpu.concatenate %123, %124 in 0 : vector<2x128xf32>, vector<2x128xf32> -> vector<4x128xf32>
    %cst_17 = arith.constant dense<0.000000e+00> : vector<4x256xf32>
    %126 = tpu.matmul %122, %28, %cst_17 {dimension_numbers = #tpu.dot_dimension_numbers<[1], [0], [0], [1], [0, 0, 1, 1], [], []>} : vector<4x32xf32>, vector<32x256xf32>, vector<4x256xf32> -> vector<4x256xf32>
    %127 = vector.extract_strided_slice %126 {offsets = [0, 0], sizes = [4, 128], strides = [1, 1]} : vector<4x256xf32> to vector<4x128xf32>
    %128 = vector.extract_strided_slice %126 {offsets = [0, 128], sizes = [4, 128], strides = [1, 1]} : vector<4x256xf32> to vector<4x128xf32>
    %129 = arith.select %2, %127, %128 : vector<4x128xi1>, vector<4x128xf32>
    %130 = arith.addf %125, %129 : vector<4x128xf32>
    %131 = arith.negf %130 : vector<4x128xf32>
    %132 = math.exp %131 : vector<4x128xf32>
    %cst_18 = arith.constant 1.000000e+00 : f32
    %133 = vector.broadcast %cst_18 : f32 to vector<4x128xf32>
    %134 = arith.addf %133, %132 : vector<4x128xf32>
    %135 = arith.divf %133, %134 : vector<4x128xf32>
    %136 = math.tanh %130 : vector<4x128xf32>
    %137 = vector.extract_strided_slice %135 {offsets = [0, 32], sizes = [4, 32], strides = [1, 1]} : vector<4x128xf32> to vector<4x32xf32>
    %138 = arith.mulf %137, %119 : vector<4x32xf32>
    %139 = vector.extract_strided_slice %135 {offsets = [0, 0], sizes = [4, 32], strides = [1, 1]} : vector<4x128xf32> to vector<4x32xf32>
    %140 = vector.extract_strided_slice %136 {offsets = [0, 64], sizes = [4, 32], strides = [1, 1]} : vector<4x128xf32> to vector<4x32xf32>
    %141 = arith.mulf %139, %140 : vector<4x32xf32>
    %142 = arith.addf %138, %141 : vector<4x32xf32>
    %143 = vector.extract_strided_slice %135 {offsets = [0, 96], sizes = [4, 32], strides = [1, 1]} : vector<4x128xf32> to vector<4x32xf32>
    %144 = math.tanh %142 : vector<4x32xf32>
    %145 = arith.mulf %143, %144 : vector<4x32xf32>
    %146 = vector.extract_strided_slice %27 {offsets = [10, 0], sizes = [2, 128], strides = [1, 1]} : vector<16x256xf32> to vector<2x128xf32>
    %147 = vector.extract_strided_slice %27 {offsets = [4, 128], sizes = [2, 128], strides = [1, 1]} : vector<16x256xf32> to vector<2x128xf32>
    %148 = tpu.concatenate %146, %147 in 0 : vector<2x128xf32>, vector<2x128xf32> -> vector<4x128xf32>
    %cst_19 = arith.constant dense<0.000000e+00> : vector<4x256xf32>
    %149 = tpu.matmul %145, %28, %cst_19 {dimension_numbers = #tpu.dot_dimension_numbers<[1], [0], [0], [1], [0, 0, 1, 1], [], []>} : vector<4x32xf32>, vector<32x256xf32>, vector<4x256xf32> -> vector<4x256xf32>
    %150 = vector.extract_strided_slice %149 {offsets = [0, 0], sizes = [4, 128], strides = [1, 1]} : vector<4x256xf32> to vector<4x128xf32>
    %151 = vector.extract_strided_slice %149 {offsets = [0, 128], sizes = [4, 128], strides = [1, 1]} : vector<4x256xf32> to vector<4x128xf32>
    %152 = arith.select %2, %150, %151 : vector<4x128xi1>, vector<4x128xf32>
    %153 = arith.addf %148, %152 : vector<4x128xf32>
    %154 = arith.negf %153 : vector<4x128xf32>
    %155 = math.exp %154 : vector<4x128xf32>
    %cst_20 = arith.constant 1.000000e+00 : f32
    %156 = vector.broadcast %cst_20 : f32 to vector<4x128xf32>
    %157 = arith.addf %156, %155 : vector<4x128xf32>
    %158 = arith.divf %156, %157 : vector<4x128xf32>
    %159 = math.tanh %153 : vector<4x128xf32>
    %160 = vector.extract_strided_slice %158 {offsets = [0, 32], sizes = [4, 32], strides = [1, 1]} : vector<4x128xf32> to vector<4x32xf32>
    %161 = arith.mulf %160, %142 : vector<4x32xf32>
    %162 = vector.extract_strided_slice %158 {offsets = [0, 0], sizes = [4, 32], strides = [1, 1]} : vector<4x128xf32> to vector<4x32xf32>
    %163 = vector.extract_strided_slice %159 {offsets = [0, 64], sizes = [4, 32], strides = [1, 1]} : vector<4x128xf32> to vector<4x32xf32>
    %164 = arith.mulf %162, %163 : vector<4x32xf32>
    %165 = arith.addf %161, %164 : vector<4x32xf32>
    %166 = vector.extract_strided_slice %158 {offsets = [0, 96], sizes = [4, 32], strides = [1, 1]} : vector<4x128xf32> to vector<4x32xf32>
    %167 = math.tanh %165 : vector<4x32xf32>
    %168 = arith.mulf %166, %167 : vector<4x32xf32>
    %169 = vector.extract_strided_slice %27 {offsets = [12, 0], sizes = [2, 128], strides = [1, 1]} : vector<16x256xf32> to vector<2x128xf32>
    %170 = vector.extract_strided_slice %27 {offsets = [2, 128], sizes = [2, 128], strides = [1, 1]} : vector<16x256xf32> to vector<2x128xf32>
    %171 = tpu.concatenate %169, %170 in 0 : vector<2x128xf32>, vector<2x128xf32> -> vector<4x128xf32>
    %cst_21 = arith.constant dense<0.000000e+00> : vector<4x256xf32>
    %172 = tpu.matmul %168, %28, %cst_21 {dimension_numbers = #tpu.dot_dimension_numbers<[1], [0], [0], [1], [0, 0, 1, 1], [], []>} : vector<4x32xf32>, vector<32x256xf32>, vector<4x256xf32> -> vector<4x256xf32>
    %173 = vector.extract_strided_slice %172 {offsets = [0, 0], sizes = [4, 128], strides = [1, 1]} : vector<4x256xf32> to vector<4x128xf32>
    %174 = vector.extract_strided_slice %172 {offsets = [0, 128], sizes = [4, 128], strides = [1, 1]} : vector<4x256xf32> to vector<4x128xf32>
    %175 = arith.select %2, %173, %174 : vector<4x128xi1>, vector<4x128xf32>
    %176 = arith.addf %171, %175 : vector<4x128xf32>
    %177 = arith.negf %176 : vector<4x128xf32>
    %178 = math.exp %177 : vector<4x128xf32>
    %cst_22 = arith.constant 1.000000e+00 : f32
    %179 = vector.broadcast %cst_22 : f32 to vector<4x128xf32>
    %180 = arith.addf %179, %178 : vector<4x128xf32>
    %181 = arith.divf %179, %180 : vector<4x128xf32>
    %182 = math.tanh %176 : vector<4x128xf32>
    %183 = vector.extract_strided_slice %181 {offsets = [0, 32], sizes = [4, 32], strides = [1, 1]} : vector<4x128xf32> to vector<4x32xf32>
    %184 = arith.mulf %183, %165 : vector<4x32xf32>
    %185 = vector.extract_strided_slice %181 {offsets = [0, 0], sizes = [4, 32], strides = [1, 1]} : vector<4x128xf32> to vector<4x32xf32>
    %186 = vector.extract_strided_slice %182 {offsets = [0, 64], sizes = [4, 32], strides = [1, 1]} : vector<4x128xf32> to vector<4x32xf32>
    %187 = arith.mulf %185, %186 : vector<4x32xf32>
    %188 = arith.addf %184, %187 : vector<4x32xf32>
    %189 = vector.extract_strided_slice %181 {offsets = [0, 96], sizes = [4, 32], strides = [1, 1]} : vector<4x128xf32> to vector<4x32xf32>
    %190 = math.tanh %188 : vector<4x32xf32>
    %191 = arith.mulf %189, %190 : vector<4x32xf32>
    %192 = vector.extract_strided_slice %27 {offsets = [14, 0], sizes = [2, 128], strides = [1, 1]} : vector<16x256xf32> to vector<2x128xf32>
    %193 = vector.extract_strided_slice %27 {offsets = [0, 128], sizes = [2, 128], strides = [1, 1]} : vector<16x256xf32> to vector<2x128xf32>
    %194 = tpu.concatenate %192, %193 in 0 : vector<2x128xf32>, vector<2x128xf32> -> vector<4x128xf32>
    %cst_23 = arith.constant dense<0.000000e+00> : vector<4x256xf32>
    %195 = tpu.matmul %191, %28, %cst_23 {dimension_numbers = #tpu.dot_dimension_numbers<[1], [0], [0], [1], [0, 0, 1, 1], [], []>} : vector<4x32xf32>, vector<32x256xf32>, vector<4x256xf32> -> vector<4x256xf32>
    %196 = vector.extract_strided_slice %195 {offsets = [0, 0], sizes = [4, 128], strides = [1, 1]} : vector<4x256xf32> to vector<4x128xf32>
    %197 = vector.extract_strided_slice %195 {offsets = [0, 128], sizes = [4, 128], strides = [1, 1]} : vector<4x256xf32> to vector<4x128xf32>
    %198 = arith.select %2, %196, %197 : vector<4x128xi1>, vector<4x128xf32>
    %199 = arith.addf %194, %198 : vector<4x128xf32>
    %200 = arith.negf %199 : vector<4x128xf32>
    %201 = math.exp %200 : vector<4x128xf32>
    %cst_24 = arith.constant 1.000000e+00 : f32
    %202 = vector.broadcast %cst_24 : f32 to vector<4x128xf32>
    %203 = arith.addf %202, %201 : vector<4x128xf32>
    %204 = arith.divf %202, %203 : vector<4x128xf32>
    %205 = math.tanh %199 : vector<4x128xf32>
    %206 = vector.extract_strided_slice %204 {offsets = [0, 32], sizes = [4, 32], strides = [1, 1]} : vector<4x128xf32> to vector<4x32xf32>
    %207 = arith.mulf %206, %188 : vector<4x32xf32>
    %208 = vector.extract_strided_slice %204 {offsets = [0, 0], sizes = [4, 32], strides = [1, 1]} : vector<4x128xf32> to vector<4x32xf32>
    %209 = vector.extract_strided_slice %205 {offsets = [0, 64], sizes = [4, 32], strides = [1, 1]} : vector<4x128xf32> to vector<4x32xf32>
    %210 = arith.mulf %208, %209 : vector<4x32xf32>
    %211 = arith.addf %207, %210 : vector<4x32xf32>
    %212 = vector.extract_strided_slice %204 {offsets = [0, 96], sizes = [4, 32], strides = [1, 1]} : vector<4x128xf32> to vector<4x32xf32>
    %213 = math.tanh %211 : vector<4x32xf32>
    %214 = arith.mulf %212, %213 : vector<4x32xf32>
    %215 = vector.extract_strided_slice %53 {offsets = [0, 0], sizes = [2, 32], strides = [1, 1]} : vector<4x32xf32> to vector<2x32xf32>
    %216 = vector.extract_strided_slice %76 {offsets = [0, 0], sizes = [2, 32], strides = [1, 1]} : vector<4x32xf32> to vector<2x32xf32>
    %217 = vector.extract_strided_slice %99 {offsets = [0, 0], sizes = [2, 32], strides = [1, 1]} : vector<4x32xf32> to vector<2x32xf32>
    %218 = vector.extract_strided_slice %122 {offsets = [0, 0], sizes = [2, 32], strides = [1, 1]} : vector<4x32xf32> to vector<2x32xf32>
    %219 = vector.extract_strided_slice %145 {offsets = [0, 0], sizes = [2, 32], strides = [1, 1]} : vector<4x32xf32> to vector<2x32xf32>
    %220 = vector.extract_strided_slice %168 {offsets = [0, 0], sizes = [2, 32], strides = [1, 1]} : vector<4x32xf32> to vector<2x32xf32>
    %221 = vector.extract_strided_slice %191 {offsets = [0, 0], sizes = [2, 32], strides = [1, 1]} : vector<4x32xf32> to vector<2x32xf32>
    %222 = vector.extract_strided_slice %214 {offsets = [0, 0], sizes = [2, 32], strides = [1, 1]} : vector<4x32xf32> to vector<2x32xf32>
    %223 = tpu.concatenate %215, %216, %217, %218, %219, %220, %221, %222 in 0 : vector<2x32xf32>, vector<2x32xf32>, vector<2x32xf32>, vector<2x32xf32>, vector<2x32xf32>, vector<2x32xf32>, vector<2x32xf32>, vector<2x32xf32> -> vector<16x32xf32>
    %224 = vector.extract_strided_slice %214 {offsets = [2, 0], sizes = [2, 32], strides = [1, 1]} : vector<4x32xf32> to vector<2x32xf32>
    %225 = vector.extract_strided_slice %191 {offsets = [2, 0], sizes = [2, 32], strides = [1, 1]} : vector<4x32xf32> to vector<2x32xf32>
    %226 = vector.extract_strided_slice %168 {offsets = [2, 0], sizes = [2, 32], strides = [1, 1]} : vector<4x32xf32> to vector<2x32xf32>
    %227 = vector.extract_strided_slice %145 {offsets = [2, 0], sizes = [2, 32], strides = [1, 1]} : vector<4x32xf32> to vector<2x32xf32>
    %228 = vector.extract_strided_slice %122 {offsets = [2, 0], sizes = [2, 32], strides = [1, 1]} : vector<4x32xf32> to vector<2x32xf32>
    %229 = vector.extract_strided_slice %99 {offsets = [2, 0], sizes = [2, 32], strides = [1, 1]} : vector<4x32xf32> to vector<2x32xf32>
    %230 = vector.extract_strided_slice %76 {offsets = [2, 0], sizes = [2, 32], strides = [1, 1]} : vector<4x32xf32> to vector<2x32xf32>
    %231 = vector.extract_strided_slice %53 {offsets = [2, 0], sizes = [2, 32], strides = [1, 1]} : vector<4x32xf32> to vector<2x32xf32>
    %232 = tpu.concatenate %224, %225, %226, %227, %228, %229, %230, %231 in 0 : vector<2x32xf32>, vector<2x32xf32>, vector<2x32xf32>, vector<2x32xf32>, vector<2x32xf32>, vector<2x32xf32>, vector<2x32xf32>, vector<2x32xf32> -> vector<16x32xf32>
    %c1 = arith.constant 1 : index
    %c0_25 = arith.constant 0 : index
    %c0_26 = arith.constant 0 : index
    %233 = vector.load %arg3[%c1, %c0_25, %c0_26] : memref<2x33x256xf32, #tpu.memory_space<vmem>>, vector<1x33x256xf32>
    %234 = vector.shape_cast %233 : vector<1x33x256xf32> to vector<33x256xf32>
    %c0_27 = arith.constant 0 : index
    %c0_28 = arith.constant 0 : index
    %235 = vector.load %arg2[%c0_27, %c0_28] : memref<64x256xf32, #tpu.memory_space<vmem>>, vector<64x256xf32>
    %236 = vector.extract_strided_slice %235 {offsets = [0, 0], sizes = [32, 256], strides = [1, 1]} : vector<64x256xf32> to vector<32x256xf32>
    %cst_29 = arith.constant dense<0.000000e+00> : vector<16x256xf32>
    %237 = tpu.matmul %223, %236, %cst_29 {dimension_numbers = #tpu.dot_dimension_numbers<[1], [0], [0], [1], [0, 0, 1, 1], [], []>} : vector<16x32xf32>, vector<32x256xf32>, vector<16x256xf32> -> vector<16x256xf32>
    %238 = vector.extract_strided_slice %235 {offsets = [32, 0], sizes = [32, 256], strides = [1, 1]} : vector<64x256xf32> to vector<32x256xf32>
    %cst_30 = arith.constant dense<0.000000e+00> : vector<16x256xf32>
    %239 = tpu.matmul %232, %238, %cst_30 {dimension_numbers = #tpu.dot_dimension_numbers<[1], [0], [0], [1], [0, 0, 1, 1], [], []>} : vector<16x32xf32>, vector<32x256xf32>, vector<16x256xf32> -> vector<16x256xf32>
    %240 = arith.addf %237, %239 : vector<16x256xf32>
    %241 = vector.extract_strided_slice %234 {offsets = [32, 0], sizes = [1, 256], strides = [1, 1]} : vector<33x256xf32> to vector<1x256xf32>
    %242 = vector.broadcast %241 : vector<1x256xf32> to vector<16x256xf32>
    %243 = arith.addf %240, %242 : vector<16x256xf32>
    %244 = vector.extract_strided_slice %234 {offsets = [0, 0], sizes = [32, 256], strides = [1, 1]} : vector<33x256xf32> to vector<32x256xf32>
    %cst_31 = arith.constant 0.000000e+00 : f32
    %245 = vector.broadcast %cst_31 : f32 to vector<4x32xf32>
    %cst_32 = arith.constant 0.000000e+00 : f32
    %246 = vector.broadcast %cst_32 : f32 to vector<4x32xf32>
    %247 = vector.extract_strided_slice %243 {offsets = [0, 0], sizes = [2, 128], strides = [1, 1]} : vector<16x256xf32> to vector<2x128xf32>
    %248 = vector.extract_strided_slice %243 {offsets = [14, 128], sizes = [2, 128], strides = [1, 1]} : vector<16x256xf32> to vector<2x128xf32>
    %249 = tpu.concatenate %247, %248 in 0 : vector<2x128xf32>, vector<2x128xf32> -> vector<4x128xf32>
    %cst_33 = arith.constant dense<0.000000e+00> : vector<4x256xf32>
    %250 = tpu.matmul %245, %244, %cst_33 {dimension_numbers = #tpu.dot_dimension_numbers<[1], [0], [0], [1], [0, 0, 1, 1], [], []>} : vector<4x32xf32>, vector<32x256xf32>, vector<4x256xf32> -> vector<4x256xf32>
    %251 = vector.extract_strided_slice %250 {offsets = [0, 0], sizes = [4, 128], strides = [1, 1]} : vector<4x256xf32> to vector<4x128xf32>
    %252 = vector.extract_strided_slice %250 {offsets = [0, 128], sizes = [4, 128], strides = [1, 1]} : vector<4x256xf32> to vector<4x128xf32>
    %253 = arith.select %2, %251, %252 : vector<4x128xi1>, vector<4x128xf32>
    %254 = arith.addf %249, %253 : vector<4x128xf32>
    %255 = arith.negf %254 : vector<4x128xf32>
    %256 = math.exp %255 : vector<4x128xf32>
    %cst_34 = arith.constant 1.000000e+00 : f32
    %257 = vector.broadcast %cst_34 : f32 to vector<4x128xf32>
    %258 = arith.addf %257, %256 : vector<4x128xf32>
    %259 = arith.divf %257, %258 : vector<4x128xf32>
    %260 = math.tanh %254 : vector<4x128xf32>
    %261 = vector.extract_strided_slice %259 {offsets = [0, 32], sizes = [4, 32], strides = [1, 1]} : vector<4x128xf32> to vector<4x32xf32>
    %262 = arith.mulf %261, %246 : vector<4x32xf32>
    %263 = vector.extract_strided_slice %259 {offsets = [0, 0], sizes = [4, 32], strides = [1, 1]} : vector<4x128xf32> to vector<4x32xf32>
    %264 = vector.extract_strided_slice %260 {offsets = [0, 64], sizes = [4, 32], strides = [1, 1]} : vector<4x128xf32> to vector<4x32xf32>
    %265 = arith.mulf %263, %264 : vector<4x32xf32>
    %266 = arith.addf %262, %265 : vector<4x32xf32>
    %267 = vector.extract_strided_slice %259 {offsets = [0, 96], sizes = [4, 32], strides = [1, 1]} : vector<4x128xf32> to vector<4x32xf32>
    %268 = math.tanh %266 : vector<4x32xf32>
    %269 = arith.mulf %267, %268 : vector<4x32xf32>
    %270 = vector.extract_strided_slice %243 {offsets = [2, 0], sizes = [2, 128], strides = [1, 1]} : vector<16x256xf32> to vector<2x128xf32>
    %271 = vector.extract_strided_slice %243 {offsets = [12, 128], sizes = [2, 128], strides = [1, 1]} : vector<16x256xf32> to vector<2x128xf32>
    %272 = tpu.concatenate %270, %271 in 0 : vector<2x128xf32>, vector<2x128xf32> -> vector<4x128xf32>
    %cst_35 = arith.constant dense<0.000000e+00> : vector<4x256xf32>
    %273 = tpu.matmul %269, %244, %cst_35 {dimension_numbers = #tpu.dot_dimension_numbers<[1], [0], [0], [1], [0, 0, 1, 1], [], []>} : vector<4x32xf32>, vector<32x256xf32>, vector<4x256xf32> -> vector<4x256xf32>
    %274 = vector.extract_strided_slice %273 {offsets = [0, 0], sizes = [4, 128], strides = [1, 1]} : vector<4x256xf32> to vector<4x128xf32>
    %275 = vector.extract_strided_slice %273 {offsets = [0, 128], sizes = [4, 128], strides = [1, 1]} : vector<4x256xf32> to vector<4x128xf32>
    %276 = arith.select %2, %274, %275 : vector<4x128xi1>, vector<4x128xf32>
    %277 = arith.addf %272, %276 : vector<4x128xf32>
    %278 = arith.negf %277 : vector<4x128xf32>
    %279 = math.exp %278 : vector<4x128xf32>
    %cst_36 = arith.constant 1.000000e+00 : f32
    %280 = vector.broadcast %cst_36 : f32 to vector<4x128xf32>
    %281 = arith.addf %280, %279 : vector<4x128xf32>
    %282 = arith.divf %280, %281 : vector<4x128xf32>
    %283 = math.tanh %277 : vector<4x128xf32>
    %284 = vector.extract_strided_slice %282 {offsets = [0, 32], sizes = [4, 32], strides = [1, 1]} : vector<4x128xf32> to vector<4x32xf32>
    %285 = arith.mulf %284, %266 : vector<4x32xf32>
    %286 = vector.extract_strided_slice %282 {offsets = [0, 0], sizes = [4, 32], strides = [1, 1]} : vector<4x128xf32> to vector<4x32xf32>
    %287 = vector.extract_strided_slice %283 {offsets = [0, 64], sizes = [4, 32], strides = [1, 1]} : vector<4x128xf32> to vector<4x32xf32>
    %288 = arith.mulf %286, %287 : vector<4x32xf32>
    %289 = arith.addf %285, %288 : vector<4x32xf32>
    %290 = vector.extract_strided_slice %282 {offsets = [0, 96], sizes = [4, 32], strides = [1, 1]} : vector<4x128xf32> to vector<4x32xf32>
    %291 = math.tanh %289 : vector<4x32xf32>
    %292 = arith.mulf %290, %291 : vector<4x32xf32>
    %293 = vector.extract_strided_slice %243 {offsets = [4, 0], sizes = [2, 128], strides = [1, 1]} : vector<16x256xf32> to vector<2x128xf32>
    %294 = vector.extract_strided_slice %243 {offsets = [10, 128], sizes = [2, 128], strides = [1, 1]} : vector<16x256xf32> to vector<2x128xf32>
    %295 = tpu.concatenate %293, %294 in 0 : vector<2x128xf32>, vector<2x128xf32> -> vector<4x128xf32>
    %cst_37 = arith.constant dense<0.000000e+00> : vector<4x256xf32>
    %296 = tpu.matmul %292, %244, %cst_37 {dimension_numbers = #tpu.dot_dimension_numbers<[1], [0], [0], [1], [0, 0, 1, 1], [], []>} : vector<4x32xf32>, vector<32x256xf32>, vector<4x256xf32> -> vector<4x256xf32>
    %297 = vector.extract_strided_slice %296 {offsets = [0, 0], sizes = [4, 128], strides = [1, 1]} : vector<4x256xf32> to vector<4x128xf32>
    %298 = vector.extract_strided_slice %296 {offsets = [0, 128], sizes = [4, 128], strides = [1, 1]} : vector<4x256xf32> to vector<4x128xf32>
    %299 = arith.select %2, %297, %298 : vector<4x128xi1>, vector<4x128xf32>
    %300 = arith.addf %295, %299 : vector<4x128xf32>
    %301 = arith.negf %300 : vector<4x128xf32>
    %302 = math.exp %301 : vector<4x128xf32>
    %cst_38 = arith.constant 1.000000e+00 : f32
    %303 = vector.broadcast %cst_38 : f32 to vector<4x128xf32>
    %304 = arith.addf %303, %302 : vector<4x128xf32>
    %305 = arith.divf %303, %304 : vector<4x128xf32>
    %306 = math.tanh %300 : vector<4x128xf32>
    %307 = vector.extract_strided_slice %305 {offsets = [0, 32], sizes = [4, 32], strides = [1, 1]} : vector<4x128xf32> to vector<4x32xf32>
    %308 = arith.mulf %307, %289 : vector<4x32xf32>
    %309 = vector.extract_strided_slice %305 {offsets = [0, 0], sizes = [4, 32], strides = [1, 1]} : vector<4x128xf32> to vector<4x32xf32>
    %310 = vector.extract_strided_slice %306 {offsets = [0, 64], sizes = [4, 32], strides = [1, 1]} : vector<4x128xf32> to vector<4x32xf32>
    %311 = arith.mulf %309, %310 : vector<4x32xf32>
    %312 = arith.addf %308, %311 : vector<4x32xf32>
    %313 = vector.extract_strided_slice %305 {offsets = [0, 96], sizes = [4, 32], strides = [1, 1]} : vector<4x128xf32> to vector<4x32xf32>
    %314 = math.tanh %312 : vector<4x32xf32>
    %315 = arith.mulf %313, %314 : vector<4x32xf32>
    %316 = vector.extract_strided_slice %243 {offsets = [6, 0], sizes = [2, 128], strides = [1, 1]} : vector<16x256xf32> to vector<2x128xf32>
    %317 = vector.extract_strided_slice %243 {offsets = [8, 128], sizes = [2, 128], strides = [1, 1]} : vector<16x256xf32> to vector<2x128xf32>
    %318 = tpu.concatenate %316, %317 in 0 : vector<2x128xf32>, vector<2x128xf32> -> vector<4x128xf32>
    %cst_39 = arith.constant dense<0.000000e+00> : vector<4x256xf32>
    %319 = tpu.matmul %315, %244, %cst_39 {dimension_numbers = #tpu.dot_dimension_numbers<[1], [0], [0], [1], [0, 0, 1, 1], [], []>} : vector<4x32xf32>, vector<32x256xf32>, vector<4x256xf32> -> vector<4x256xf32>
    %320 = vector.extract_strided_slice %319 {offsets = [0, 0], sizes = [4, 128], strides = [1, 1]} : vector<4x256xf32> to vector<4x128xf32>
    %321 = vector.extract_strided_slice %319 {offsets = [0, 128], sizes = [4, 128], strides = [1, 1]} : vector<4x256xf32> to vector<4x128xf32>
    %322 = arith.select %2, %320, %321 : vector<4x128xi1>, vector<4x128xf32>
    %323 = arith.addf %318, %322 : vector<4x128xf32>
    %324 = arith.negf %323 : vector<4x128xf32>
    %325 = math.exp %324 : vector<4x128xf32>
    %cst_40 = arith.constant 1.000000e+00 : f32
    %326 = vector.broadcast %cst_40 : f32 to vector<4x128xf32>
    %327 = arith.addf %326, %325 : vector<4x128xf32>
    %328 = arith.divf %326, %327 : vector<4x128xf32>
    %329 = math.tanh %323 : vector<4x128xf32>
    %330 = vector.extract_strided_slice %328 {offsets = [0, 32], sizes = [4, 32], strides = [1, 1]} : vector<4x128xf32> to vector<4x32xf32>
    %331 = arith.mulf %330, %312 : vector<4x32xf32>
    %332 = vector.extract_strided_slice %328 {offsets = [0, 0], sizes = [4, 32], strides = [1, 1]} : vector<4x128xf32> to vector<4x32xf32>
    %333 = vector.extract_strided_slice %329 {offsets = [0, 64], sizes = [4, 32], strides = [1, 1]} : vector<4x128xf32> to vector<4x32xf32>
    %334 = arith.mulf %332, %333 : vector<4x32xf32>
    %335 = arith.addf %331, %334 : vector<4x32xf32>
    %336 = vector.extract_strided_slice %328 {offsets = [0, 96], sizes = [4, 32], strides = [1, 1]} : vector<4x128xf32> to vector<4x32xf32>
    %337 = math.tanh %335 : vector<4x32xf32>
    %338 = arith.mulf %336, %337 : vector<4x32xf32>
    %339 = vector.extract_strided_slice %243 {offsets = [8, 0], sizes = [2, 128], strides = [1, 1]} : vector<16x256xf32> to vector<2x128xf32>
    %340 = vector.extract_strided_slice %243 {offsets = [6, 128], sizes = [2, 128], strides = [1, 1]} : vector<16x256xf32> to vector<2x128xf32>
    %341 = tpu.concatenate %339, %340 in 0 : vector<2x128xf32>, vector<2x128xf32> -> vector<4x128xf32>
    %cst_41 = arith.constant dense<0.000000e+00> : vector<4x256xf32>
    %342 = tpu.matmul %338, %244, %cst_41 {dimension_numbers = #tpu.dot_dimension_numbers<[1], [0], [0], [1], [0, 0, 1, 1], [], []>} : vector<4x32xf32>, vector<32x256xf32>, vector<4x256xf32> -> vector<4x256xf32>
    %343 = vector.extract_strided_slice %342 {offsets = [0, 0], sizes = [4, 128], strides = [1, 1]} : vector<4x256xf32> to vector<4x128xf32>
    %344 = vector.extract_strided_slice %342 {offsets = [0, 128], sizes = [4, 128], strides = [1, 1]} : vector<4x256xf32> to vector<4x128xf32>
    %345 = arith.select %2, %343, %344 : vector<4x128xi1>, vector<4x128xf32>
    %346 = arith.addf %341, %345 : vector<4x128xf32>
    %347 = arith.negf %346 : vector<4x128xf32>
    %348 = math.exp %347 : vector<4x128xf32>
    %cst_42 = arith.constant 1.000000e+00 : f32
    %349 = vector.broadcast %cst_42 : f32 to vector<4x128xf32>
    %350 = arith.addf %349, %348 : vector<4x128xf32>
    %351 = arith.divf %349, %350 : vector<4x128xf32>
    %352 = math.tanh %346 : vector<4x128xf32>
    %353 = vector.extract_strided_slice %351 {offsets = [0, 32], sizes = [4, 32], strides = [1, 1]} : vector<4x128xf32> to vector<4x32xf32>
    %354 = arith.mulf %353, %335 : vector<4x32xf32>
    %355 = vector.extract_strided_slice %351 {offsets = [0, 0], sizes = [4, 32], strides = [1, 1]} : vector<4x128xf32> to vector<4x32xf32>
    %356 = vector.extract_strided_slice %352 {offsets = [0, 64], sizes = [4, 32], strides = [1, 1]} : vector<4x128xf32> to vector<4x32xf32>
    %357 = arith.mulf %355, %356 : vector<4x32xf32>
    %358 = arith.addf %354, %357 : vector<4x32xf32>
    %359 = vector.extract_strided_slice %351 {offsets = [0, 96], sizes = [4, 32], strides = [1, 1]} : vector<4x128xf32> to vector<4x32xf32>
    %360 = math.tanh %358 : vector<4x32xf32>
    %361 = arith.mulf %359, %360 : vector<4x32xf32>
    %362 = vector.extract_strided_slice %243 {offsets = [10, 0], sizes = [2, 128], strides = [1, 1]} : vector<16x256xf32> to vector<2x128xf32>
    %363 = vector.extract_strided_slice %243 {offsets = [4, 128], sizes = [2, 128], strides = [1, 1]} : vector<16x256xf32> to vector<2x128xf32>
    %364 = tpu.concatenate %362, %363 in 0 : vector<2x128xf32>, vector<2x128xf32> -> vector<4x128xf32>
    %cst_43 = arith.constant dense<0.000000e+00> : vector<4x256xf32>
    %365 = tpu.matmul %361, %244, %cst_43 {dimension_numbers = #tpu.dot_dimension_numbers<[1], [0], [0], [1], [0, 0, 1, 1], [], []>} : vector<4x32xf32>, vector<32x256xf32>, vector<4x256xf32> -> vector<4x256xf32>
    %366 = vector.extract_strided_slice %365 {offsets = [0, 0], sizes = [4, 128], strides = [1, 1]} : vector<4x256xf32> to vector<4x128xf32>
    %367 = vector.extract_strided_slice %365 {offsets = [0, 128], sizes = [4, 128], strides = [1, 1]} : vector<4x256xf32> to vector<4x128xf32>
    %368 = arith.select %2, %366, %367 : vector<4x128xi1>, vector<4x128xf32>
    %369 = arith.addf %364, %368 : vector<4x128xf32>
    %370 = arith.negf %369 : vector<4x128xf32>
    %371 = math.exp %370 : vector<4x128xf32>
    %cst_44 = arith.constant 1.000000e+00 : f32
    %372 = vector.broadcast %cst_44 : f32 to vector<4x128xf32>
    %373 = arith.addf %372, %371 : vector<4x128xf32>
    %374 = arith.divf %372, %373 : vector<4x128xf32>
    %375 = math.tanh %369 : vector<4x128xf32>
    %376 = vector.extract_strided_slice %374 {offsets = [0, 32], sizes = [4, 32], strides = [1, 1]} : vector<4x128xf32> to vector<4x32xf32>
    %377 = arith.mulf %376, %358 : vector<4x32xf32>
    %378 = vector.extract_strided_slice %374 {offsets = [0, 0], sizes = [4, 32], strides = [1, 1]} : vector<4x128xf32> to vector<4x32xf32>
    %379 = vector.extract_strided_slice %375 {offsets = [0, 64], sizes = [4, 32], strides = [1, 1]} : vector<4x128xf32> to vector<4x32xf32>
    %380 = arith.mulf %378, %379 : vector<4x32xf32>
    %381 = arith.addf %377, %380 : vector<4x32xf32>
    %382 = vector.extract_strided_slice %374 {offsets = [0, 96], sizes = [4, 32], strides = [1, 1]} : vector<4x128xf32> to vector<4x32xf32>
    %383 = math.tanh %381 : vector<4x32xf32>
    %384 = arith.mulf %382, %383 : vector<4x32xf32>
    %385 = vector.extract_strided_slice %243 {offsets = [12, 0], sizes = [2, 128], strides = [1, 1]} : vector<16x256xf32> to vector<2x128xf32>
    %386 = vector.extract_strided_slice %243 {offsets = [2, 128], sizes = [2, 128], strides = [1, 1]} : vector<16x256xf32> to vector<2x128xf32>
    %387 = tpu.concatenate %385, %386 in 0 : vector<2x128xf32>, vector<2x128xf32> -> vector<4x128xf32>
    %cst_45 = arith.constant dense<0.000000e+00> : vector<4x256xf32>
    %388 = tpu.matmul %384, %244, %cst_45 {dimension_numbers = #tpu.dot_dimension_numbers<[1], [0], [0], [1], [0, 0, 1, 1], [], []>} : vector<4x32xf32>, vector<32x256xf32>, vector<4x256xf32> -> vector<4x256xf32>
    %389 = vector.extract_strided_slice %388 {offsets = [0, 0], sizes = [4, 128], strides = [1, 1]} : vector<4x256xf32> to vector<4x128xf32>
    %390 = vector.extract_strided_slice %388 {offsets = [0, 128], sizes = [4, 128], strides = [1, 1]} : vector<4x256xf32> to vector<4x128xf32>
    %391 = arith.select %2, %389, %390 : vector<4x128xi1>, vector<4x128xf32>
    %392 = arith.addf %387, %391 : vector<4x128xf32>
    %393 = arith.negf %392 : vector<4x128xf32>
    %394 = math.exp %393 : vector<4x128xf32>
    %cst_46 = arith.constant 1.000000e+00 : f32
    %395 = vector.broadcast %cst_46 : f32 to vector<4x128xf32>
    %396 = arith.addf %395, %394 : vector<4x128xf32>
    %397 = arith.divf %395, %396 : vector<4x128xf32>
    %398 = math.tanh %392 : vector<4x128xf32>
    %399 = vector.extract_strided_slice %397 {offsets = [0, 32], sizes = [4, 32], strides = [1, 1]} : vector<4x128xf32> to vector<4x32xf32>
    %400 = arith.mulf %399, %381 : vector<4x32xf32>
    %401 = vector.extract_strided_slice %397 {offsets = [0, 0], sizes = [4, 32], strides = [1, 1]} : vector<4x128xf32> to vector<4x32xf32>
    %402 = vector.extract_strided_slice %398 {offsets = [0, 64], sizes = [4, 32], strides = [1, 1]} : vector<4x128xf32> to vector<4x32xf32>
    %403 = arith.mulf %401, %402 : vector<4x32xf32>
    %404 = arith.addf %400, %403 : vector<4x32xf32>
    %405 = vector.extract_strided_slice %397 {offsets = [0, 96], sizes = [4, 32], strides = [1, 1]} : vector<4x128xf32> to vector<4x32xf32>
    %406 = math.tanh %404 : vector<4x32xf32>
    %407 = arith.mulf %405, %406 : vector<4x32xf32>
    %408 = vector.extract_strided_slice %243 {offsets = [14, 0], sizes = [2, 128], strides = [1, 1]} : vector<16x256xf32> to vector<2x128xf32>
    %409 = vector.extract_strided_slice %243 {offsets = [0, 128], sizes = [2, 128], strides = [1, 1]} : vector<16x256xf32> to vector<2x128xf32>
    %410 = tpu.concatenate %408, %409 in 0 : vector<2x128xf32>, vector<2x128xf32> -> vector<4x128xf32>
    %cst_47 = arith.constant dense<0.000000e+00> : vector<4x256xf32>
    %411 = tpu.matmul %407, %244, %cst_47 {dimension_numbers = #tpu.dot_dimension_numbers<[1], [0], [0], [1], [0, 0, 1, 1], [], []>} : vector<4x32xf32>, vector<32x256xf32>, vector<4x256xf32> -> vector<4x256xf32>
    %412 = vector.extract_strided_slice %411 {offsets = [0, 0], sizes = [4, 128], strides = [1, 1]} : vector<4x256xf32> to vector<4x128xf32>
    %413 = vector.extract_strided_slice %411 {offsets = [0, 128], sizes = [4, 128], strides = [1, 1]} : vector<4x256xf32> to vector<4x128xf32>
    %414 = arith.select %2, %412, %413 : vector<4x128xi1>, vector<4x128xf32>
    %415 = arith.addf %410, %414 : vector<4x128xf32>
    %416 = arith.negf %415 : vector<4x128xf32>
    %417 = math.exp %416 : vector<4x128xf32>
    %cst_48 = arith.constant 1.000000e+00 : f32
    %418 = vector.broadcast %cst_48 : f32 to vector<4x128xf32>
    %419 = arith.addf %418, %417 : vector<4x128xf32>
    %420 = arith.divf %418, %419 : vector<4x128xf32>
    %421 = math.tanh %415 : vector<4x128xf32>
    %422 = vector.extract_strided_slice %420 {offsets = [0, 32], sizes = [4, 32], strides = [1, 1]} : vector<4x128xf32> to vector<4x32xf32>
    %423 = arith.mulf %422, %404 : vector<4x32xf32>
    %424 = vector.extract_strided_slice %420 {offsets = [0, 0], sizes = [4, 32], strides = [1, 1]} : vector<4x128xf32> to vector<4x32xf32>
    %425 = vector.extract_strided_slice %421 {offsets = [0, 64], sizes = [4, 32], strides = [1, 1]} : vector<4x128xf32> to vector<4x32xf32>
    %426 = arith.mulf %424, %425 : vector<4x32xf32>
    %427 = arith.addf %423, %426 : vector<4x32xf32>
    %428 = vector.extract_strided_slice %420 {offsets = [0, 96], sizes = [4, 32], strides = [1, 1]} : vector<4x128xf32> to vector<4x32xf32>
    %429 = math.tanh %427 : vector<4x32xf32>
    %430 = arith.mulf %428, %429 : vector<4x32xf32>
    %c0_49 = arith.constant 0 : index
    %c0_50 = arith.constant 0 : index
    %431 = vector.load %arg4[%c0_49, %c0_50] : memref<65x4xf32, #tpu.memory_space<vmem>>, vector<65x4xf32>
    %432 = vector.extract_strided_slice %431 {offsets = [0, 0], sizes = [32, 4], strides = [1, 1]} : vector<65x4xf32> to vector<32x4xf32>
    %433 = vector.extract_strided_slice %431 {offsets = [32, 0], sizes = [32, 4], strides = [1, 1]} : vector<65x4xf32> to vector<32x4xf32>
    %434 = vector.extract_strided_slice %431 {offsets = [64, 0], sizes = [1, 4], strides = [1, 1]} : vector<65x4xf32> to vector<1x4xf32>
    %435 = vector.extract_strided_slice %269 {offsets = [0, 0], sizes = [2, 32], strides = [1, 1]} : vector<4x32xf32> to vector<2x32xf32>
    %436 = vector.extract_strided_slice %292 {offsets = [0, 0], sizes = [2, 32], strides = [1, 1]} : vector<4x32xf32> to vector<2x32xf32>
    %437 = vector.extract_strided_slice %315 {offsets = [0, 0], sizes = [2, 32], strides = [1, 1]} : vector<4x32xf32> to vector<2x32xf32>
    %438 = vector.extract_strided_slice %338 {offsets = [0, 0], sizes = [2, 32], strides = [1, 1]} : vector<4x32xf32> to vector<2x32xf32>
    %439 = vector.extract_strided_slice %361 {offsets = [0, 0], sizes = [2, 32], strides = [1, 1]} : vector<4x32xf32> to vector<2x32xf32>
    %440 = vector.extract_strided_slice %384 {offsets = [0, 0], sizes = [2, 32], strides = [1, 1]} : vector<4x32xf32> to vector<2x32xf32>
    %441 = vector.extract_strided_slice %407 {offsets = [0, 0], sizes = [2, 32], strides = [1, 1]} : vector<4x32xf32> to vector<2x32xf32>
    %442 = vector.extract_strided_slice %430 {offsets = [0, 0], sizes = [2, 32], strides = [1, 1]} : vector<4x32xf32> to vector<2x32xf32>
    %443 = tpu.concatenate %435, %436, %437, %438, %439, %440, %441, %442 in 0 : vector<2x32xf32>, vector<2x32xf32>, vector<2x32xf32>, vector<2x32xf32>, vector<2x32xf32>, vector<2x32xf32>, vector<2x32xf32>, vector<2x32xf32> -> vector<16x32xf32>
    %444 = vector.extract_strided_slice %430 {offsets = [2, 0], sizes = [2, 32], strides = [1, 1]} : vector<4x32xf32> to vector<2x32xf32>
    %445 = vector.extract_strided_slice %407 {offsets = [2, 0], sizes = [2, 32], strides = [1, 1]} : vector<4x32xf32> to vector<2x32xf32>
    %446 = vector.extract_strided_slice %384 {offsets = [2, 0], sizes = [2, 32], strides = [1, 1]} : vector<4x32xf32> to vector<2x32xf32>
    %447 = vector.extract_strided_slice %361 {offsets = [2, 0], sizes = [2, 32], strides = [1, 1]} : vector<4x32xf32> to vector<2x32xf32>
    %448 = vector.extract_strided_slice %338 {offsets = [2, 0], sizes = [2, 32], strides = [1, 1]} : vector<4x32xf32> to vector<2x32xf32>
    %449 = vector.extract_strided_slice %315 {offsets = [2, 0], sizes = [2, 32], strides = [1, 1]} : vector<4x32xf32> to vector<2x32xf32>
    %450 = vector.extract_strided_slice %292 {offsets = [2, 0], sizes = [2, 32], strides = [1, 1]} : vector<4x32xf32> to vector<2x32xf32>
    %451 = vector.extract_strided_slice %269 {offsets = [2, 0], sizes = [2, 32], strides = [1, 1]} : vector<4x32xf32> to vector<2x32xf32>
    %452 = tpu.concatenate %444, %445, %446, %447, %448, %449, %450, %451 in 0 : vector<2x32xf32>, vector<2x32xf32>, vector<2x32xf32>, vector<2x32xf32>, vector<2x32xf32>, vector<2x32xf32>, vector<2x32xf32>, vector<2x32xf32> -> vector<16x32xf32>
    %cst_51 = arith.constant dense<0.000000e+00> : vector<16x4xf32>
    %453 = tpu.matmul %443, %432, %cst_51 {dimension_numbers = #tpu.dot_dimension_numbers<[1], [0], [0], [1], [0, 0, 1, 1], [], []>} : vector<16x32xf32>, vector<32x4xf32>, vector<16x4xf32> -> vector<16x4xf32>
    %cst_52 = arith.constant dense<0.000000e+00> : vector<16x4xf32>
    %454 = tpu.matmul %452, %433, %cst_52 {dimension_numbers = #tpu.dot_dimension_numbers<[1], [0], [0], [1], [0, 0, 1, 1], [], []>} : vector<16x32xf32>, vector<32x4xf32>, vector<16x4xf32> -> vector<16x4xf32>
    %455 = arith.addf %453, %454 : vector<16x4xf32>
    %456 = vector.broadcast %434 : vector<1x4xf32> to vector<16x4xf32>
    %457 = arith.addf %455, %456 : vector<16x4xf32>
    %cst_53 = arith.constant 0.000000e+00 : f32
    %458 = vector.broadcast %cst_53 : f32 to vector<16x4xf32>
    %459 = arith.maximumf %457, %458 : vector<16x4xf32>
    %460 = vector.extract_strided_slice %459 {offsets = [0, 0], sizes = [2, 4], strides = [1, 1]} : vector<16x4xf32> to vector<2x4xf32>
    %c0_54 = arith.constant 0 : index
    %c0_55 = arith.constant 0 : index
    %c0_56 = arith.constant 0 : index
    %461 = vector.load %arg5[%c0_54, %c0_55, %c0_56] : memref<2x8x4xf32, #tpu.memory_space<vmem>>, vector<2x1x4xf32>
    %462 = vector.shape_cast %461 : vector<2x1x4xf32> to vector<2x4xf32>
    %463 = vector.shape_cast %460 : vector<2x4xf32> to vector<2x1x4xf32>
    tpu.vector_store %arg5[%c0_54, %c0_55, %c0_56], %463 {strides = array<i32>} : memref<2x8x4xf32, #tpu.memory_space<vmem>>, vector<2x1x4xf32>,
    %464 = vector.extract_strided_slice %459 {offsets = [2, 0], sizes = [2, 4], strides = [1, 1]} : vector<16x4xf32> to vector<2x4xf32>
    %c0_57 = arith.constant 0 : index
    %c1_58 = arith.constant 1 : index
    %c0_59 = arith.constant 0 : index
    %465 = vector.load %arg5[%c0_57, %c1_58, %c0_59] : memref<2x8x4xf32, #tpu.memory_space<vmem>>, vector<2x1x4xf32>
    %466 = vector.shape_cast %465 : vector<2x1x4xf32> to vector<2x4xf32>
    %467 = vector.shape_cast %464 : vector<2x4xf32> to vector<2x1x4xf32>
    tpu.vector_store %arg5[%c0_57, %c1_58, %c0_59], %467 {strides = array<i32>} : memref<2x8x4xf32, #tpu.memory_space<vmem>>, vector<2x1x4xf32>,
    %468 = vector.extract_strided_slice %459 {offsets = [4, 0], sizes = [2, 4], strides = [1, 1]} : vector<16x4xf32> to vector<2x4xf32>
    %c0_60 = arith.constant 0 : index
    %c2 = arith.constant 2 : index
    %c0_61 = arith.constant 0 : index
    %469 = vector.load %arg5[%c0_60, %c2, %c0_61] : memref<2x8x4xf32, #tpu.memory_space<vmem>>, vector<2x1x4xf32>
    %470 = vector.shape_cast %469 : vector<2x1x4xf32> to vector<2x4xf32>
    %471 = vector.shape_cast %468 : vector<2x4xf32> to vector<2x1x4xf32>
    tpu.vector_store %arg5[%c0_60, %c2, %c0_61], %471 {strides = array<i32>} : memref<2x8x4xf32, #tpu.memory_space<vmem>>, vector<2x1x4xf32>,
    %472 = vector.extract_strided_slice %459 {offsets = [6, 0], sizes = [2, 4], strides = [1, 1]} : vector<16x4xf32> to vector<2x4xf32>
    %c0_62 = arith.constant 0 : index
    %c3 = arith.constant 3 : index
    %c0_63 = arith.constant 0 : index
    %473 = vector.load %arg5[%c0_62, %c3, %c0_63] : memref<2x8x4xf32, #tpu.memory_space<vmem>>, vector<2x1x4xf32>
    %474 = vector.shape_cast %473 : vector<2x1x4xf32> to vector<2x4xf32>
    %475 = vector.shape_cast %472 : vector<2x4xf32> to vector<2x1x4xf32>
    tpu.vector_store %arg5[%c0_62, %c3, %c0_63], %475 {strides = array<i32>} : memref<2x8x4xf32, #tpu.memory_space<vmem>>, vector<2x1x4xf32>,
    %476 = vector.extract_strided_slice %459 {offsets = [8, 0], sizes = [2, 4], strides = [1, 1]} : vector<16x4xf32> to vector<2x4xf32>
    %c0_64 = arith.constant 0 : index
    %c4 = arith.constant 4 : index
    %c0_65 = arith.constant 0 : index
    %477 = vector.load %arg5[%c0_64, %c4, %c0_65] : memref<2x8x4xf32, #tpu.memory_space<vmem>>, vector<2x1x4xf32>
    %478 = vector.shape_cast %477 : vector<2x1x4xf32> to vector<2x4xf32>
    %479 = vector.shape_cast %476 : vector<2x4xf32> to vector<2x1x4xf32>
    tpu.vector_store %arg5[%c0_64, %c4, %c0_65], %479 {strides = array<i32>} : memref<2x8x4xf32, #tpu.memory_space<vmem>>, vector<2x1x4xf32>,
    %480 = vector.extract_strided_slice %459 {offsets = [10, 0], sizes = [2, 4], strides = [1, 1]} : vector<16x4xf32> to vector<2x4xf32>
    %c0_66 = arith.constant 0 : index
    %c5 = arith.constant 5 : index
    %c0_67 = arith.constant 0 : index
    %481 = vector.load %arg5[%c0_66, %c5, %c0_67] : memref<2x8x4xf32, #tpu.memory_space<vmem>>, vector<2x1x4xf32>
    %482 = vector.shape_cast %481 : vector<2x1x4xf32> to vector<2x4xf32>
    %483 = vector.shape_cast %480 : vector<2x4xf32> to vector<2x1x4xf32>
    tpu.vector_store %arg5[%c0_66, %c5, %c0_67], %483 {strides = array<i32>} : memref<2x8x4xf32, #tpu.memory_space<vmem>>, vector<2x1x4xf32>,
    %484 = vector.extract_strided_slice %459 {offsets = [12, 0], sizes = [2, 4], strides = [1, 1]} : vector<16x4xf32> to vector<2x4xf32>
    %c0_68 = arith.constant 0 : index
    %c6 = arith.constant 6 : index
    %c0_69 = arith.constant 0 : index
    %485 = vector.load %arg5[%c0_68, %c6, %c0_69] : memref<2x8x4xf32, #tpu.memory_space<vmem>>, vector<2x1x4xf32>
    %486 = vector.shape_cast %485 : vector<2x1x4xf32> to vector<2x4xf32>
    %487 = vector.shape_cast %484 : vector<2x4xf32> to vector<2x1x4xf32>
    tpu.vector_store %arg5[%c0_68, %c6, %c0_69], %487 {strides = array<i32>} : memref<2x8x4xf32, #tpu.memory_space<vmem>>, vector<2x1x4xf32>,
    %488 = vector.extract_strided_slice %459 {offsets = [14, 0], sizes = [2, 4], strides = [1, 1]} : vector<16x4xf32> to vector<2x4xf32>
    %c0_70 = arith.constant 0 : index
    %c7 = arith.constant 7 : index
    %c0_71 = arith.constant 0 : index
    %489 = vector.load %arg5[%c0_70, %c7, %c0_71] : memref<2x8x4xf32, #tpu.memory_space<vmem>>, vector<2x1x4xf32>
    %490 = vector.shape_cast %489 : vector<2x1x4xf32> to vector<2x4xf32>
    %491 = vector.shape_cast %488 : vector<2x4xf32> to vector<2x1x4xf32>
    tpu.vector_store %arg5[%c0_70, %c7, %c0_71], %491 {strides = array<i32>} : memref<2x8x4xf32, #tpu.memory_space<vmem>>, vector<2x1x4xf32>,
    return
  }
}

</mosaic_0001>

<llo_original>
// kernel: gan_generator_forward.1
$region0: #{gan_generator_forward.1}
  #allocation0 [shape = 'u32[]', space=smem, size = 0x4, offset = 0x4, fixed_abs, tag = 'smem constant byte address 0x4 - core index']
  #allocation1 [shape = 'u32[144,128]{1,0:T(1,128)}', space=vmem, size = 0x12000, scoped, tag = 'internal scratch']
  %s0 = inlined_call_operand.vmem [shape: f32[2,8,4], index: 0, kind: input, shape index: {}]
  %s1 = inlined_call_operand.vmem [shape: f32[4,256], index: 1, kind: input, shape index: {}]
  %s2 = inlined_call_operand.vmem [shape: f32[64,256], index: 2, kind: input, shape index: {}]
  %s3 = inlined_call_operand.vmem [shape: f32[2,33,256], index: 3, kind: input, shape index: {}]
  %s4 = inlined_call_operand.vmem [shape: f32[65,4], index: 4, kind: input, shape index: {}]
  %s5 = inlined_call_operand.vmem [shape: f32[2,8,4], index: 5, kind: output, shape index: {}]
  %s6 = sld [smem:[#allocation0]]
  $region30: #{gan_generator_forward.1} parent=0
    _
  %s8 = ssub.s32 1, %s6
  %s9 = scalar_select 0, %s8, %s6
  // Predicated region
  $region2: #{gan_generator_forward.1} parent=0 // pred_check
    _
  $region3: #{gan_generator_forward.1} parent=0 // pred_check_branch
    %11 = sbr.rel (0) target = $region5
  $region4: #{gan_generator_forward.1} parent=0 // pred_region
    _
  $region5: #{gan_generator_forward.1} parent=0 // pred_fallthru
    _
  // Predicated region
  $region6: #{gan_generator_forward.1} parent=0 // pred_check
    _
  $region7: #{gan_generator_forward.1} parent=0 // pred_check_branch
    %13 = sbr.rel (0) target = $region9
  $region8: #{gan_generator_forward.1} parent=0 // pred_region
    _
  $region9: #{gan_generator_forward.1} parent=0 // pred_fallthru
    _
  // Predicated region
  $region10: #{gan_generator_forward.1} parent=0 // pred_check
    _
  $region11: #{gan_generator_forward.1} parent=0 // pred_check_branch
    %15 = sbr.rel (0) target = $region13
  $region12: #{gan_generator_forward.1} parent=0 // pred_region
    _
  $region13: #{gan_generator_forward.1} parent=0 // pred_fallthru
    _
  // Predicated region
  $region14: #{gan_generator_forward.1} parent=0 // pred_check
    _
  $region15: #{gan_generator_forward.1} parent=0 // pred_check_branch
    %17 = sbr.rel (0) target = $region17
  $region16: #{gan_generator_forward.1} parent=0 // pred_region
    _
  $region17: #{gan_generator_forward.1} parent=0 // pred_fallthru
    _
  // Predicated region
  $region18: #{gan_generator_forward.1} parent=0 // pred_check
    _
  $region19: #{gan_generator_forward.1} parent=0 // pred_check_branch
    %19 = sbr.rel (0) target = $region21
  $region20: #{gan_generator_forward.1} parent=0 // pred_region
    _
  $region21: #{gan_generator_forward.1} parent=0 // pred_fallthru
    _
  %v20 = vlaneseq
  %v21 = vshrl.u32 %v20, 7
  %vm22 = vcmp.lt.s32.totalorder %v21, 2
  %v23 = vld [vmem:[%s0] sm:$0xff]
  %v24 = vld [vmem:[%s0 + $0x8] sm:$0xff]
  %v27 = vrot.slane %v24, 7
  %vm28 = vcmask 1041409
  %v29 = vsel %vm28, %v27, %v23
  %v31 = vrot.slane %v23, 7
  %v32 = vrot.slane %v24, 6
  %vm33 = vcmask 1043459
  %v34 = vsel %vm33, %v32, %v31
  %v36 = vrot.slane %v23, 6
  %v37 = vrot.slane %v24, 5
  %vm38 = vcmask 1045509
  %v39 = vsel %vm38, %v37, %v36
  %v41 = vrot.slane %v23, 5
  %v42 = vrot.slane %v24, 4
  %vm43 = vcmask 1047559
  %v44 = vsel %vm43, %v42, %v41
  %v46 = vrot.slane %v23, 4
  %v47 = vrot.slane %v24, 3
  %v48 = vsel %vm28, %v47, %v46
  %v50 = vrot.slane %v23, 3
  %v51 = vrot.slane %v24, 2
  %v52 = vsel %vm33, %v51, %v50
  %v54 = vrot.slane %v23, 2
  %v55 = vrot.slane %v24, 1
  %v56 = vsel %vm38, %v55, %v54
  %v58 = vrot.slane %v23, 1
  %v59 = vsel %vm43, %v24, %v58
  %vm61 = vcmask 1041408
  %v62 = vsel %vm61, %v29, %v34
  %vm63 = vcmask 1043456
  %v64 = vsel %vm63, %v62, %v39
  %vm65 = vcmask 1045504
  %v66 = vsel %vm65, %v64, %v44
  %v67 = vsel %vm61, %v48, %v52
  %v68 = vsel %vm63, %v67, %v56
  %v69 = vsel %vm65, %v68, %v59
  %v70 = vld [vmem:[%s3] sm:$0xff]
  %v71 = vld [vmem:[%s3 + $0x8] sm:$0xff]
  %v72 = vld [vmem:[%s3 + $0x10] sm:$0xff]
  %v73 = vld [vmem:[%s3 + $0x18] sm:$0xff]
  %v74 = vld [vmem:[%s3 + $0x20] sm:$0xff]
  %v75 = vld [vmem:[%s3 + $0x28] sm:$0xff]
  %v76 = vld [vmem:[%s3 + $0x30] sm:$0xff]
  %v77 = vld [vmem:[%s3 + $0x38] sm:$0xff]
  %v78 = vld [vmem:[%s3 + $0x40] sm:$0x1]
  %v79 = vld [vmem:[%s3 + $0x48] sm:$0x1]
  %v80 = vld [vmem:[%s1] sm:$0xff]
  %v81 = vlaneseq
  %v82 = vshrl.u32 %v81, 7
  %v83 = vsub.s32 0, %v82
  %v84 = vrot.slane %v78, %v83
  %v85 = vlaneseq
  %v86 = vshrl.u32 %v85, 7
  %v87 = vsub.s32 0, %v86
  %v88 = vrot.slane %v79, %v87
  %v90 = vcombine.high %v80, %v80
  %vm91 = vcmask 31744
  %v93 = vsel %vm91, %v66, 0
  %v96 = vsel %vm91, %v69, 0
  %v98 = vsel %vm63, %v80, 0
  %v100 = vsel %vm63, %v90, 0
  %102 = vmatprep.subr.mxu0 0.0
  %103 = vmatpush1.msra.mxu0 0.0
  %104 = vmatprep.subr.mxu0 0.0
  %105 = vmatpush1.msra.mxu0 0.0
  %106 = vmatprep.subr.mxu0 0.0
  %107 = vmatpush1.msra.mxu0 0.0
  %108 = vmatprep.subr.mxu0 0.0
  %109 = vmatpush1.msra.mxu0 0.0
  %110 = vmatprep.subr.mxu0 0.0
  %111 = vmatpush1.msra.mxu0 0.0
  %112 = vmatprep.subr.mxu0 0.0
  %113 = vmatpush1.msra.mxu0 0.0
  %114 = vmatprep.subr.mxu0 0.0
  %115 = vmatpush1.msra.mxu0 0.0
  %116 = vmatprep.subr.mxu0 0.0
  %117 = vmatpush1.msra.mxu0 0.0
  %118 = vmatprep.subr.mxu0 0.0
  %119 = vmatpush1.msra.mxu0 0.0
  %120 = vmatprep.subr.mxu0 0.0
  %121 = vmatpush1.msra.mxu0 0.0
  %122 = vmatprep.subr.mxu0 0.0
  %123 = vmatpush1.msra.mxu0 0.0
  %124 = vmatprep.subr.mxu0 0.0
  %125 = vmatpush1.msra.mxu0 0.0
  %126 = vmatprep.subr.mxu0 0.0
  %127 = vmatpush1.msra.mxu0 0.0
  %128 = vmatprep.subr.mxu0 0.0
  %129 = vmatpush1.msra.mxu0 0.0
  %130 = vmatprep.subr.mxu0 0.0
  %131 = vmatpush1.msra.mxu0 0.0
  %132 = vmatprep.subr.mxu0 %v100
  %133 = vmatpush1.msra.mxu0 %v98
  %134 = vmatprep.subr.mxu0 0.0
  %135 = vmatpush2.msra.mxu0 0.0
  %136 = vmatprep.subr.mxu0 0.0
  %137 = vmatpush2.msra.mxu0 0.0
  %138 = vmatprep.subr.mxu0 0.0
  %139 = vmatpush2.msra.mxu0 0.0
  %140 = vmatprep.subr.mxu0 0.0
  %141 = vmatpush2.msra.mxu0 0.0
  %142 = vmatprep.subr.mxu0 0.0
  %143 = vmatpush2.msra.mxu0 0.0
  %144 = vmatprep.subr.mxu0 0.0
  %145 = vmatpush2.msra.mxu0 0.0
  %146 = vmatprep.subr.mxu0 0.0
  %147 = vmatpush2.msra.mxu0 0.0
  %148 = vmatprep.subr.mxu0 0.0
  %149 = vmatpush2.msra.mxu0 0.0
  %150 = vmatprep.subr.mxu0 0.0
  %151 = vmatpush2.msra.mxu0 0.0
  %152 = vmatprep.subr.mxu0 0.0
  %153 = vmatpush2.msra.mxu0 0.0
  %154 = vmatprep.subr.mxu0 0.0
  %155 = vmatpush2.msra.mxu0 0.0
  %156 = vmatprep.subr.mxu0 0.0
  %157 = vmatpush2.msra.mxu0 0.0
  %158 = vmatprep.subr.mxu0 0.0
  %159 = vmatpush2.msra.mxu0 0.0
  %160 = vmatprep.subr.mxu0 0.0
  %161 = vmatpush2.msra.mxu0 0.0
  %162 = vmatprep.subr.mxu0 0.0
  %163 = vmatpush2.msra.mxu0 0.0
  %164 = vmatprep.subr.mxu0 0.0
  %165 = vmatpush2.msra.mxu0 0.0
  %166 = vmatprep.mubr.f32.mxu0 0.0
  %167 = vmatmul.mubr.f32.gmra.mxu0 %v93
  %v168 = vpop.f32.mrf.mxu0
  %v169 = vadd.f32 %v84, %v168
  %v170 = vpop.f32.mrf.mxu0
  %v171 = vadd.f32 %v88, %v170
  %172 = vmatprep.mubr.f32.mxu0 0.0
  %173 = vmatmul.mubr.f32.gmra.mxu0 %v96
  %v174 = vpop.f32.mrf.mxu0
  %v175 = vadd.f32 %v84, %v174
  %v176 = vpop.f32.mrf.mxu0
  %v177 = vadd.f32 %v88, %v176
  %178 = vdwg.mxu0
  %v180 = vrot.slane %v177, 4
  %v182 = vsel %vm61, %v169, %v180
  %vm183 = vcmask 261120
  %v185 = vsel %vm183, 0.0, 0
  %187 = vmatprep.subr.mxu0 0.0
  %188 = vmatpush1.msra.mxu0 0.0
  %189 = vmatprep.subr.mxu0 0.0
  %190 = vmatpush1.msra.mxu0 0.0
  %191 = vmatprep.subr.mxu0 0.0
  %192 = vmatpush1.msra.mxu0 0.0
  %193 = vmatprep.subr.mxu0 0.0
  %194 = vmatpush1.msra.mxu0 0.0
  %195 = vmatprep.subr.mxu0 0.0
  %196 = vmatpush1.msra.mxu0 0.0
  %197 = vmatprep.subr.mxu0 0.0
  %198 = vmatpush1.msra.mxu0 0.0
  %199 = vmatprep.subr.mxu0 0.0
  %200 = vmatpush1.msra.mxu0 0.0
  %201 = vmatprep.subr.mxu0 0.0
  %202 = vmatpush1.msra.mxu0 0.0
  %203 = vmatprep.subr.mxu0 0.0
  %204 = vmatpush1.msra.mxu0 0.0
  %205 = vmatprep.subr.mxu0 0.0
  %206 = vmatpush1.msra.mxu0 0.0
  %207 = vmatprep.subr.mxu0 0.0
  %208 = vmatpush1.msra.mxu0 0.0
  %209 = vmatprep.subr.mxu0 0.0
  %210 = vmatpush1.msra.mxu0 0.0
  %211 = vmatprep.subr.mxu0 %v77
  %212 = vmatpush1.msra.mxu0 %v76
  %213 = vmatprep.subr.mxu0 %v75
  %214 = vmatpush1.msra.mxu0 %v74
  %215 = vmatprep.subr.mxu0 %v73
  %216 = vmatpush1.msra.mxu0 %v72
  %217 = vmatprep.subr.mxu0 %v71
  %218 = vmatpush1.msra.mxu0 %v70
  %219 = vmatprep.subr.mxu0 0.0
  %220 = vmatpush2.msra.mxu0 0.0
  %221 = vmatprep.subr.mxu0 0.0
  %222 = vmatpush2.msra.mxu0 0.0
  %223 = vmatprep.subr.mxu0 0.0
  %224 = vmatpush2.msra.mxu0 0.0
  %225 = vmatprep.subr.mxu0 0.0
  %226 = vmatpush2.msra.mxu0 0.0
  %227 = vmatprep.subr.mxu0 0.0
  %228 = vmatpush2.msra.mxu0 0.0
  %229 = vmatprep.subr.mxu0 0.0
  %230 = vmatpush2.msra.mxu0 0.0
  %231 = vmatprep.subr.mxu0 0.0
  %232 = vmatpush2.msra.mxu0 0.0
  %233 = vmatprep.subr.mxu0 0.0
  %234 = vmatpush2.msra.mxu0 0.0
  %235 = vmatprep.subr.mxu0 0.0
  %236 = vmatpush2.msra.mxu0 0.0
  %237 = vmatprep.subr.mxu0 0.0
  %238 = vmatpush2.msra.mxu0 0.0
  %239 = vmatprep.subr.mxu0 0.0
  %240 = vmatpush2.msra.mxu0 0.0
  %241 = vmatprep.subr.mxu0 0.0
  %242 = vmatpush2.msra.mxu0 0.0
  %243 = vmatprep.subr.mxu0 0.0
  %244 = vmatpush2.msra.mxu0 0.0
  %245 = vmatprep.subr.mxu0 0.0
  %246 = vmatpush2.msra.mxu0 0.0
  %247 = vmatprep.subr.mxu0 0.0
  %248 = vmatpush2.msra.mxu0 0.0
  %249 = vmatprep.subr.mxu0 0.0
  %250 = vmatpush2.msra.mxu0 0.0
  %251 = vmatprep.mubr.f32.mxu0 0.0
  %252 = vmatmul.mubr.f32.gmra.mxu0 %v185
  %v253 = vpop.f32.mrf.mxu0
  %v254 = vadd.f32 0.0, %v253
  %v255 = vpop.f32.mrf.mxu0
  %v256 = vadd.f32 0.0, %v255
  %257 = vdwg.mxu0
  %v258 = vsel %vm22, %v254, %v256
  %v259 = vadd.f32 %v182, %v258
  %v260 = vxor.u32 %v259, 2147483648
  %v261 = vmul.f32 %v260, 1.442695
  %v262 = vpow.pop %v261
  %v263 = vadd.f32 %v262, 1.0
  %v264 = vrcp.pop %v263
  %v265 = vmul.f32 1.0, %v264
  %v266 = vtanh.pop %v259
  %v267 = vmul.f32 %v265, 0.0
  %269 = vrot.lane.b32.xlu0 %v266, 64
  %v270 = vpop.permute.xlu0 %269
  %v272 = vmul.f32 %v265, %v270
  %274 = vrot.lane.b32.xlu0 %v272, 32
  %v275 = vpop.permute.xlu0 %274
  %v277 = vadd.f32 %v267, %v275
  %v278 = vtanh.pop %v277
  %280 = vrot.lane.b32.xlu0 %v278, 64
  %v281 = vpop.permute.xlu0 %280
  %v283 = vmul.f32 %v265, %v281
  %v285 = vrot.slane %v169, 2
  %v287 = vrot.slane %v177, 2
  %v289 = vsel %vm61, %v285, %v287
  %291 = vrot.lane.b32.xlu0 %v283, 32
  %v292 = vpop.permute.xlu0 %291
  %v293 = vsel %vm183, %v292, 0
  %295 = vmatprep.subr.mxu0 0.0
  %296 = vmatpush1.msra.mxu0 0.0
  %297 = vmatprep.subr.mxu0 0.0
  %298 = vmatpush1.msra.mxu0 0.0
  %299 = vmatprep.subr.mxu0 0.0
  %300 = vmatpush1.msra.mxu0 0.0
  %301 = vmatprep.subr.mxu0 0.0
  %302 = vmatpush1.msra.mxu0 0.0
  %303 = vmatprep.subr.mxu0 0.0
  %304 = vmatpush1.msra.mxu0 0.0
  %305 = vmatprep.subr.mxu0 0.0
  %306 = vmatpush1.msra.mxu0 0.0
  %307 = vmatprep.subr.mxu0 0.0
  %308 = vmatpush1.msra.mxu0 0.0
  %309 = vmatprep.subr.mxu0 0.0
  %310 = vmatpush1.msra.mxu0 0.0
  %311 = vmatprep.subr.mxu0 0.0
  %312 = vmatpush1.msra.mxu0 0.0
  %313 = vmatprep.subr.mxu0 0.0
  %314 = vmatpush1.msra.mxu0 0.0
  %315 = vmatprep.subr.mxu0 0.0
  %316 = vmatpush1.msra.mxu0 0.0
  %317 = vmatprep.subr.mxu0 0.0
  %318 = vmatpush1.msra.mxu0 0.0
  %319 = vmatprep.subr.mxu0 %v77
  %320 = vmatpush1.msra.mxu0 %v76
  %321 = vmatprep.subr.mxu0 %v75
  %322 = vmatpush1.msra.mxu0 %v74
  %323 = vmatprep.subr.mxu0 %v73
  %324 = vmatpush1.msra.mxu0 %v72
  %325 = vmatprep.subr.mxu0 %v71
  %326 = vmatpush1.msra.mxu0 %v70
  %327 = vmatprep.subr.mxu0 0.0
  %328 = vmatpush2.msra.mxu0 0.0
  %329 = vmatprep.subr.mxu0 0.0
  %330 = vmatpush2.msra.mxu0 0.0
  %331 = vmatprep.subr.mxu0 0.0
  %332 = vmatpush2.msra.mxu0 0.0
  %333 = vmatprep.subr.mxu0 0.0
  %334 = vmatpush2.msra.mxu0 0.0
  %335 = vmatprep.subr.mxu0 0.0
  %336 = vmatpush2.msra.mxu0 0.0
  %337 = vmatprep.subr.mxu0 0.0
  %338 = vmatpush2.msra.mxu0 0.0
  %339 = vmatprep.subr.mxu0 0.0
  %340 = vmatpush2.msra.mxu0 0.0
  %341 = vmatprep.subr.mxu0 0.0
  %342 = vmatpush2.msra.mxu0 0.0
  %343 = vmatprep.subr.mxu0 0.0
  %344 = vmatpush2.msra.mxu0 0.0
  %345 = vmatprep.subr.mxu0 0.0
  %346 = vmatpush2.msra.mxu0 0.0
  %347 = vmatprep.subr.mxu0 0.0
  %348 = vmatpush2.msra.mxu0 0.0
  %349 = vmatprep.subr.mxu0 0.0
  %350 = vmatpush2.msra.mxu0 0.0
  %351 = vmatprep.subr.mxu0 0.0
  %352 = vmatpush2.msra.mxu0 0.0
  %353 = vmatprep.subr.mxu0 0.0
  %354 = vmatpush2.msra.mxu0 0.0
  %355 = vmatprep.subr.mxu0 0.0
  %356 = vmatpush2.msra.mxu0 0.0
  %357 = vmatprep.subr.mxu0 0.0
  %358 = vmatpush2.msra.mxu0 0.0
  %359 = vmatprep.mubr.f32.mxu0 0.0
  %360 = vmatmul.mubr.f32.gmra.mxu0 %v293
  %v361 = vpop.f32.mrf.mxu0
  %v362 = vadd.f32 0.0, %v361
  %v363 = vpop.f32.mrf.mxu0
  %v364 = vadd.f32 0.0, %v363
  %365 = vdwg.mxu0
  %v366 = vsel %vm22, %v362, %v364
  %v367 = vadd.f32 %v289, %v366
  %v368 = vxor.u32 %v367, 2147483648
  %v369 = vmul.f32 %v368, 1.442695
  %v370 = vpow.pop %v369
  %v371 = vadd.f32 %v370, 1.0
  %v372 = vrcp.pop %v371
  %v373 = vmul.f32 1.0, %v372
  %v374 = vtanh.pop %v367
  %v375 = vmul.f32 %v373, %v277
  %377 = vrot.lane.b32.xlu0 %v374, 64
  %v378 = vpop.permute.xlu0 %377
  %v380 = vmul.f32 %v373, %v378
  %382 = vrot.lane.b32.xlu0 %v380, 32
  %v383 = vpop.permute.xlu0 %382
  %v385 = vadd.f32 %v375, %v383
  %v386 = vtanh.pop %v385
  %388 = vrot.lane.b32.xlu0 %v386, 64
  %v389 = vpop.permute.xlu0 %388
  %v391 = vmul.f32 %v373, %v389
  %v392 = vrot.slane %v169, 4
  %v394 = vsel %vm61, %v392, %v177
  %396 = vrot.lane.b32.xlu0 %v391, 32
  %v397 = vpop.permute.xlu0 %396
  %v398 = vsel %vm183, %v397, 0
  %400 = vmatprep.subr.mxu0 0.0
  %401 = vmatpush1.msra.mxu0 0.0
  %402 = vmatprep.subr.mxu0 0.0
  %403 = vmatpush1.msra.mxu0 0.0
  %404 = vmatprep.subr.mxu0 0.0
  %405 = vmatpush1.msra.mxu0 0.0
  %406 = vmatprep.subr.mxu0 0.0
  %407 = vmatpush1.msra.mxu0 0.0
  %408 = vmatprep.subr.mxu0 0.0
  %409 = vmatpush1.msra.mxu0 0.0
  %410 = vmatprep.subr.mxu0 0.0
  %411 = vmatpush1.msra.mxu0 0.0
  %412 = vmatprep.subr.mxu0 0.0
  %413 = vmatpush1.msra.mxu0 0.0
  %414 = vmatprep.subr.mxu0 0.0
  %415 = vmatpush1.msra.mxu0 0.0
  %416 = vmatprep.subr.mxu0 0.0
  %417 = vmatpush1.msra.mxu0 0.0
  %418 = vmatprep.subr.mxu0 0.0
  %419 = vmatpush1.msra.mxu0 0.0
  %420 = vmatprep.subr.mxu0 0.0
  %421 = vmatpush1.msra.mxu0 0.0
  %422 = vmatprep.subr.mxu0 0.0
  %423 = vmatpush1.msra.mxu0 0.0
  %424 = vmatprep.subr.mxu0 %v77
  %425 = vmatpush1.msra.mxu0 %v76
  %426 = vmatprep.subr.mxu0 %v75
  %427 = vmatpush1.msra.mxu0 %v74
  %428 = vmatprep.subr.mxu0 %v73
  %429 = vmatpush1.msra.mxu0 %v72
  %430 = vmatprep.subr.mxu0 %v71
  %431 = vmatpush1.msra.mxu0 %v70
  %432 = vmatprep.subr.mxu0 0.0
  %433 = vmatpush2.msra.mxu0 0.0
  %434 = vmatprep.subr.mxu0 0.0
  %435 = vmatpush2.msra.mxu0 0.0
  %436 = vmatprep.subr.mxu0 0.0
  %437 = vmatpush2.msra.mxu0 0.0
  %438 = vmatprep.subr.mxu0 0.0
  %439 = vmatpush2.msra.mxu0 0.0
  %440 = vmatprep.subr.mxu0 0.0
  %441 = vmatpush2.msra.mxu0 0.0
  %442 = vmatprep.subr.mxu0 0.0
  %443 = vmatpush2.msra.mxu0 0.0
  %444 = vmatprep.subr.mxu0 0.0
  %445 = vmatpush2.msra.mxu0 0.0
  %446 = vmatprep.subr.mxu0 0.0
  %447 = vmatpush2.msra.mxu0 0.0
  %448 = vmatprep.subr.mxu0 0.0
  %449 = vmatpush2.msra.mxu0 0.0
  %450 = vmatprep.subr.mxu0 0.0
  %451 = vmatpush2.msra.mxu0 0.0
  %452 = vmatprep.subr.mxu0 0.0
  %453 = vmatpush2.msra.mxu0 0.0
  %454 = vmatprep.subr.mxu0 0.0
  %455 = vmatpush2.msra.mxu0 0.0
  %456 = vmatprep.subr.mxu0 0.0
  %457 = vmatpush2.msra.mxu0 0.0
  %458 = vmatprep.subr.mxu0 0.0
  %459 = vmatpush2.msra.mxu0 0.0
  %460 = vmatprep.subr.mxu0 0.0
  %461 = vmatpush2.msra.mxu0 0.0
  %462 = vmatprep.subr.mxu0 0.0
  %463 = vmatpush2.msra.mxu0 0.0
  %464 = vmatprep.mubr.f32.mxu0 0.0
  %465 = vmatmul.mubr.f32.gmra.mxu0 %v398
  %v466 = vpop.f32.mrf.mxu0
  %v467 = vadd.f32 0.0, %v466
  %v468 = vpop.f32.mrf.mxu0
  %v469 = vadd.f32 0.0, %v468
  %470 = vdwg.mxu0
  %v471 = vsel %vm22, %v467, %v469
  %v472 = vadd.f32 %v394, %v471
  %v473 = vxor.u32 %v472, 2147483648
  %v474 = vmul.f32 %v473, 1.442695
  %v475 = vpow.pop %v474
  %v476 = vadd.f32 %v475, 1.0
  %v477 = vrcp.pop %v476
  %v478 = vmul.f32 1.0, %v477
  %v479 = vtanh.pop %v472
  %v480 = vmul.f32 %v478, %v385
  %482 = vrot.lane.b32.xlu0 %v479, 64
  %v483 = vpop.permute.xlu0 %482
  %v485 = vmul.f32 %v478, %v483
  %487 = vrot.lane.b32.xlu0 %v485, 32
  %v488 = vpop.permute.xlu0 %487
  %v490 = vadd.f32 %v480, %v488
  %v491 = vtanh.pop %v490
  %493 = vrot.lane.b32.xlu0 %v491, 64
  %v494 = vpop.permute.xlu0 %493
  %v496 = vmul.f32 %v478, %v494
  %v497 = vrot.slane %v169, 6
  %v499 = vrot.slane %v177, 6
  %v501 = vsel %vm61, %v497, %v499
  %503 = vrot.lane.b32.xlu0 %v496, 32
  %v504 = vpop.permute.xlu0 %503
  %v505 = vsel %vm183, %v504, 0
  %507 = vmatprep.subr.mxu0 0.0
  %508 = vmatpush1.msra.mxu0 0.0
  %509 = vmatprep.subr.mxu0 0.0
  %510 = vmatpush1.msra.mxu0 0.0
  %511 = vmatprep.subr.mxu0 0.0
  %512 = vmatpush1.msra.mxu0 0.0
  %513 = vmatprep.subr.mxu0 0.0
  %514 = vmatpush1.msra.mxu0 0.0
  %515 = vmatprep.subr.mxu0 0.0
  %516 = vmatpush1.msra.mxu0 0.0
  %517 = vmatprep.subr.mxu0 0.0
  %518 = vmatpush1.msra.mxu0 0.0
  %519 = vmatprep.subr.mxu0 0.0
  %520 = vmatpush1.msra.mxu0 0.0
  %521 = vmatprep.subr.mxu0 0.0
  %522 = vmatpush1.msra.mxu0 0.0
  %523 = vmatprep.subr.mxu0 0.0
  %524 = vmatpush1.msra.mxu0 0.0
  %525 = vmatprep.subr.mxu0 0.0
  %526 = vmatpush1.msra.mxu0 0.0
  %527 = vmatprep.subr.mxu0 0.0
  %528 = vmatpush1.msra.mxu0 0.0
  %529 = vmatprep.subr.mxu0 0.0
  %530 = vmatpush1.msra.mxu0 0.0
  %531 = vmatprep.subr.mxu0 %v77
  %532 = vmatpush1.msra.mxu0 %v76
  %533 = vmatprep.subr.mxu0 %v75
  %534 = vmatpush1.msra.mxu0 %v74
  %535 = vmatprep.subr.mxu0 %v73
  %536 = vmatpush1.msra.mxu0 %v72
  %537 = vmatprep.subr.mxu0 %v71
  %538 = vmatpush1.msra.mxu0 %v70
  %539 = vmatprep.subr.mxu0 0.0
  %540 = vmatpush2.msra.mxu0 0.0
  %541 = vmatprep.subr.mxu0 0.0
  %542 = vmatpush2.msra.mxu0 0.0
  %543 = vmatprep.subr.mxu0 0.0
  %544 = vmatpush2.msra.mxu0 0.0
  %545 = vmatprep.subr.mxu0 0.0
  %546 = vmatpush2.msra.mxu0 0.0
  %547 = vmatprep.subr.mxu0 0.0
  %548 = vmatpush2.msra.mxu0 0.0
  %549 = vmatprep.subr.mxu0 0.0
  %550 = vmatpush2.msra.mxu0 0.0
  %551 = vmatprep.subr.mxu0 0.0
  %552 = vmatpush2.msra.mxu0 0.0
  %553 = vmatprep.subr.mxu0 0.0
  %554 = vmatpush2.msra.mxu0 0.0
  %555 = vmatprep.subr.mxu0 0.0
  %556 = vmatpush2.msra.mxu0 0.0
  %557 = vmatprep.subr.mxu0 0.0
  %558 = vmatpush2.msra.mxu0 0.0
  %559 = vmatprep.subr.mxu0 0.0
  %560 = vmatpush2.msra.mxu0 0.0
  %561 = vmatprep.subr.mxu0 0.0
  %562 = vmatpush2.msra.mxu0 0.0
  %563 = vmatprep.subr.mxu0 0.0
  %564 = vmatpush2.msra.mxu0 0.0
  %565 = vmatprep.subr.mxu0 0.0
  %566 = vmatpush2.msra.mxu0 0.0
  %567 = vmatprep.subr.mxu0 0.0
  %568 = vmatpush2.msra.mxu0 0.0
  %569 = vmatprep.subr.mxu0 0.0
  %570 = vmatpush2.msra.mxu0 0.0
  %571 = vmatprep.mubr.f32.mxu0 0.0
  %572 = vmatmul.mubr.f32.gmra.mxu0 %v505
  %v573 = vpop.f32.mrf.mxu0
  %v574 = vadd.f32 0.0, %v573
  %v575 = vpop.f32.mrf.mxu0
  %v576 = vadd.f32 0.0, %v575
  %577 = vdwg.mxu0
  %v578 = vsel %vm22, %v574, %v576
  %v579 = vadd.f32 %v501, %v578
  %v580 = vxor.u32 %v579, 2147483648
  %v581 = vmul.f32 %v580, 1.442695
  %v582 = vpow.pop %v581
  %v583 = vadd.f32 %v582, 1.0
  %v584 = vrcp.pop %v583
  %v585 = vmul.f32 1.0, %v584
  %v586 = vtanh.pop %v579
  %v587 = vmul.f32 %v585, %v490
  %589 = vrot.lane.b32.xlu0 %v586, 64
  %v590 = vpop.permute.xlu0 %589
  %v592 = vmul.f32 %v585, %v590
  %594 = vrot.lane.b32.xlu0 %v592, 32
  %v595 = vpop.permute.xlu0 %594
  %v597 = vadd.f32 %v587, %v595
  %v598 = vtanh.pop %v597
  %600 = vrot.lane.b32.xlu0 %v598, 64
  %v601 = vpop.permute.xlu0 %600
  %v603 = vmul.f32 %v585, %v601
  %v605 = vrot.slane %v171, 4
  %v607 = vsel %vm61, %v175, %v605
  %609 = vrot.lane.b32.xlu0 %v603, 32
  %v610 = vpop.permute.xlu0 %609
  %v611 = vsel %vm183, %v610, 0
  %613 = vmatprep.subr.mxu0 0.0
  %614 = vmatpush1.msra.mxu0 0.0
  %615 = vmatprep.subr.mxu0 0.0
  %616 = vmatpush1.msra.mxu0 0.0
  %617 = vmatprep.subr.mxu0 0.0
  %618 = vmatpush1.msra.mxu0 0.0
  %619 = vmatprep.subr.mxu0 0.0
  %620 = vmatpush1.msra.mxu0 0.0
  %621 = vmatprep.subr.mxu0 0.0
  %622 = vmatpush1.msra.mxu0 0.0
  %623 = vmatprep.subr.mxu0 0.0
  %624 = vmatpush1.msra.mxu0 0.0
  %625 = vmatprep.subr.mxu0 0.0
  %626 = vmatpush1.msra.mxu0 0.0
  %627 = vmatprep.subr.mxu0 0.0
  %628 = vmatpush1.msra.mxu0 0.0
  %629 = vmatprep.subr.mxu0 0.0
  %630 = vmatpush1.msra.mxu0 0.0
  %631 = vmatprep.subr.mxu0 0.0
  %632 = vmatpush1.msra.mxu0 0.0
  %633 = vmatprep.subr.mxu0 0.0
  %634 = vmatpush1.msra.mxu0 0.0
  %635 = vmatprep.subr.mxu0 0.0
  %636 = vmatpush1.msra.mxu0 0.0
  %637 = vmatprep.subr.mxu0 %v77
  %638 = vmatpush1.msra.mxu0 %v76
  %639 = vmatprep.subr.mxu0 %v75
  %640 = vmatpush1.msra.mxu0 %v74
  %641 = vmatprep.subr.mxu0 %v73
  %642 = vmatpush1.msra.mxu0 %v72
  %643 = vmatprep.subr.mxu0 %v71
  %644 = vmatpush1.msra.mxu0 %v70
  %645 = vmatprep.subr.mxu0 0.0
  %646 = vmatpush2.msra.mxu0 0.0
  %647 = vmatprep.subr.mxu0 0.0
  %648 = vmatpush2.msra.mxu0 0.0
  %649 = vmatprep.subr.mxu0 0.0
  %650 = vmatpush2.msra.mxu0 0.0
  %651 = vmatprep.subr.mxu0 0.0
  %652 = vmatpush2.msra.mxu0 0.0
  %653 = vmatprep.subr.mxu0 0.0
  %654 = vmatpush2.msra.mxu0 0.0
  %655 = vmatprep.subr.mxu0 0.0
  %656 = vmatpush2.msra.mxu0 0.0
  %657 = vmatprep.subr.mxu0 0.0
  %658 = vmatpush2.msra.mxu0 0.0
  %659 = vmatprep.subr.mxu0 0.0
  %660 = vmatpush2.msra.mxu0 0.0
  %661 = vmatprep.subr.mxu0 0.0
  %662 = vmatpush2.msra.mxu0 0.0
  %663 = vmatprep.subr.mxu0 0.0
  %664 = vmatpush2.msra.mxu0 0.0
  %665 = vmatprep.subr.mxu0 0.0
  %666 = vmatpush2.msra.mxu0 0.0
  %667 = vmatprep.subr.mxu0 0.0
  %668 = vmatpush2.msra.mxu0 0.0
  %669 = vmatprep.subr.mxu0 0.0
  %670 = vmatpush2.msra.mxu0 0.0
  %671 = vmatprep.subr.mxu0 0.0
  %672 = vmatpush2.msra.mxu0 0.0
  %673 = vmatprep.subr.mxu0 0.0
  %674 = vmatpush2.msra.mxu0 0.0
  %675 = vmatprep.subr.mxu0 0.0
  %676 = vmatpush2.msra.mxu0 0.0
  %677 = vmatprep.mubr.f32.mxu0 0.0
  %678 = vmatmul.mubr.f32.gmra.mxu0 %v611
  %v679 = vpop.f32.mrf.mxu0
  %v680 = vadd.f32 0.0, %v679
  %v681 = vpop.f32.mrf.mxu0
  %v682 = vadd.f32 0.0, %v681
  %683 = vdwg.mxu0
  %v684 = vsel %vm22, %v680, %v682
  %v685 = vadd.f32 %v607, %v684
  %v686 = vxor.u32 %v685, 2147483648
  %v687 = vmul.f32 %v686, 1.442695
  %v688 = vpow.pop %v687
  %v689 = vadd.f32 %v688, 1.0
  %v690 = vrcp.pop %v689
  %v691 = vmul.f32 1.0, %v690
  %v692 = vtanh.pop %v685
  %v693 = vmul.f32 %v691, %v597
  %695 = vrot.lane.b32.xlu0 %v692, 64
  %v696 = vpop.permute.xlu0 %695
  %v698 = vmul.f32 %v691, %v696
  %700 = vrot.lane.b32.xlu0 %v698, 32
  %v701 = vpop.permute.xlu0 %700
  %v703 = vadd.f32 %v693, %v701
  %v704 = vtanh.pop %v703
  %706 = vrot.lane.b32.xlu0 %v704, 64
  %v707 = vpop.permute.xlu0 %706
  %v709 = vmul.f32 %v691, %v707
  %v711 = vrot.slane %v175, 2
  %v713 = vrot.slane %v171, 2
  %v715 = vsel %vm61, %v711, %v713
  %717 = vrot.lane.b32.xlu0 %v709, 32
  %v718 = vpop.permute.xlu0 %717
  %v719 = vsel %vm183, %v718, 0
  %721 = vmatprep.subr.mxu0 0.0
  %722 = vmatpush1.msra.mxu0 0.0
  %723 = vmatprep.subr.mxu0 0.0
  %724 = vmatpush1.msra.mxu0 0.0
  %725 = vmatprep.subr.mxu0 0.0
  %726 = vmatpush1.msra.mxu0 0.0
  %727 = vmatprep.subr.mxu0 0.0
  %728 = vmatpush1.msra.mxu0 0.0
  %729 = vmatprep.subr.mxu0 0.0
  %730 = vmatpush1.msra.mxu0 0.0
  %731 = vmatprep.subr.mxu0 0.0
  %732 = vmatpush1.msra.mxu0 0.0
  %733 = vmatprep.subr.mxu0 0.0
  %734 = vmatpush1.msra.mxu0 0.0
  %735 = vmatprep.subr.mxu0 0.0
  %736 = vmatpush1.msra.mxu0 0.0
  %737 = vmatprep.subr.mxu0 0.0
  %738 = vmatpush1.msra.mxu0 0.0
  %739 = vmatprep.subr.mxu0 0.0
  %740 = vmatpush1.msra.mxu0 0.0
  %741 = vmatprep.subr.mxu0 0.0
  %742 = vmatpush1.msra.mxu0 0.0
  %743 = vmatprep.subr.mxu0 0.0
  %744 = vmatpush1.msra.mxu0 0.0
  %745 = vmatprep.subr.mxu0 %v77
  %746 = vmatpush1.msra.mxu0 %v76
  %747 = vmatprep.subr.mxu0 %v75
  %748 = vmatpush1.msra.mxu0 %v74
  %749 = vmatprep.subr.mxu0 %v73
  %750 = vmatpush1.msra.mxu0 %v72
  %751 = vmatprep.subr.mxu0 %v71
  %752 = vmatpush1.msra.mxu0 %v70
  %753 = vmatprep.subr.mxu0 0.0
  %754 = vmatpush2.msra.mxu0 0.0
  %755 = vmatprep.subr.mxu0 0.0
  %756 = vmatpush2.msra.mxu0 0.0
  %757 = vmatprep.subr.mxu0 0.0
  %758 = vmatpush2.msra.mxu0 0.0
  %759 = vmatprep.subr.mxu0 0.0
  %760 = vmatpush2.msra.mxu0 0.0
  %761 = vmatprep.subr.mxu0 0.0
  %762 = vmatpush2.msra.mxu0 0.0
  %763 = vmatprep.subr.mxu0 0.0
  %764 = vmatpush2.msra.mxu0 0.0
  %765 = vmatprep.subr.mxu0 0.0
  %766 = vmatpush2.msra.mxu0 0.0
  %767 = vmatprep.subr.mxu0 0.0
  %768 = vmatpush2.msra.mxu0 0.0
  %769 = vmatprep.subr.mxu0 0.0
  %770 = vmatpush2.msra.mxu0 0.0
  %771 = vmatprep.subr.mxu0 0.0
  %772 = vmatpush2.msra.mxu0 0.0
  %773 = vmatprep.subr.mxu0 0.0
  %774 = vmatpush2.msra.mxu0 0.0
  %775 = vmatprep.subr.mxu0 0.0
  %776 = vmatpush2.msra.mxu0 0.0
  %777 = vmatprep.subr.mxu0 0.0
  %778 = vmatpush2.msra.mxu0 0.0
  %779 = vmatprep.subr.mxu0 0.0
  %780 = vmatpush2.msra.mxu0 0.0
  %781 = vmatprep.subr.mxu0 0.0
  %782 = vmatpush2.msra.mxu0 0.0
  %783 = vmatprep.subr.mxu0 0.0
  %784 = vmatpush2.msra.mxu0 0.0
  %785 = vmatprep.mubr.f32.mxu0 0.0
  %786 = vmatmul.mubr.f32.gmra.mxu0 %v719
  %v787 = vpop.f32.mrf.mxu0
  %v788 = vadd.f32 0.0, %v787
  %v789 = vpop.f32.mrf.mxu0
  %v790 = vadd.f32 0.0, %v789
  %791 = vdwg.mxu0
  %v792 = vsel %vm22, %v788, %v790
  %v793 = vadd.f32 %v715, %v792
  %v794 = vxor.u32 %v793, 2147483648
  %v795 = vmul.f32 %v794, 1.442695
  %v796 = vpow.pop %v795
  %v797 = vadd.f32 %v796, 1.0
  %v798 = vrcp.pop %v797
  %v799 = vmul.f32 1.0, %v798
  %v800 = vtanh.pop %v793
  %v801 = vmul.f32 %v799, %v703
  %803 = vrot.lane.b32.xlu0 %v800, 64
  %v804 = vpop.permute.xlu0 %803
  %v806 = vmul.f32 %v799, %v804
  %808 = vrot.lane.b32.xlu0 %v806, 32
  %v809 = vpop.permute.xlu0 %808
  %v811 = vadd.f32 %v801, %v809
  %v812 = vtanh.pop %v811
  %814 = vrot.lane.b32.xlu0 %v812, 64
  %v815 = vpop.permute.xlu0 %814
  %v817 = vmul.f32 %v799, %v815
  %v818 = vrot.slane %v175, 4
  %v820 = vsel %vm61, %v818, %v171
  %822 = vrot.lane.b32.xlu0 %v817, 32
  %v823 = vpop.permute.xlu0 %822
  %v824 = vsel %vm183, %v823, 0
  %826 = vmatprep.subr.mxu0 0.0
  %827 = vmatpush1.msra.mxu0 0.0
  %828 = vmatprep.subr.mxu0 0.0
  %829 = vmatpush1.msra.mxu0 0.0
  %830 = vmatprep.subr.mxu0 0.0
  %831 = vmatpush1.msra.mxu0 0.0
  %832 = vmatprep.subr.mxu0 0.0
  %833 = vmatpush1.msra.mxu0 0.0
  %834 = vmatprep.subr.mxu0 0.0
  %835 = vmatpush1.msra.mxu0 0.0
  %836 = vmatprep.subr.mxu0 0.0
  %837 = vmatpush1.msra.mxu0 0.0
  %838 = vmatprep.subr.mxu0 0.0
  %839 = vmatpush1.msra.mxu0 0.0
  %840 = vmatprep.subr.mxu0 0.0
  %841 = vmatpush1.msra.mxu0 0.0
  %842 = vmatprep.subr.mxu0 0.0
  %843 = vmatpush1.msra.mxu0 0.0
  %844 = vmatprep.subr.mxu0 0.0
  %845 = vmatpush1.msra.mxu0 0.0
  %846 = vmatprep.subr.mxu0 0.0
  %847 = vmatpush1.msra.mxu0 0.0
  %848 = vmatprep.subr.mxu0 0.0
  %849 = vmatpush1.msra.mxu0 0.0
  %850 = vmatprep.subr.mxu0 %v77
  %851 = vmatpush1.msra.mxu0 %v76
  %852 = vmatprep.subr.mxu0 %v75
  %853 = vmatpush1.msra.mxu0 %v74
  %854 = vmatprep.subr.mxu0 %v73
  %855 = vmatpush1.msra.mxu0 %v72
  %856 = vmatprep.subr.mxu0 %v71
  %857 = vmatpush1.msra.mxu0 %v70
  %858 = vmatprep.subr.mxu0 0.0
  %859 = vmatpush2.msra.mxu0 0.0
  %860 = vmatprep.subr.mxu0 0.0
  %861 = vmatpush2.msra.mxu0 0.0
  %862 = vmatprep.subr.mxu0 0.0
  %863 = vmatpush2.msra.mxu0 0.0
  %864 = vmatprep.subr.mxu0 0.0
  %865 = vmatpush2.msra.mxu0 0.0
  %866 = vmatprep.subr.mxu0 0.0
  %867 = vmatpush2.msra.mxu0 0.0
  %868 = vmatprep.subr.mxu0 0.0
  %869 = vmatpush2.msra.mxu0 0.0
  %870 = vmatprep.subr.mxu0 0.0
  %871 = vmatpush2.msra.mxu0 0.0
  %872 = vmatprep.subr.mxu0 0.0
  %873 = vmatpush2.msra.mxu0 0.0
  %874 = vmatprep.subr.mxu0 0.0
  %875 = vmatpush2.msra.mxu0 0.0
  %876 = vmatprep.subr.mxu0 0.0
  %877 = vmatpush2.msra.mxu0 0.0
  %878 = vmatprep.subr.mxu0 0.0
  %879 = vmatpush2.msra.mxu0 0.0
  %880 = vmatprep.subr.mxu0 0.0
  %881 = vmatpush2.msra.mxu0 0.0
  %882 = vmatprep.subr.mxu0 0.0
  %883 = vmatpush2.msra.mxu0 0.0
  %884 = vmatprep.subr.mxu0 0.0
  %885 = vmatpush2.msra.mxu0 0.0
  %886 = vmatprep.subr.mxu0 0.0
  %887 = vmatpush2.msra.mxu0 0.0
  %888 = vmatprep.subr.mxu0 0.0
  %889 = vmatpush2.msra.mxu0 0.0
  %890 = vmatprep.mubr.f32.mxu0 0.0
  %891 = vmatmul.mubr.f32.gmra.mxu0 %v824
  %v892 = vpop.f32.mrf.mxu0
  %v893 = vadd.f32 0.0, %v892
  %v894 = vpop.f32.mrf.mxu0
  %v895 = vadd.f32 0.0, %v894
  %896 = vdwg.mxu0
  %v897 = vsel %vm22, %v893, %v895
  %v898 = vadd.f32 %v820, %v897
  %v899 = vxor.u32 %v898, 2147483648
  %v900 = vmul.f32 %v899, 1.442695
  %v901 = vpow.pop %v900
  %v902 = vadd.f32 %v901, 1.0
  %v903 = vrcp.pop %v902
  %v904 = vmul.f32 1.0, %v903
  %v905 = vtanh.pop %v898
  %v906 = vmul.f32 %v904, %v811
  %908 = vrot.lane.b32.xlu0 %v905, 64
  %v909 = vpop.permute.xlu0 %908
  %v911 = vmul.f32 %v904, %v909
  %913 = vrot.lane.b32.xlu0 %v911, 32
  %v914 = vpop.permute.xlu0 %913
  %v916 = vadd.f32 %v906, %v914
  %v917 = vtanh.pop %v916
  %919 = vrot.lane.b32.xlu0 %v917, 64
  %v920 = vpop.permute.xlu0 %919
  %v922 = vmul.f32 %v904, %v920
  %v923 = vrot.slane %v175, 6
  %v925 = vrot.slane %v171, 6
  %v927 = vsel %vm61, %v923, %v925
  %929 = vrot.lane.b32.xlu0 %v922, 32
  %v930 = vpop.permute.xlu0 %929
  %v931 = vsel %vm183, %v930, 0
  %933 = vmatprep.subr.mxu0 0.0
  %934 = vmatpush1.msra.mxu0 0.0
  %935 = vmatprep.subr.mxu0 0.0
  %936 = vmatpush1.msra.mxu0 0.0
  %937 = vmatprep.subr.mxu0 0.0
  %938 = vmatpush1.msra.mxu0 0.0
  %939 = vmatprep.subr.mxu0 0.0
  %940 = vmatpush1.msra.mxu0 0.0
  %941 = vmatprep.subr.mxu0 0.0
  %942 = vmatpush1.msra.mxu0 0.0
  %943 = vmatprep.subr.mxu0 0.0
  %944 = vmatpush1.msra.mxu0 0.0
  %945 = vmatprep.subr.mxu0 0.0
  %946 = vmatpush1.msra.mxu0 0.0
  %947 = vmatprep.subr.mxu0 0.0
  %948 = vmatpush1.msra.mxu0 0.0
  %949 = vmatprep.subr.mxu0 0.0
  %950 = vmatpush1.msra.mxu0 0.0
  %951 = vmatprep.subr.mxu0 0.0
  %952 = vmatpush1.msra.mxu0 0.0
  %953 = vmatprep.subr.mxu0 0.0
  %954 = vmatpush1.msra.mxu0 0.0
  %955 = vmatprep.subr.mxu0 0.0
  %956 = vmatpush1.msra.mxu0 0.0
  %957 = vmatprep.subr.mxu0 %v77
  %958 = vmatpush1.msra.mxu0 %v76
  %959 = vmatprep.subr.mxu0 %v75
  %960 = vmatpush1.msra.mxu0 %v74
  %961 = vmatprep.subr.mxu0 %v73
  %962 = vmatpush1.msra.mxu0 %v72
  %963 = vmatprep.subr.mxu0 %v71
  %964 = vmatpush1.msra.mxu0 %v70
  %965 = vmatprep.subr.mxu0 0.0
  %966 = vmatpush2.msra.mxu0 0.0
  %967 = vmatprep.subr.mxu0 0.0
  %968 = vmatpush2.msra.mxu0 0.0
  %969 = vmatprep.subr.mxu0 0.0
  %970 = vmatpush2.msra.mxu0 0.0
  %971 = vmatprep.subr.mxu0 0.0
  %972 = vmatpush2.msra.mxu0 0.0
  %973 = vmatprep.subr.mxu0 0.0
  %974 = vmatpush2.msra.mxu0 0.0
  %975 = vmatprep.subr.mxu0 0.0
  %976 = vmatpush2.msra.mxu0 0.0
  %977 = vmatprep.subr.mxu0 0.0
  %978 = vmatpush2.msra.mxu0 0.0
  %979 = vmatprep.subr.mxu0 0.0
  %980 = vmatpush2.msra.mxu0 0.0
  %981 = vmatprep.subr.mxu0 0.0
  %982 = vmatpush2.msra.mxu0 0.0
  %983 = vmatprep.subr.mxu0 0.0
  %984 = vmatpush2.msra.mxu0 0.0
  %985 = vmatprep.subr.mxu0 0.0
  %986 = vmatpush2.msra.mxu0 0.0
  %987 = vmatprep.subr.mxu0 0.0
  %988 = vmatpush2.msra.mxu0 0.0
  %989 = vmatprep.subr.mxu0 0.0
  %990 = vmatpush2.msra.mxu0 0.0
  %991 = vmatprep.subr.mxu0 0.0
  %992 = vmatpush2.msra.mxu0 0.0
  %993 = vmatprep.subr.mxu0 0.0
  %994 = vmatpush2.msra.mxu0 0.0
  %995 = vmatprep.subr.mxu0 0.0
  %996 = vmatpush2.msra.mxu0 0.0
  %997 = vmatprep.mubr.f32.mxu0 0.0
  %998 = vmatmul.mubr.f32.gmra.mxu0 %v931
  %v999 = vpop.f32.mrf.mxu0
  %v1000 = vadd.f32 0.0, %v999
  %v1001 = vpop.f32.mrf.mxu0
  %v1002 = vadd.f32 0.0, %v1001
  %1003 = vdwg.mxu0
  %v1004 = vsel %vm22, %v1000, %v1002
  %v1005 = vadd.f32 %v927, %v1004
  %v1006 = vxor.u32 %v1005, 2147483648
  %v1007 = vmul.f32 %v1006, 1.442695
  %v1008 = vpow.pop %v1007
  %v1009 = vadd.f32 %v1008, 1.0
  %v1010 = vrcp.pop %v1009
  %v1011 = vmul.f32 1.0, %v1010
  %v1012 = vtanh.pop %v1005
  %v1013 = vmul.f32 %v1011, %v916
  %1015 = vrot.lane.b32.xlu0 %v1012, 64
  %v1016 = vpop.permute.xlu0 %1015
  %v1018 = vmul.f32 %v1011, %v1016
  %1020 = vrot.lane.b32.xlu0 %v1018, 32
  %v1021 = vpop.permute.xlu0 %1020
  %v1023 = vadd.f32 %v1013, %v1021
  %v1024 = vtanh.pop %v1023
  %1026 = vrot.lane.b32.xlu0 %v1024, 64
  %v1027 = vpop.permute.xlu0 %1026
  %v1029 = vmul.f32 %v1011, %v1027
  %v1030 = vrot.slane %v391, 6
  %v1032 = vrot.slane %v496, 4
  %v1034 = vrot.slane %v603, 2
  %v1036 = vrot.slane %v817, 6
  %v1038 = vrot.slane %v922, 4
  %v1041 = vrot.slane %v1029, 2
  %v1043 = vsel %vm61, %v283, %v1030
  %v1044 = vsel %vm63, %v1043, %v1032
  %v1045 = vsel %vm65, %v1044, %v1034
  %v1046 = vsel %vm61, %v709, %v1036
  %v1047 = vsel %vm63, %v1046, %v1038
  %v1048 = vsel %vm65, %v1047, %v1041
  %v1049 = vrot.slane %v709, 4
  %v1051 = vrot.slane %v283, 4
  %v1053 = vsel %vm61, %v1041, %v922
  %v1054 = vsel %vm63, %v1053, %v1036
  %v1055 = vsel %vm65, %v1054, %v1049
  %v1056 = vsel %vm61, %v1034, %v496
  %v1057 = vsel %vm63, %v1056, %v1030
  %v1058 = vsel %vm65, %v1057, %v1051
  %s1059 = scalar_lea.vmem %s3, 80
  %v1060 = vld [vmem:[%s1059] sm:$0xff]
  %v1061 = vld [vmem:[%s1059 + $0x8] sm:$0xff]
  %v1062 = vld [vmem:[%s1059 + $0x10] sm:$0xff]
  %v1063 = vld [vmem:[%s1059 + $0x18] sm:$0xff]
  %v1064 = vld [vmem:[%s1059 + $0x20] sm:$0xff]
  %v1065 = vld [vmem:[%s1059 + $0x28] sm:$0xff]
  %v1066 = vld [vmem:[%s1059 + $0x30] sm:$0xff]
  %v1067 = vld [vmem:[%s1059 + $0x38] sm:$0xff]
  %v1068 = vld [vmem:[%s1059 + $0x40] sm:$0x1]
  %v1069 = vld [vmem:[%s1059 + $0x48] sm:$0x1]
  %v1070 = vld [vmem:[%s2] sm:$0xff]
  %v1071 = vld [vmem:[%s2 + $0x8] sm:$0xff]
  %v1072 = vld [vmem:[%s2 + $0x10] sm:$0xff]
  %v1073 = vld [vmem:[%s2 + $0x18] sm:$0xff]
  %v1074 = vld [vmem:[%s2 + $0x20] sm:$0xff]
  %v1075 = vld [vmem:[%s2 + $0x28] sm:$0xff]
  %v1076 = vld [vmem:[%s2 + $0x30] sm:$0xff]
  %v1077 = vld [vmem:[%s2 + $0x38] sm:$0xff]
  %v1078 = vld [vmem:[%s2 + $0x40] sm:$0xff]
  %v1079 = vld [vmem:[%s2 + $0x48] sm:$0xff]
  %v1080 = vld [vmem:[%s2 + $0x50] sm:$0xff]
  %v1081 = vld [vmem:[%s2 + $0x58] sm:$0xff]
  %v1082 = vld [vmem:[%s2 + $0x60] sm:$0xff]
  %v1083 = vld [vmem:[%s2 + $0x68] sm:$0xff]
  %v1084 = vld [vmem:[%s2 + $0x70] sm:$0xff]
  %v1085 = vld [vmem:[%s2 + $0x78] sm:$0xff]
  %1088 = vrot.lane.b32.xlu0 %v1055, 32
  %v1089 = vpop.permute.xlu0 %1088
  %1090 = vrot.lane.b32.xlu0 %v1058, 32
  %v1091 = vpop.permute.xlu0 %1090
  %v1092 = vsel %vm183, %v1089, 0
  %v1094 = vsel %vm183, %v1091, 0
  %1096 = vmatprep.subr.mxu0 0.0
  %1097 = vmatpush1.msra.mxu0 0.0
  %1098 = vmatprep.subr.mxu0 0.0
  %1099 = vmatpush1.msra.mxu0 0.0
  %1100 = vmatprep.subr.mxu0 0.0
  %1101 = vmatpush1.msra.mxu0 0.0
  %1102 = vmatprep.subr.mxu0 0.0
  %1103 = vmatpush1.msra.mxu0 0.0
  %1104 = vmatprep.subr.mxu0 0.0
  %1105 = vmatpush1.msra.mxu0 0.0
  %1106 = vmatprep.subr.mxu0 0.0
  %1107 = vmatpush1.msra.mxu0 0.0
  %1108 = vmatprep.subr.mxu0 0.0
  %1109 = vmatpush1.msra.mxu0 0.0
  %1110 = vmatprep.subr.mxu0 0.0
  %1111 = vmatpush1.msra.mxu0 0.0
  %1112 = vmatprep.subr.mxu0 0.0
  %1113 = vmatpush1.msra.mxu0 0.0
  %1114 = vmatprep.subr.mxu0 0.0
  %1115 = vmatpush1.msra.mxu0 0.0
  %1116 = vmatprep.subr.mxu0 0.0
  %1117 = vmatpush1.msra.mxu0 0.0
  %1118 = vmatprep.subr.mxu0 0.0
  %1119 = vmatpush1.msra.mxu0 0.0
  %1120 = vmatprep.subr.mxu0 %v1085
  %1121 = vmatpush1.msra.mxu0 %v1084
  %1122 = vmatprep.subr.mxu0 %v1083
  %1123 = vmatpush1.msra.mxu0 %v1082
  %1124 = vmatprep.subr.mxu0 %v1081
  %1125 = vmatpush1.msra.mxu0 %v1080
  %1126 = vmatprep.subr.mxu0 %v1079
  %1127 = vmatpush1.msra.mxu0 %v1078
  %1128 = vmatprep.subr.mxu0 0.0
  %1129 = vmatpush2.msra.mxu0 0.0
  %1130 = vmatprep.subr.mxu0 0.0
  %1131 = vmatpush2.msra.mxu0 0.0
  %1132 = vmatprep.subr.mxu0 0.0
  %1133 = vmatpush2.msra.mxu0 0.0
  %1134 = vmatprep.subr.mxu0 0.0
  %1135 = vmatpush2.msra.mxu0 0.0
  %1136 = vmatprep.subr.mxu0 0.0
  %1137 = vmatpush2.msra.mxu0 0.0
  %1138 = vmatprep.subr.mxu0 0.0
  %1139 = vmatpush2.msra.mxu0 0.0
  %1140 = vmatprep.subr.mxu0 0.0
  %1141 = vmatpush2.msra.mxu0 0.0
  %1142 = vmatprep.subr.mxu0 0.0
  %1143 = vmatpush2.msra.mxu0 0.0
  %1144 = vmatprep.subr.mxu0 0.0
  %1145 = vmatpush2.msra.mxu0 0.0
  %1146 = vmatprep.subr.mxu0 0.0
  %1147 = vmatpush2.msra.mxu0 0.0
  %1148 = vmatprep.subr.mxu0 0.0
  %1149 = vmatpush2.msra.mxu0 0.0
  %1150 = vmatprep.subr.mxu0 0.0
  %1151 = vmatpush2.msra.mxu0 0.0
  %1152 = vmatprep.subr.mxu0 0.0
  %1153 = vmatpush2.msra.mxu0 0.0
  %1154 = vmatprep.subr.mxu0 0.0
  %1155 = vmatpush2.msra.mxu0 0.0
  %1156 = vmatprep.subr.mxu0 0.0
  %1157 = vmatpush2.msra.mxu0 0.0
  %1158 = vmatprep.subr.mxu0 0.0
  %1159 = vmatpush2.msra.mxu0 0.0
  %1160 = vmatprep.mubr.f32.mxu0 0.0
  %1161 = vmatmul.mubr.f32.gmra.mxu0 %v1092
  %v1162 = vpop.f32.mrf.mxu0
  %v1163 = vadd.f32 0.0, %v1162
  %v1164 = vpop.f32.mrf.mxu0
  %v1165 = vadd.f32 0.0, %v1164
  %1166 = vmatprep.mubr.f32.mxu0 0.0
  %1167 = vmatmul.mubr.f32.gmra.mxu0 %v1094
  %v1168 = vpop.f32.mrf.mxu0
  %v1169 = vadd.f32 0.0, %v1168
  %v1170 = vpop.f32.mrf.mxu0
  %v1171 = vadd.f32 0.0, %v1170
  %1172 = vdwg.mxu0
  %1175 = vrot.lane.b32.xlu0 %v1045, 32
  %v1176 = vpop.permute.xlu0 %1175
  %1177 = vrot.lane.b32.xlu0 %v1048, 32
  %v1178 = vpop.permute.xlu0 %1177
  %v1179 = vsel %vm183, %v1176, 0
  %v1181 = vsel %vm183, %v1178, 0
  %1183 = vmatprep.subr.mxu0 0.0
  %1184 = vmatpush1.msra.mxu0 0.0
  %1185 = vmatprep.subr.mxu0 0.0
  %1186 = vmatpush1.msra.mxu0 0.0
  %1187 = vmatprep.subr.mxu0 0.0
  %1188 = vmatpush1.msra.mxu0 0.0
  %1189 = vmatprep.subr.mxu0 0.0
  %1190 = vmatpush1.msra.mxu0 0.0
  %1191 = vmatprep.subr.mxu0 0.0
  %1192 = vmatpush1.msra.mxu0 0.0
  %1193 = vmatprep.subr.mxu0 0.0
  %1194 = vmatpush1.msra.mxu0 0.0
  %1195 = vmatprep.subr.mxu0 0.0
  %1196 = vmatpush1.msra.mxu0 0.0
  %1197 = vmatprep.subr.mxu0 0.0
  %1198 = vmatpush1.msra.mxu0 0.0
  %1199 = vmatprep.subr.mxu0 0.0
  %1200 = vmatpush1.msra.mxu0 0.0
  %1201 = vmatprep.subr.mxu0 0.0
  %1202 = vmatpush1.msra.mxu0 0.0
  %1203 = vmatprep.subr.mxu0 0.0
  %1204 = vmatpush1.msra.mxu0 0.0
  %1205 = vmatprep.subr.mxu0 0.0
  %1206 = vmatpush1.msra.mxu0 0.0
  %1207 = vmatprep.subr.mxu0 %v1077
  %1208 = vmatpush1.msra.mxu0 %v1076
  %1209 = vmatprep.subr.mxu0 %v1075
  %1210 = vmatpush1.msra.mxu0 %v1074
  %1211 = vmatprep.subr.mxu0 %v1073
  %1212 = vmatpush1.msra.mxu0 %v1072
  %1213 = vmatprep.subr.mxu0 %v1071
  %1214 = vmatpush1.msra.mxu0 %v1070
  %1215 = vmatprep.subr.mxu0 0.0
  %1216 = vmatpush2.msra.mxu0 0.0
  %1217 = vmatprep.subr.mxu0 0.0
  %1218 = vmatpush2.msra.mxu0 0.0
  %1219 = vmatprep.subr.mxu0 0.0
  %1220 = vmatpush2.msra.mxu0 0.0
  %1221 = vmatprep.subr.mxu0 0.0
  %1222 = vmatpush2.msra.mxu0 0.0
  %1223 = vmatprep.subr.mxu0 0.0
  %1224 = vmatpush2.msra.mxu0 0.0
  %1225 = vmatprep.subr.mxu0 0.0
  %1226 = vmatpush2.msra.mxu0 0.0
  %1227 = vmatprep.subr.mxu0 0.0
  %1228 = vmatpush2.msra.mxu0 0.0
  %1229 = vmatprep.subr.mxu0 0.0
  %1230 = vmatpush2.msra.mxu0 0.0
  %1231 = vmatprep.subr.mxu0 0.0
  %1232 = vmatpush2.msra.mxu0 0.0
  %1233 = vmatprep.subr.mxu0 0.0
  %1234 = vmatpush2.msra.mxu0 0.0
  %1235 = vmatprep.subr.mxu0 0.0
  %1236 = vmatpush2.msra.mxu0 0.0
  %1237 = vmatprep.subr.mxu0 0.0
  %1238 = vmatpush2.msra.mxu0 0.0
  %1239 = vmatprep.subr.mxu0 0.0
  %1240 = vmatpush2.msra.mxu0 0.0
  %1241 = vmatprep.subr.mxu0 0.0
  %1242 = vmatpush2.msra.mxu0 0.0
  %1243 = vmatprep.subr.mxu0 0.0
  %1244 = vmatpush2.msra.mxu0 0.0
  %1245 = vmatprep.subr.mxu0 0.0
  %1246 = vmatpush2.msra.mxu0 0.0
  %1247 = vmatprep.mubr.f32.mxu0 0.0
  %1248 = vmatmul.mubr.f32.gmra.mxu0 %v1179
  %v1249 = vpop.f32.mrf.mxu0
  %v1250 = vadd.f32 %v1163, %v1249
  %v1251 = vpop.f32.mrf.mxu0
  %v1252 = vadd.f32 %v1165, %v1251
  %1253 = vmatprep.mubr.f32.mxu0 0.0
  %1254 = vmatmul.mubr.f32.gmra.mxu0 %v1181
  %v1255 = vpop.f32.mrf.mxu0
  %v1256 = vadd.f32 %v1169, %v1255
  %v1257 = vpop.f32.mrf.mxu0
  %v1258 = vadd.f32 %v1171, %v1257
  %1259 = vdwg.mxu0
  %v1260 = vlaneseq
  %v1261 = vshrl.u32 %v1260, 7
  %v1262 = vsub.s32 0, %v1261
  %v1263 = vrot.slane %v1068, %v1262
  %v1264 = vlaneseq
  %v1265 = vshrl.u32 %v1264, 7
  %v1266 = vsub.s32 0, %v1265
  %v1267 = vrot.slane %v1069, %v1266
  %v1268 = vadd.f32 %v1250, %v1263
  %v1269 = vadd.f32 %v1252, %v1267
  %v1270 = vadd.f32 %v1256, %v1263
  %v1271 = vadd.f32 %v1258, %v1267
  %v1273 = vrot.slane %v1271, 4
  %v1275 = vsel %vm61, %v1268, %v1273
  %1276 = vmatprep.subr.mxu0 0.0
  %1277 = vmatpush1.msra.mxu0 0.0
  %1278 = vmatprep.subr.mxu0 0.0
  %1279 = vmatpush1.msra.mxu0 0.0
  %1280 = vmatprep.subr.mxu0 0.0
  %1281 = vmatpush1.msra.mxu0 0.0
  %1282 = vmatprep.subr.mxu0 0.0
  %1283 = vmatpush1.msra.mxu0 0.0
  %1284 = vmatprep.subr.mxu0 0.0
  %1285 = vmatpush1.msra.mxu0 0.0
  %1286 = vmatprep.subr.mxu0 0.0
  %1287 = vmatpush1.msra.mxu0 0.0
  %1288 = vmatprep.subr.mxu0 0.0
  %1289 = vmatpush1.msra.mxu0 0.0
  %1290 = vmatprep.subr.mxu0 0.0
  %1291 = vmatpush1.msra.mxu0 0.0
  %1292 = vmatprep.subr.mxu0 0.0
  %1293 = vmatpush1.msra.mxu0 0.0
  %1294 = vmatprep.subr.mxu0 0.0
  %1295 = vmatpush1.msra.mxu0 0.0
  %1296 = vmatprep.subr.mxu0 0.0
  %1297 = vmatpush1.msra.mxu0 0.0
  %1298 = vmatprep.subr.mxu0 0.0
  %1299 = vmatpush1.msra.mxu0 0.0
  %1300 = vmatprep.subr.mxu0 %v1067
  %1301 = vmatpush1.msra.mxu0 %v1066
  %1302 = vmatprep.subr.mxu0 %v1065
  %1303 = vmatpush1.msra.mxu0 %v1064
  %1304 = vmatprep.subr.mxu0 %v1063
  %1305 = vmatpush1.msra.mxu0 %v1062
  %1306 = vmatprep.subr.mxu0 %v1061
  %1307 = vmatpush1.msra.mxu0 %v1060
  %1308 = vmatprep.subr.mxu0 0.0
  %1309 = vmatpush2.msra.mxu0 0.0
  %1310 = vmatprep.subr.mxu0 0.0
  %1311 = vmatpush2.msra.mxu0 0.0
  %1312 = vmatprep.subr.mxu0 0.0
  %1313 = vmatpush2.msra.mxu0 0.0
  %1314 = vmatprep.subr.mxu0 0.0
  %1315 = vmatpush2.msra.mxu0 0.0
  %1316 = vmatprep.subr.mxu0 0.0
  %1317 = vmatpush2.msra.mxu0 0.0
  %1318 = vmatprep.subr.mxu0 0.0
  %1319 = vmatpush2.msra.mxu0 0.0
  %1320 = vmatprep.subr.mxu0 0.0
  %1321 = vmatpush2.msra.mxu0 0.0
  %1322 = vmatprep.subr.mxu0 0.0
  %1323 = vmatpush2.msra.mxu0 0.0
  %1324 = vmatprep.subr.mxu0 0.0
  %1325 = vmatpush2.msra.mxu0 0.0
  %1326 = vmatprep.subr.mxu0 0.0
  %1327 = vmatpush2.msra.mxu0 0.0
  %1328 = vmatprep.subr.mxu0 0.0
  %1329 = vmatpush2.msra.mxu0 0.0
  %1330 = vmatprep.subr.mxu0 0.0
  %1331 = vmatpush2.msra.mxu0 0.0
  %1332 = vmatprep.subr.mxu0 0.0
  %1333 = vmatpush2.msra.mxu0 0.0
  %1334 = vmatprep.subr.mxu0 0.0
  %1335 = vmatpush2.msra.mxu0 0.0
  %1336 = vmatprep.subr.mxu0 0.0
  %1337 = vmatpush2.msra.mxu0 0.0
  %1338 = vmatprep.subr.mxu0 0.0
  %1339 = vmatpush2.msra.mxu0 0.0
  %1340 = vmatprep.mubr.f32.mxu0 0.0
  %1341 = vmatmul.mubr.f32.gmra.mxu0 %v185
  %v1342 = vpop.f32.mrf.mxu0
  %v1343 = vadd.f32 0.0, %v1342
  %v1344 = vpop.f32.mrf.mxu0
  %v1345 = vadd.f32 0.0, %v1344
  %1346 = vdwg.mxu0
  %v1347 = vsel %vm22, %v1343, %v1345
  %v1348 = vadd.f32 %v1275, %v1347
  %v1349 = vxor.u32 %v1348, 2147483648
  %v1350 = vmul.f32 %v1349, 1.442695
  %v1351 = vpow.pop %v1350
  %v1352 = vadd.f32 %v1351, 1.0
  %v1353 = vrcp.pop %v1352
  %v1354 = vmul.f32 1.0, %v1353
  %v1355 = vtanh.pop %v1348
  %v1356 = vmul.f32 %v1354, 0.0
  %1358 = vrot.lane.b32.xlu0 %v1355, 64
  %v1359 = vpop.permute.xlu0 %1358
  %v1361 = vmul.f32 %v1354, %v1359
  %1363 = vrot.lane.b32.xlu0 %v1361, 32
  %v1364 = vpop.permute.xlu0 %1363
  %v1366 = vadd.f32 %v1356, %v1364
  %v1367 = vtanh.pop %v1366
  %1369 = vrot.lane.b32.xlu0 %v1367, 64
  %v1370 = vpop.permute.xlu0 %1369
  %v1372 = vmul.f32 %v1354, %v1370
  %v1374 = vrot.slane %v1268, 2
  %v1376 = vrot.slane %v1271, 2
  %v1378 = vsel %vm61, %v1374, %v1376
  %1380 = vrot.lane.b32.xlu0 %v1372, 32
  %v1381 = vpop.permute.xlu0 %1380
  %v1382 = vsel %vm183, %v1381, 0
  %1384 = vmatprep.subr.mxu0 0.0
  %1385 = vmatpush1.msra.mxu0 0.0
  %1386 = vmatprep.subr.mxu0 0.0
  %1387 = vmatpush1.msra.mxu0 0.0
  %1388 = vmatprep.subr.mxu0 0.0
  %1389 = vmatpush1.msra.mxu0 0.0
  %1390 = vmatprep.subr.mxu0 0.0
  %1391 = vmatpush1.msra.mxu0 0.0
  %1392 = vmatprep.subr.mxu0 0.0
  %1393 = vmatpush1.msra.mxu0 0.0
  %1394 = vmatprep.subr.mxu0 0.0
  %1395 = vmatpush1.msra.mxu0 0.0
  %1396 = vmatprep.subr.mxu0 0.0
  %1397 = vmatpush1.msra.mxu0 0.0
  %1398 = vmatprep.subr.mxu0 0.0
  %1399 = vmatpush1.msra.mxu0 0.0
  %1400 = vmatprep.subr.mxu0 0.0
  %1401 = vmatpush1.msra.mxu0 0.0
  %1402 = vmatprep.subr.mxu0 0.0
  %1403 = vmatpush1.msra.mxu0 0.0
  %1404 = vmatprep.subr.mxu0 0.0
  %1405 = vmatpush1.msra.mxu0 0.0
  %1406 = vmatprep.subr.mxu0 0.0
  %1407 = vmatpush1.msra.mxu0 0.0
  %1408 = vmatprep.subr.mxu0 %v1067
  %1409 = vmatpush1.msra.mxu0 %v1066
  %1410 = vmatprep.subr.mxu0 %v1065
  %1411 = vmatpush1.msra.mxu0 %v1064
  %1412 = vmatprep.subr.mxu0 %v1063
  %1413 = vmatpush1.msra.mxu0 %v1062
  %1414 = vmatprep.subr.mxu0 %v1061
  %1415 = vmatpush1.msra.mxu0 %v1060
  %1416 = vmatprep.subr.mxu0 0.0
  %1417 = vmatpush2.msra.mxu0 0.0
  %1418 = vmatprep.subr.mxu0 0.0
  %1419 = vmatpush2.msra.mxu0 0.0
  %1420 = vmatprep.subr.mxu0 0.0
  %1421 = vmatpush2.msra.mxu0 0.0
  %1422 = vmatprep.subr.mxu0 0.0
  %1423 = vmatpush2.msra.mxu0 0.0
  %1424 = vmatprep.subr.mxu0 0.0
  %1425 = vmatpush2.msra.mxu0 0.0
  %1426 = vmatprep.subr.mxu0 0.0
  %1427 = vmatpush2.msra.mxu0 0.0
  %1428 = vmatprep.subr.mxu0 0.0
  %1429 = vmatpush2.msra.mxu0 0.0
  %1430 = vmatprep.subr.mxu0 0.0
  %1431 = vmatpush2.msra.mxu0 0.0
  %1432 = vmatprep.subr.mxu0 0.0
  %1433 = vmatpush2.msra.mxu0 0.0
  %1434 = vmatprep.subr.mxu0 0.0
  %1435 = vmatpush2.msra.mxu0 0.0
  %1436 = vmatprep.subr.mxu0 0.0
  %1437 = vmatpush2.msra.mxu0 0.0
  %1438 = vmatprep.subr.mxu0 0.0
  %1439 = vmatpush2.msra.mxu0 0.0
  %1440 = vmatprep.subr.mxu0 0.0
  %1441 = vmatpush2.msra.mxu0 0.0
  %1442 = vmatprep.subr.mxu0 0.0
  %1443 = vmatpush2.msra.mxu0 0.0
  %1444 = vmatprep.subr.mxu0 0.0
  %1445 = vmatpush2.msra.mxu0 0.0
  %1446 = vmatprep.subr.mxu0 0.0
  %1447 = vmatpush2.msra.mxu0 0.0
  %1448 = vmatprep.mubr.f32.mxu0 0.0
  %1449 = vmatmul.mubr.f32.gmra.mxu0 %v1382
  %v1450 = vpop.f32.mrf.mxu0
  %v1451 = vadd.f32 0.0, %v1450
  %v1452 = vpop.f32.mrf.mxu0
  %v1453 = vadd.f32 0.0, %v1452
  %1454 = vdwg.mxu0
  %v1455 = vsel %vm22, %v1451, %v1453
  %v1456 = vadd.f32 %v1378, %v1455
  %v1457 = vxor.u32 %v1456, 2147483648
  %v1458 = vmul.f32 %v1457, 1.442695
  %v1459 = vpow.pop %v1458
  %v1460 = vadd.f32 %v1459, 1.0
  %v1461 = vrcp.pop %v1460
  %v1462 = vmul.f32 1.0, %v1461
  %v1463 = vtanh.pop %v1456
  %v1464 = vmul.f32 %v1462, %v1366
  %1466 = vrot.lane.b32.xlu0 %v1463, 64
  %v1467 = vpop.permute.xlu0 %1466
  %v1469 = vmul.f32 %v1462, %v1467
  %1471 = vrot.lane.b32.xlu0 %v1469, 32
  %v1472 = vpop.permute.xlu0 %1471
  %v1474 = vadd.f32 %v1464, %v1472
  %v1475 = vtanh.pop %v1474
  %1477 = vrot.lane.b32.xlu0 %v1475, 64
  %v1478 = vpop.permute.xlu0 %1477
  %v1480 = vmul.f32 %v1462, %v1478
  %v1481 = vrot.slane %v1268, 4
  %v1483 = vsel %vm61, %v1481, %v1271
  %1485 = vrot.lane.b32.xlu0 %v1480, 32
  %v1486 = vpop.permute.xlu0 %1485
  %v1487 = vsel %vm183, %v1486, 0
  %1489 = vmatprep.subr.mxu0 0.0
  %1490 = vmatpush1.msra.mxu0 0.0
  %1491 = vmatprep.subr.mxu0 0.0
  %1492 = vmatpush1.msra.mxu0 0.0
  %1493 = vmatprep.subr.mxu0 0.0
  %1494 = vmatpush1.msra.mxu0 0.0
  %1495 = vmatprep.subr.mxu0 0.0
  %1496 = vmatpush1.msra.mxu0 0.0
  %1497 = vmatprep.subr.mxu0 0.0
  %1498 = vmatpush1.msra.mxu0 0.0
  %1499 = vmatprep.subr.mxu0 0.0
  %1500 = vmatpush1.msra.mxu0 0.0
  %1501 = vmatprep.subr.mxu0 0.0
  %1502 = vmatpush1.msra.mxu0 0.0
  %1503 = vmatprep.subr.mxu0 0.0
  %1504 = vmatpush1.msra.mxu0 0.0
  %1505 = vmatprep.subr.mxu0 0.0
  %1506 = vmatpush1.msra.mxu0 0.0
  %1507 = vmatprep.subr.mxu0 0.0
  %1508 = vmatpush1.msra.mxu0 0.0
  %1509 = vmatprep.subr.mxu0 0.0
  %1510 = vmatpush1.msra.mxu0 0.0
  %1511 = vmatprep.subr.mxu0 0.0
  %1512 = vmatpush1.msra.mxu0 0.0
  %1513 = vmatprep.subr.mxu0 %v1067
  %1514 = vmatpush1.msra.mxu0 %v1066
  %1515 = vmatprep.subr.mxu0 %v1065
  %1516 = vmatpush1.msra.mxu0 %v1064
  %1517 = vmatprep.subr.mxu0 %v1063
  %1518 = vmatpush1.msra.mxu0 %v1062
  %1519 = vmatprep.subr.mxu0 %v1061
  %1520 = vmatpush1.msra.mxu0 %v1060
  %1521 = vmatprep.subr.mxu0 0.0
  %1522 = vmatpush2.msra.mxu0 0.0
  %1523 = vmatprep.subr.mxu0 0.0
  %1524 = vmatpush2.msra.mxu0 0.0
  %1525 = vmatprep.subr.mxu0 0.0
  %1526 = vmatpush2.msra.mxu0 0.0
  %1527 = vmatprep.subr.mxu0 0.0
  %1528 = vmatpush2.msra.mxu0 0.0
  %1529 = vmatprep.subr.mxu0 0.0
  %1530 = vmatpush2.msra.mxu0 0.0
  %1531 = vmatprep.subr.mxu0 0.0
  %1532 = vmatpush2.msra.mxu0 0.0
  %1533 = vmatprep.subr.mxu0 0.0
  %1534 = vmatpush2.msra.mxu0 0.0
  %1535 = vmatprep.subr.mxu0 0.0
  %1536 = vmatpush2.msra.mxu0 0.0
  %1537 = vmatprep.subr.mxu0 0.0
  %1538 = vmatpush2.msra.mxu0 0.0
  %1539 = vmatprep.subr.mxu0 0.0
  %1540 = vmatpush2.msra.mxu0 0.0
  %1541 = vmatprep.subr.mxu0 0.0
  %1542 = vmatpush2.msra.mxu0 0.0
  %1543 = vmatprep.subr.mxu0 0.0
  %1544 = vmatpush2.msra.mxu0 0.0
  %1545 = vmatprep.subr.mxu0 0.0
  %1546 = vmatpush2.msra.mxu0 0.0
  %1547 = vmatprep.subr.mxu0 0.0
  %1548 = vmatpush2.msra.mxu0 0.0
  %1549 = vmatprep.subr.mxu0 0.0
  %1550 = vmatpush2.msra.mxu0 0.0
  %1551 = vmatprep.subr.mxu0 0.0
  %1552 = vmatpush2.msra.mxu0 0.0
  %1553 = vmatprep.mubr.f32.mxu0 0.0
  %1554 = vmatmul.mubr.f32.gmra.mxu0 %v1487
  %v1555 = vpop.f32.mrf.mxu0
  %v1556 = vadd.f32 0.0, %v1555
  %v1557 = vpop.f32.mrf.mxu0
  %v1558 = vadd.f32 0.0, %v1557
  %1559 = vdwg.mxu0
  %v1560 = vsel %vm22, %v1556, %v1558
  %v1561 = vadd.f32 %v1483, %v1560
  %v1562 = vxor.u32 %v1561, 2147483648
  %v1563 = vmul.f32 %v1562, 1.442695
  %v1564 = vpow.pop %v1563
  %v1565 = vadd.f32 %v1564, 1.0
  %v1566 = vrcp.pop %v1565
  %v1567 = vmul.f32 1.0, %v1566
  %v1568 = vtanh.pop %v1561
  %v1569 = vmul.f32 %v1567, %v1474
  %1571 = vrot.lane.b32.xlu0 %v1568, 64
  %v1572 = vpop.permute.xlu0 %1571
  %v1574 = vmul.f32 %v1567, %v1572
  %1576 = vrot.lane.b32.xlu0 %v1574, 32
  %v1577 = vpop.permute.xlu0 %1576
  %v1579 = vadd.f32 %v1569, %v1577
  %v1580 = vtanh.pop %v1579
  %1582 = vrot.lane.b32.xlu0 %v1580, 64
  %v1583 = vpop.permute.xlu0 %1582
  %v1585 = vmul.f32 %v1567, %v1583
  %v1586 = vrot.slane %v1268, 6
  %v1588 = vrot.slane %v1271, 6
  %v1590 = vsel %vm61, %v1586, %v1588
  %1592 = vrot.lane.b32.xlu0 %v1585, 32
  %v1593 = vpop.permute.xlu0 %1592
  %v1594 = vsel %vm183, %v1593, 0
  %1596 = vmatprep.subr.mxu0 0.0
  %1597 = vmatpush1.msra.mxu0 0.0
  %1598 = vmatprep.subr.mxu0 0.0
  %1599 = vmatpush1.msra.mxu0 0.0
  %1600 = vmatprep.subr.mxu0 0.0
  %1601 = vmatpush1.msra.mxu0 0.0
  %1602 = vmatprep.subr.mxu0 0.0
  %1603 = vmatpush1.msra.mxu0 0.0
  %1604 = vmatprep.subr.mxu0 0.0
  %1605 = vmatpush1.msra.mxu0 0.0
  %1606 = vmatprep.subr.mxu0 0.0
  %1607 = vmatpush1.msra.mxu0 0.0
  %1608 = vmatprep.subr.mxu0 0.0
  %1609 = vmatpush1.msra.mxu0 0.0
  %1610 = vmatprep.subr.mxu0 0.0
  %1611 = vmatpush1.msra.mxu0 0.0
  %1612 = vmatprep.subr.mxu0 0.0
  %1613 = vmatpush1.msra.mxu0 0.0
  %1614 = vmatprep.subr.mxu0 0.0
  %1615 = vmatpush1.msra.mxu0 0.0
  %1616 = vmatprep.subr.mxu0 0.0
  %1617 = vmatpush1.msra.mxu0 0.0
  %1618 = vmatprep.subr.mxu0 0.0
  %1619 = vmatpush1.msra.mxu0 0.0
  %1620 = vmatprep.subr.mxu0 %v1067
  %1621 = vmatpush1.msra.mxu0 %v1066
  %1622 = vmatprep.subr.mxu0 %v1065
  %1623 = vmatpush1.msra.mxu0 %v1064
  %1624 = vmatprep.subr.mxu0 %v1063
  %1625 = vmatpush1.msra.mxu0 %v1062
  %1626 = vmatprep.subr.mxu0 %v1061
  %1627 = vmatpush1.msra.mxu0 %v1060
  %1628 = vmatprep.subr.mxu0 0.0
  %1629 = vmatpush2.msra.mxu0 0.0
  %1630 = vmatprep.subr.mxu0 0.0
  %1631 = vmatpush2.msra.mxu0 0.0
  %1632 = vmatprep.subr.mxu0 0.0
  %1633 = vmatpush2.msra.mxu0 0.0
  %1634 = vmatprep.subr.mxu0 0.0
  %1635 = vmatpush2.msra.mxu0 0.0
  %1636 = vmatprep.subr.mxu0 0.0
  %1637 = vmatpush2.msra.mxu0 0.0
  %1638 = vmatprep.subr.mxu0 0.0
  %1639 = vmatpush2.msra.mxu0 0.0
  %1640 = vmatprep.subr.mxu0 0.0
  %1641 = vmatpush2.msra.mxu0 0.0
  %1642 = vmatprep.subr.mxu0 0.0
  %1643 = vmatpush2.msra.mxu0 0.0
  %1644 = vmatprep.subr.mxu0 0.0
  %1645 = vmatpush2.msra.mxu0 0.0
  %1646 = vmatprep.subr.mxu0 0.0
  %1647 = vmatpush2.msra.mxu0 0.0
  %1648 = vmatprep.subr.mxu0 0.0
  %1649 = vmatpush2.msra.mxu0 0.0
  %1650 = vmatprep.subr.mxu0 0.0
  %1651 = vmatpush2.msra.mxu0 0.0
  %1652 = vmatprep.subr.mxu0 0.0
  %1653 = vmatpush2.msra.mxu0 0.0
  %1654 = vmatprep.subr.mxu0 0.0
  %1655 = vmatpush2.msra.mxu0 0.0
  %1656 = vmatprep.subr.mxu0 0.0
  %1657 = vmatpush2.msra.mxu0 0.0
  %1658 = vmatprep.subr.mxu0 0.0
  %1659 = vmatpush2.msra.mxu0 0.0
  %1660 = vmatprep.mubr.f32.mxu0 0.0
  %1661 = vmatmul.mubr.f32.gmra.mxu0 %v1594
  %v1662 = vpop.f32.mrf.mxu0
  %v1663 = vadd.f32 0.0, %v1662
  %v1664 = vpop.f32.mrf.mxu0
  %v1665 = vadd.f32 0.0, %v1664
  %1666 = vdwg.mxu0
  %v1667 = vsel %vm22, %v1663, %v1665
  %v1668 = vadd.f32 %v1590, %v1667
  %v1669 = vxor.u32 %v1668, 2147483648
  %v1670 = vmul.f32 %v1669, 1.442695
  %v1671 = vpow.pop %v1670
  %v1672 = vadd.f32 %v1671, 1.0
  %v1673 = vrcp.pop %v1672
  %v1674 = vmul.f32 1.0, %v1673
  %v1675 = vtanh.pop %v1668
  %v1676 = vmul.f32 %v1674, %v1579
  %1678 = vrot.lane.b32.xlu0 %v1675, 64
  %v1679 = vpop.permute.xlu0 %1678
  %v1681 = vmul.f32 %v1674, %v1679
  %1683 = vrot.lane.b32.xlu0 %v1681, 32
  %v1684 = vpop.permute.xlu0 %1683
  %v1686 = vadd.f32 %v1676, %v1684
  %v1687 = vtanh.pop %v1686
  %1689 = vrot.lane.b32.xlu0 %v1687, 64
  %v1690 = vpop.permute.xlu0 %1689
  %v1692 = vmul.f32 %v1674, %v1690
  %v1694 = vrot.slane %v1269, 4
  %v1696 = vsel %vm61, %v1270, %v1694
  %1698 = vrot.lane.b32.xlu0 %v1692, 32
  %v1699 = vpop.permute.xlu0 %1698
  %v1700 = vsel %vm183, %v1699, 0
  %1702 = vmatprep.subr.mxu0 0.0
  %1703 = vmatpush1.msra.mxu0 0.0
  %1704 = vmatprep.subr.mxu0 0.0
  %1705 = vmatpush1.msra.mxu0 0.0
  %1706 = vmatprep.subr.mxu0 0.0
  %1707 = vmatpush1.msra.mxu0 0.0
  %1708 = vmatprep.subr.mxu0 0.0
  %1709 = vmatpush1.msra.mxu0 0.0
  %1710 = vmatprep.subr.mxu0 0.0
  %1711 = vmatpush1.msra.mxu0 0.0
  %1712 = vmatprep.subr.mxu0 0.0
  %1713 = vmatpush1.msra.mxu0 0.0
  %1714 = vmatprep.subr.mxu0 0.0
  %1715 = vmatpush1.msra.mxu0 0.0
  %1716 = vmatprep.subr.mxu0 0.0
  %1717 = vmatpush1.msra.mxu0 0.0
  %1718 = vmatprep.subr.mxu0 0.0
  %1719 = vmatpush1.msra.mxu0 0.0
  %1720 = vmatprep.subr.mxu0 0.0
  %1721 = vmatpush1.msra.mxu0 0.0
  %1722 = vmatprep.subr.mxu0 0.0
  %1723 = vmatpush1.msra.mxu0 0.0
  %1724 = vmatprep.subr.mxu0 0.0
  %1725 = vmatpush1.msra.mxu0 0.0
  %1726 = vmatprep.subr.mxu0 %v1067
  %1727 = vmatpush1.msra.mxu0 %v1066
  %1728 = vmatprep.subr.mxu0 %v1065
  %1729 = vmatpush1.msra.mxu0 %v1064
  %1730 = vmatprep.subr.mxu0 %v1063
  %1731 = vmatpush1.msra.mxu0 %v1062
  %1732 = vmatprep.subr.mxu0 %v1061
  %1733 = vmatpush1.msra.mxu0 %v1060
  %1734 = vmatprep.subr.mxu0 0.0
  %1735 = vmatpush2.msra.mxu0 0.0
  %1736 = vmatprep.subr.mxu0 0.0
  %1737 = vmatpush2.msra.mxu0 0.0
  %1738 = vmatprep.subr.mxu0 0.0
  %1739 = vmatpush2.msra.mxu0 0.0
  %1740 = vmatprep.subr.mxu0 0.0
  %1741 = vmatpush2.msra.mxu0 0.0
  %1742 = vmatprep.subr.mxu0 0.0
  %1743 = vmatpush2.msra.mxu0 0.0
  %1744 = vmatprep.subr.mxu0 0.0
  %1745 = vmatpush2.msra.mxu0 0.0
  %1746 = vmatprep.subr.mxu0 0.0
  %1747 = vmatpush2.msra.mxu0 0.0
  %1748 = vmatprep.subr.mxu0 0.0
  %1749 = vmatpush2.msra.mxu0 0.0
  %1750 = vmatprep.subr.mxu0 0.0
  %1751 = vmatpush2.msra.mxu0 0.0
  %1752 = vmatprep.subr.mxu0 0.0
  %1753 = vmatpush2.msra.mxu0 0.0
  %1754 = vmatprep.subr.mxu0 0.0
  %1755 = vmatpush2.msra.mxu0 0.0
  %1756 = vmatprep.subr.mxu0 0.0
  %1757 = vmatpush2.msra.mxu0 0.0
  %1758 = vmatprep.subr.mxu0 0.0
  %1759 = vmatpush2.msra.mxu0 0.0
  %1760 = vmatprep.subr.mxu0 0.0
  %1761 = vmatpush2.msra.mxu0 0.0
  %1762 = vmatprep.subr.mxu0 0.0
  %1763 = vmatpush2.msra.mxu0 0.0
  %1764 = vmatprep.subr.mxu0 0.0
  %1765 = vmatpush2.msra.mxu0 0.0
  %1766 = vmatprep.mubr.f32.mxu0 0.0
  %1767 = vmatmul.mubr.f32.gmra.mxu0 %v1700
  %v1768 = vpop.f32.mrf.mxu0
  %v1769 = vadd.f32 0.0, %v1768
  %v1770 = vpop.f32.mrf.mxu0
  %v1771 = vadd.f32 0.0, %v1770
  %1772 = vdwg.mxu0
  %v1773 = vsel %vm22, %v1769, %v1771
  %v1774 = vadd.f32 %v1696, %v1773
  %v1775 = vxor.u32 %v1774, 2147483648
  %v1776 = vmul.f32 %v1775, 1.442695
  %v1777 = vpow.pop %v1776
  %v1778 = vadd.f32 %v1777, 1.0
  %v1779 = vrcp.pop %v1778
  %v1780 = vmul.f32 1.0, %v1779
  %v1781 = vtanh.pop %v1774
  %v1782 = vmul.f32 %v1780, %v1686
  %1784 = vrot.lane.b32.xlu0 %v1781, 64
  %v1785 = vpop.permute.xlu0 %1784
  %v1787 = vmul.f32 %v1780, %v1785
  %1789 = vrot.lane.b32.xlu0 %v1787, 32
  %v1790 = vpop.permute.xlu0 %1789
  %v1792 = vadd.f32 %v1782, %v1790
  %v1793 = vtanh.pop %v1792
  %1795 = vrot.lane.b32.xlu0 %v1793, 64
  %v1796 = vpop.permute.xlu0 %1795
  %v1798 = vmul.f32 %v1780, %v1796
  %v1800 = vrot.slane %v1270, 2
  %v1802 = vrot.slane %v1269, 2
  %v1804 = vsel %vm61, %v1800, %v1802
  %1806 = vrot.lane.b32.xlu0 %v1798, 32
  %v1807 = vpop.permute.xlu0 %1806
  %v1808 = vsel %vm183, %v1807, 0
  %1810 = vmatprep.subr.mxu0 0.0
  %1811 = vmatpush1.msra.mxu0 0.0
  %1812 = vmatprep.subr.mxu0 0.0
  %1813 = vmatpush1.msra.mxu0 0.0
  %1814 = vmatprep.subr.mxu0 0.0
  %1815 = vmatpush1.msra.mxu0 0.0
  %1816 = vmatprep.subr.mxu0 0.0
  %1817 = vmatpush1.msra.mxu0 0.0
  %1818 = vmatprep.subr.mxu0 0.0
  %1819 = vmatpush1.msra.mxu0 0.0
  %1820 = vmatprep.subr.mxu0 0.0
  %1821 = vmatpush1.msra.mxu0 0.0
  %1822 = vmatprep.subr.mxu0 0.0
  %1823 = vmatpush1.msra.mxu0 0.0
  %1824 = vmatprep.subr.mxu0 0.0
  %1825 = vmatpush1.msra.mxu0 0.0
  %1826 = vmatprep.subr.mxu0 0.0
  %1827 = vmatpush1.msra.mxu0 0.0
  %1828 = vmatprep.subr.mxu0 0.0
  %1829 = vmatpush1.msra.mxu0 0.0
  %1830 = vmatprep.subr.mxu0 0.0
  %1831 = vmatpush1.msra.mxu0 0.0
  %1832 = vmatprep.subr.mxu0 0.0
  %1833 = vmatpush1.msra.mxu0 0.0
  %1834 = vmatprep.subr.mxu0 %v1067
  %1835 = vmatpush1.msra.mxu0 %v1066
  %1836 = vmatprep.subr.mxu0 %v1065
  %1837 = vmatpush1.msra.mxu0 %v1064
  %1838 = vmatprep.subr.mxu0 %v1063
  %1839 = vmatpush1.msra.mxu0 %v1062
  %1840 = vmatprep.subr.mxu0 %v1061
  %1841 = vmatpush1.msra.mxu0 %v1060
  %1842 = vmatprep.subr.mxu0 0.0
  %1843 = vmatpush2.msra.mxu0 0.0
  %1844 = vmatprep.subr.mxu0 0.0
  %1845 = vmatpush2.msra.mxu0 0.0
  %1846 = vmatprep.subr.mxu0 0.0
  %1847 = vmatpush2.msra.mxu0 0.0
  %1848 = vmatprep.subr.mxu0 0.0
  %1849 = vmatpush2.msra.mxu0 0.0
  %1850 = vmatprep.subr.mxu0 0.0
  %1851 = vmatpush2.msra.mxu0 0.0
  %1852 = vmatprep.subr.mxu0 0.0
  %1853 = vmatpush2.msra.mxu0 0.0
  %1854 = vmatprep.subr.mxu0 0.0
  %1855 = vmatpush2.msra.mxu0 0.0
  %1856 = vmatprep.subr.mxu0 0.0
  %1857 = vmatpush2.msra.mxu0 0.0
  %1858 = vmatprep.subr.mxu0 0.0
  %1859 = vmatpush2.msra.mxu0 0.0
  %1860 = vmatprep.subr.mxu0 0.0
  %1861 = vmatpush2.msra.mxu0 0.0
  %1862 = vmatprep.subr.mxu0 0.0
  %1863 = vmatpush2.msra.mxu0 0.0
  %1864 = vmatprep.subr.mxu0 0.0
  %1865 = vmatpush2.msra.mxu0 0.0
  %1866 = vmatprep.subr.mxu0 0.0
  %1867 = vmatpush2.msra.mxu0 0.0
  %1868 = vmatprep.subr.mxu0 0.0
  %1869 = vmatpush2.msra.mxu0 0.0
  %1870 = vmatprep.subr.mxu0 0.0
  %1871 = vmatpush2.msra.mxu0 0.0
  %1872 = vmatprep.subr.mxu0 0.0
  %1873 = vmatpush2.msra.mxu0 0.0
  %1874 = vmatprep.mubr.f32.mxu0 0.0
  %1875 = vmatmul.mubr.f32.gmra.mxu0 %v1808
  %v1876 = vpop.f32.mrf.mxu0
  %v1877 = vadd.f32 0.0, %v1876
  %v1878 = vpop.f32.mrf.mxu0
  %v1879 = vadd.f32 0.0, %v1878
  %1880 = vdwg.mxu0
  %v1881 = vsel %vm22, %v1877, %v1879
  %v1882 = vadd.f32 %v1804, %v1881
  %v1883 = vxor.u32 %v1882, 2147483648
  %v1884 = vmul.f32 %v1883, 1.442695
  %v1885 = vpow.pop %v1884
  %v1886 = vadd.f32 %v1885, 1.0
  %v1887 = vrcp.pop %v1886
  %v1888 = vmul.f32 1.0, %v1887
  %v1889 = vtanh.pop %v1882
  %v1890 = vmul.f32 %v1888, %v1792
  %1892 = vrot.lane.b32.xlu0 %v1889, 64
  %v1893 = vpop.permute.xlu0 %1892
  %v1895 = vmul.f32 %v1888, %v1893
  %1897 = vrot.lane.b32.xlu0 %v1895, 32
  %v1898 = vpop.permute.xlu0 %1897
  %v1900 = vadd.f32 %v1890, %v1898
  %v1901 = vtanh.pop %v1900
  %1903 = vrot.lane.b32.xlu0 %v1901, 64
  %v1904 = vpop.permute.xlu0 %1903
  %v1906 = vmul.f32 %v1888, %v1904
  %v1907 = vrot.slane %v1270, 4
  %v1909 = vsel %vm61, %v1907, %v1269
  %1911 = vrot.lane.b32.xlu0 %v1906, 32
  %v1912 = vpop.permute.xlu0 %1911
  %v1913 = vsel %vm183, %v1912, 0
  %1915 = vmatprep.subr.mxu0 0.0
  %1916 = vmatpush1.msra.mxu0 0.0
  %1917 = vmatprep.subr.mxu0 0.0
  %1918 = vmatpush1.msra.mxu0 0.0
  %1919 = vmatprep.subr.mxu0 0.0
  %1920 = vmatpush1.msra.mxu0 0.0
  %1921 = vmatprep.subr.mxu0 0.0
  %1922 = vmatpush1.msra.mxu0 0.0
  %1923 = vmatprep.subr.mxu0 0.0
  %1924 = vmatpush1.msra.mxu0 0.0
  %1925 = vmatprep.subr.mxu0 0.0
  %1926 = vmatpush1.msra.mxu0 0.0
  %1927 = vmatprep.subr.mxu0 0.0
  %1928 = vmatpush1.msra.mxu0 0.0
  %1929 = vmatprep.subr.mxu0 0.0
  %1930 = vmatpush1.msra.mxu0 0.0
  %1931 = vmatprep.subr.mxu0 0.0
  %1932 = vmatpush1.msra.mxu0 0.0
  %1933 = vmatprep.subr.mxu0 0.0
  %1934 = vmatpush1.msra.mxu0 0.0
  %1935 = vmatprep.subr.mxu0 0.0
  %1936 = vmatpush1.msra.mxu0 0.0
  %1937 = vmatprep.subr.mxu0 0.0
  %1938 = vmatpush1.msra.mxu0 0.0
  %1939 = vmatprep.subr.mxu0 %v1067
  %1940 = vmatpush1.msra.mxu0 %v1066
  %1941 = vmatprep.subr.mxu0 %v1065
  %1942 = vmatpush1.msra.mxu0 %v1064
  %1943 = vmatprep.subr.mxu0 %v1063
  %1944 = vmatpush1.msra.mxu0 %v1062
  %1945 = vmatprep.subr.mxu0 %v1061
  %1946 = vmatpush1.msra.mxu0 %v1060
  %1947 = vmatprep.subr.mxu0 0.0
  %1948 = vmatpush2.msra.mxu0 0.0
  %1949 = vmatprep.subr.mxu0 0.0
  %1950 = vmatpush2.msra.mxu0 0.0
  %1951 = vmatprep.subr.mxu0 0.0
  %1952 = vmatpush2.msra.mxu0 0.0
  %1953 = vmatprep.subr.mxu0 0.0
  %1954 = vmatpush2.msra.mxu0 0.0
  %1955 = vmatprep.subr.mxu0 0.0
  %1956 = vmatpush2.msra.mxu0 0.0
  %1957 = vmatprep.subr.mxu0 0.0
  %1958 = vmatpush2.msra.mxu0 0.0
  %1959 = vmatprep.subr.mxu0 0.0
  %1960 = vmatpush2.msra.mxu0 0.0
  %1961 = vmatprep.subr.mxu0 0.0
  %1962 = vmatpush2.msra.mxu0 0.0
  %1963 = vmatprep.subr.mxu0 0.0
  %1964 = vmatpush2.msra.mxu0 0.0
  %1965 = vmatprep.subr.mxu0 0.0
  %1966 = vmatpush2.msra.mxu0 0.0
  %1967 = vmatprep.subr.mxu0 0.0
  %1968 = vmatpush2.msra.mxu0 0.0
  %1969 = vmatprep.subr.mxu0 0.0
  %1970 = vmatpush2.msra.mxu0 0.0
  %1971 = vmatprep.subr.mxu0 0.0
  %1972 = vmatpush2.msra.mxu0 0.0
  %1973 = vmatprep.subr.mxu0 0.0
  %1974 = vmatpush2.msra.mxu0 0.0
  %1975 = vmatprep.subr.mxu0 0.0
  %1976 = vmatpush2.msra.mxu0 0.0
  %1977 = vmatprep.subr.mxu0 0.0
  %1978 = vmatpush2.msra.mxu0 0.0
  %1979 = vmatprep.mubr.f32.mxu0 0.0
  %1980 = vmatmul.mubr.f32.gmra.mxu0 %v1913
  %v1981 = vpop.f32.mrf.mxu0
  %v1982 = vadd.f32 0.0, %v1981
  %v1983 = vpop.f32.mrf.mxu0
  %v1984 = vadd.f32 0.0, %v1983
  %1985 = vdwg.mxu0
  %v1986 = vsel %vm22, %v1982, %v1984
  %v1987 = vadd.f32 %v1909, %v1986
  %v1988 = vxor.u32 %v1987, 2147483648
  %v1989 = vmul.f32 %v1988, 1.442695
  %v1990 = vpow.pop %v1989
  %v1991 = vadd.f32 %v1990, 1.0
  %v1992 = vrcp.pop %v1991
  %v1993 = vmul.f32 1.0, %v1992
  %v1994 = vtanh.pop %v1987
  %v1995 = vmul.f32 %v1993, %v1900
  %1997 = vrot.lane.b32.xlu0 %v1994, 64
  %v1998 = vpop.permute.xlu0 %1997
  %v2000 = vmul.f32 %v1993, %v1998
  %2002 = vrot.lane.b32.xlu0 %v2000, 32
  %v2003 = vpop.permute.xlu0 %2002
  %v2005 = vadd.f32 %v1995, %v2003
  %v2006 = vtanh.pop %v2005
  %2008 = vrot.lane.b32.xlu0 %v2006, 64
  %v2009 = vpop.permute.xlu0 %2008
  %v2011 = vmul.f32 %v1993, %v2009
  %v2012 = vrot.slane %v1270, 6
  %v2014 = vrot.slane %v1269, 6
  %v2016 = vsel %vm61, %v2012, %v2014
  %2018 = vrot.lane.b32.xlu0 %v2011, 32
  %v2019 = vpop.permute.xlu0 %2018
  %v2020 = vsel %vm183, %v2019, 0
  %2022 = vmatprep.subr.mxu0 0.0
  %2023 = vmatpush1.msra.mxu0 0.0
  %2024 = vmatprep.subr.mxu0 0.0
  %2025 = vmatpush1.msra.mxu0 0.0
  %2026 = vmatprep.subr.mxu0 0.0
  %2027 = vmatpush1.msra.mxu0 0.0
  %2028 = vmatprep.subr.mxu0 0.0
  %2029 = vmatpush1.msra.mxu0 0.0
  %2030 = vmatprep.subr.mxu0 0.0
  %2031 = vmatpush1.msra.mxu0 0.0
  %2032 = vmatprep.subr.mxu0 0.0
  %2033 = vmatpush1.msra.mxu0 0.0
  %2034 = vmatprep.subr.mxu0 0.0
  %2035 = vmatpush1.msra.mxu0 0.0
  %2036 = vmatprep.subr.mxu0 0.0
  %2037 = vmatpush1.msra.mxu0 0.0
  %2038 = vmatprep.subr.mxu0 0.0
  %2039 = vmatpush1.msra.mxu0 0.0
  %2040 = vmatprep.subr.mxu0 0.0
  %2041 = vmatpush1.msra.mxu0 0.0
  %2042 = vmatprep.subr.mxu0 0.0
  %2043 = vmatpush1.msra.mxu0 0.0
  %2044 = vmatprep.subr.mxu0 0.0
  %2045 = vmatpush1.msra.mxu0 0.0
  %2046 = vmatprep.subr.mxu0 %v1067
  %2047 = vmatpush1.msra.mxu0 %v1066
  %2048 = vmatprep.subr.mxu0 %v1065
  %2049 = vmatpush1.msra.mxu0 %v1064
  %2050 = vmatprep.subr.mxu0 %v1063
  %2051 = vmatpush1.msra.mxu0 %v1062
  %2052 = vmatprep.subr.mxu0 %v1061
  %2053 = vmatpush1.msra.mxu0 %v1060
  %2054 = vmatprep.subr.mxu0 0.0
  %2055 = vmatpush2.msra.mxu0 0.0
  %2056 = vmatprep.subr.mxu0 0.0
  %2057 = vmatpush2.msra.mxu0 0.0
  %2058 = vmatprep.subr.mxu0 0.0
  %2059 = vmatpush2.msra.mxu0 0.0
  %2060 = vmatprep.subr.mxu0 0.0
  %2061 = vmatpush2.msra.mxu0 0.0
  %2062 = vmatprep.subr.mxu0 0.0
  %2063 = vmatpush2.msra.mxu0 0.0
  %2064 = vmatprep.subr.mxu0 0.0
  %2065 = vmatpush2.msra.mxu0 0.0
  %2066 = vmatprep.subr.mxu0 0.0
  %2067 = vmatpush2.msra.mxu0 0.0
  %2068 = vmatprep.subr.mxu0 0.0
  %2069 = vmatpush2.msra.mxu0 0.0
  %2070 = vmatprep.subr.mxu0 0.0
  %2071 = vmatpush2.msra.mxu0 0.0
  %2072 = vmatprep.subr.mxu0 0.0
  %2073 = vmatpush2.msra.mxu0 0.0
  %2074 = vmatprep.subr.mxu0 0.0
  %2075 = vmatpush2.msra.mxu0 0.0
  %2076 = vmatprep.subr.mxu0 0.0
  %2077 = vmatpush2.msra.mxu0 0.0
  %2078 = vmatprep.subr.mxu0 0.0
  %2079 = vmatpush2.msra.mxu0 0.0
  %2080 = vmatprep.subr.mxu0 0.0
  %2081 = vmatpush2.msra.mxu0 0.0
  %2082 = vmatprep.subr.mxu0 0.0
  %2083 = vmatpush2.msra.mxu0 0.0
  %2084 = vmatprep.subr.mxu0 0.0
  %2085 = vmatpush2.msra.mxu0 0.0
  %2086 = vmatprep.mubr.f32.mxu0 0.0
  %2087 = vmatmul.mubr.f32.gmra.mxu0 %v2020
  %v2088 = vpop.f32.mrf.mxu0
  %v2089 = vadd.f32 0.0, %v2088
  %v2090 = vpop.f32.mrf.mxu0
  %v2091 = vadd.f32 0.0, %v2090
  %2092 = vdwg.mxu0
  %v2093 = vsel %vm22, %v2089, %v2091
  %v2094 = vadd.f32 %v2016, %v2093
  %v2095 = vxor.u32 %v2094, 2147483648
  %v2096 = vmul.f32 %v2095, 1.442695
  %v2097 = vpow.pop %v2096
  %v2098 = vadd.f32 %v2097, 1.0
  %v2099 = vrcp.pop %v2098
  %v2100 = vmul.f32 1.0, %v2099
  %v2101 = vtanh.pop %v2094
  %v2102 = vmul.f32 %v2100, %v2005
  %2104 = vrot.lane.b32.xlu0 %v2101, 64
  %v2105 = vpop.permute.xlu0 %2104
  %v2107 = vmul.f32 %v2100, %v2105
  %2109 = vrot.lane.b32.xlu0 %v2107, 32
  %v2110 = vpop.permute.xlu0 %2109
  %v2112 = vadd.f32 %v2102, %v2110
  %v2113 = vtanh.pop %v2112
  %2115 = vrot.lane.b32.xlu0 %v2113, 64
  %v2116 = vpop.permute.xlu0 %2115
  %v2118 = vmul.f32 %v2100, %v2116
  %v2119 = vld [vmem:[%s4] sm:$0xff]
  %v2120 = vld [vmem:[%s4 + $0x8] sm:$0xff]
  %v2121 = vld [vmem:[%s4 + $0x10] sm:$0xff]
  %v2122 = vld [vmem:[%s4 + $0x18] sm:$0xff]
  %v2123 = vld [vmem:[%s4 + $0x20] sm:$0xff]
  %v2124 = vld [vmem:[%s4 + $0x28] sm:$0xff]
  %v2125 = vld [vmem:[%s4 + $0x30] sm:$0xff]
  %v2126 = vld [vmem:[%s4 + $0x38] sm:$0xff]
  %v2127 = vld [vmem:[%s4 + $0x40] sm:$0x1]
  %v2128 = vrot.slane %v1480, 6
  %v2130 = vrot.slane %v1585, 4
  %v2132 = vrot.slane %v1692, 2
  %v2134 = vrot.slane %v1906, 6
  %v2136 = vrot.slane %v2011, 4
  %v2139 = vrot.slane %v2118, 2
  %v2141 = vsel %vm61, %v1372, %v2128
  %v2142 = vsel %vm63, %v2141, %v2130
  %v2143 = vsel %vm65, %v2142, %v2132
  %v2144 = vsel %vm61, %v1798, %v2134
  %v2145 = vsel %vm63, %v2144, %v2136
  %v2146 = vsel %vm65, %v2145, %v2139
  %v2147 = vrot.slane %v1798, 4
  %v2149 = vrot.slane %v1372, 4
  %v2151 = vsel %vm61, %v2139, %v2011
  %v2152 = vsel %vm63, %v2151, %v2134
  %v2153 = vsel %vm65, %v2152, %v2147
  %v2154 = vsel %vm61, %v2132, %v1585
  %v2155 = vsel %vm63, %v2154, %v2128
  %v2156 = vsel %vm65, %v2155, %v2149
  %2159 = vrot.lane.b32.xlu0 %v2153, 32
  %v2160 = vpop.permute.xlu0 %2159
  %2161 = vrot.lane.b32.xlu0 %v2156, 32
  %v2162 = vpop.permute.xlu0 %2161
  %v2163 = vsel %vm183, %v2160, 0
  %v2165 = vsel %vm183, %v2162, 0
  %2167 = vmatprep.subr.mxu0 0.0
  %2168 = vmatpush1.msra.mxu0 0.0
  %2169 = vmatprep.subr.mxu0 0.0
  %2170 = vmatpush1.msra.mxu0 0.0
  %2171 = vmatprep.subr.mxu0 0.0
  %2172 = vmatpush1.msra.mxu0 0.0
  %2173 = vmatprep.subr.mxu0 0.0
  %2174 = vmatpush1.msra.mxu0 0.0
  %2175 = vmatprep.subr.mxu0 0.0
  %2176 = vmatpush1.msra.mxu0 0.0
  %2177 = vmatprep.subr.mxu0 0.0
  %2178 = vmatpush1.msra.mxu0 0.0
  %2179 = vmatprep.subr.mxu0 0.0
  %2180 = vmatpush1.msra.mxu0 0.0
  %2181 = vmatprep.subr.mxu0 0.0
  %2182 = vmatpush1.msra.mxu0 0.0
  %2183 = vmatprep.subr.mxu0 0.0
  %2184 = vmatpush1.msra.mxu0 0.0
  %2185 = vmatprep.subr.mxu0 0.0
  %2186 = vmatpush1.msra.mxu0 0.0
  %2187 = vmatprep.subr.mxu0 0.0
  %2188 = vmatpush1.msra.mxu0 0.0
  %2189 = vmatprep.subr.mxu0 0.0
  %2190 = vmatpush1.msra.mxu0 0.0
  %2191 = vmatprep.subr.mxu0 0.0
  %2192 = vmatpush1.msra.mxu0 %v2126
  %2193 = vmatprep.subr.mxu0 0.0
  %2194 = vmatpush1.msra.mxu0 %v2125
  %2195 = vmatprep.subr.mxu0 0.0
  %2196 = vmatpush1.msra.mxu0 %v2124
  %2197 = vmatprep.subr.mxu0 0.0
  %2198 = vmatpush1.msra.mxu0 %v2123
  %2199 = vmatprep.subr.mxu0 0.0
  %2200 = vmatpush2.msra.mxu0 0.0
  %2201 = vmatprep.subr.mxu0 0.0
  %2202 = vmatpush2.msra.mxu0 0.0
  %2203 = vmatprep.subr.mxu0 0.0
  %2204 = vmatpush2.msra.mxu0 0.0
  %2205 = vmatprep.subr.mxu0 0.0
  %2206 = vmatpush2.msra.mxu0 0.0
  %2207 = vmatprep.subr.mxu0 0.0
  %2208 = vmatpush2.msra.mxu0 0.0
  %2209 = vmatprep.subr.mxu0 0.0
  %2210 = vmatpush2.msra.mxu0 0.0
  %2211 = vmatprep.subr.mxu0 0.0
  %2212 = vmatpush2.msra.mxu0 0.0
  %2213 = vmatprep.subr.mxu0 0.0
  %2214 = vmatpush2.msra.mxu0 0.0
  %2215 = vmatprep.subr.mxu0 0.0
  %2216 = vmatpush2.msra.mxu0 0.0
  %2217 = vmatprep.subr.mxu0 0.0
  %2218 = vmatpush2.msra.mxu0 0.0
  %2219 = vmatprep.subr.mxu0 0.0
  %2220 = vmatpush2.msra.mxu0 0.0
  %2221 = vmatprep.subr.mxu0 0.0
  %2222 = vmatpush2.msra.mxu0 0.0
  %2223 = vmatprep.subr.mxu0 0.0
  %2224 = vmatpush2.msra.mxu0 0.0
  %2225 = vmatprep.subr.mxu0 0.0
  %2226 = vmatpush2.msra.mxu0 0.0
  %2227 = vmatprep.subr.mxu0 0.0
  %2228 = vmatpush2.msra.mxu0 0.0
  %2229 = vmatprep.subr.mxu0 0.0
  %2230 = vmatpush2.msra.mxu0 0.0
  %2231 = vmatprep.mubr.f32.mxu0 0.0
  %2232 = vmatmul.mubr.f32.gmra.mxu0 %v2163
  %v2233 = vpop.f32.mrf.mxu0
  %v2234 = vadd.f32 0.0, %v2233
  %v2235 = vpop.f32.mrf.mxu0
  %2236 = vmatprep.mubr.f32.mxu0 0.0
  %2237 = vmatmul.mubr.f32.gmra.mxu0 %v2165
  %v2238 = vpop.f32.mrf.mxu0
  %v2239 = vadd.f32 0.0, %v2238
  %v2240 = vpop.f32.mrf.mxu0
  %2241 = vdwg.mxu0
  %2244 = vrot.lane.b32.xlu0 %v2143, 32
  %v2245 = vpop.permute.xlu0 %2244
  %2246 = vrot.lane.b32.xlu0 %v2146, 32
  %v2247 = vpop.permute.xlu0 %2246
  %v2248 = vsel %vm183, %v2245, 0
  %v2250 = vsel %vm183, %v2247, 0
  %2252 = vmatprep.subr.mxu0 0.0
  %2253 = vmatpush1.msra.mxu0 0.0
  %2254 = vmatprep.subr.mxu0 0.0
  %2255 = vmatpush1.msra.mxu0 0.0
  %2256 = vmatprep.subr.mxu0 0.0
  %2257 = vmatpush1.msra.mxu0 0.0
  %2258 = vmatprep.subr.mxu0 0.0
  %2259 = vmatpush1.msra.mxu0 0.0
  %2260 = vmatprep.subr.mxu0 0.0
  %2261 = vmatpush1.msra.mxu0 0.0
  %2262 = vmatprep.subr.mxu0 0.0
  %2263 = vmatpush1.msra.mxu0 0.0
  %2264 = vmatprep.subr.mxu0 0.0
  %2265 = vmatpush1.msra.mxu0 0.0
  %2266 = vmatprep.subr.mxu0 0.0
  %2267 = vmatpush1.msra.mxu0 0.0
  %2268 = vmatprep.subr.mxu0 0.0
  %2269 = vmatpush1.msra.mxu0 0.0
  %2270 = vmatprep.subr.mxu0 0.0
  %2271 = vmatpush1.msra.mxu0 0.0
  %2272 = vmatprep.subr.mxu0 0.0
  %2273 = vmatpush1.msra.mxu0 0.0
  %2274 = vmatprep.subr.mxu0 0.0
  %2275 = vmatpush1.msra.mxu0 0.0
  %2276 = vmatprep.subr.mxu0 0.0
  %2277 = vmatpush1.msra.mxu0 %v2122
  %2278 = vmatprep.subr.mxu0 0.0
  %2279 = vmatpush1.msra.mxu0 %v2121
  %2280 = vmatprep.subr.mxu0 0.0
  %2281 = vmatpush1.msra.mxu0 %v2120
  %2282 = vmatprep.subr.mxu0 0.0
  %2283 = vmatpush1.msra.mxu0 %v2119
  %2284 = vmatprep.subr.mxu0 0.0
  %2285 = vmatpush2.msra.mxu0 0.0
  %2286 = vmatprep.subr.mxu0 0.0
  %2287 = vmatpush2.msra.mxu0 0.0
  %2288 = vmatprep.subr.mxu0 0.0
  %2289 = vmatpush2.msra.mxu0 0.0
  %2290 = vmatprep.subr.mxu0 0.0
  %2291 = vmatpush2.msra.mxu0 0.0
  %2292 = vmatprep.subr.mxu0 0.0
  %2293 = vmatpush2.msra.mxu0 0.0
  %2294 = vmatprep.subr.mxu0 0.0
  %2295 = vmatpush2.msra.mxu0 0.0
  %2296 = vmatprep.subr.mxu0 0.0
  %2297 = vmatpush2.msra.mxu0 0.0
  %2298 = vmatprep.subr.mxu0 0.0
  %2299 = vmatpush2.msra.mxu0 0.0
  %2300 = vmatprep.subr.mxu0 0.0
  %2301 = vmatpush2.msra.mxu0 0.0
  %2302 = vmatprep.subr.mxu0 0.0
  %2303 = vmatpush2.msra.mxu0 0.0
  %2304 = vmatprep.subr.mxu0 0.0
  %2305 = vmatpush2.msra.mxu0 0.0
  %2306 = vmatprep.subr.mxu0 0.0
  %2307 = vmatpush2.msra.mxu0 0.0
  %2308 = vmatprep.subr.mxu0 0.0
  %2309 = vmatpush2.msra.mxu0 0.0
  %2310 = vmatprep.subr.mxu0 0.0
  %2311 = vmatpush2.msra.mxu0 0.0
  %2312 = vmatprep.subr.mxu0 0.0
  %2313 = vmatpush2.msra.mxu0 0.0
  %2314 = vmatprep.subr.mxu0 0.0
  %2315 = vmatpush2.msra.mxu0 0.0
  %2316 = vmatprep.mubr.f32.mxu0 0.0
  %2317 = vmatmul.mubr.f32.gmra.mxu0 %v2248
  %v2318 = vpop.f32.mrf.mxu0
  %v2319 = vadd.f32 %v2234, %v2318
  %v2320 = vpop.f32.mrf.mxu0
  %2321 = vmatprep.mubr.f32.mxu0 0.0
  %2322 = vmatmul.mubr.f32.gmra.mxu0 %v2250
  %v2323 = vpop.f32.mrf.mxu0
  %v2324 = vadd.f32 %v2239, %v2323
  %v2325 = vpop.f32.mrf.mxu0
  %2326 = vdwg.mxu0
  %v2327 = vlaneseq
  %v2328 = vshrl.u32 %v2327, 7
  %v2329 = vsub.s32 0, %v2328
  %v2330 = vrot.slane %v2127, %v2329
  %v2331 = vadd.f32 %v2319, %v2330
  %v2332 = vadd.f32 %v2324, %v2330
  %v2333 = vmax.f32 %v2331, 0.0
  %v2334 = vmax.f32 %v2332, 0.0
  %v2337 = vunpack.c.l.s4 1966171168
  %v2338 = vunpack.c.0.s8 %v2337
  %v2339 = vlaneseq
  %v2340 = vshrl.u32 %v2339, 7
  %v2341 = vsub.s32 %v2338, %v2340
  %v2342 = vrot.slane %v2333, %v2341
  %v2343 = vcombine.high %v2342, %v2342
  %v2345 = vunpack.c.l.s4 1966171168
  %v2346 = vunpack.c.0.s8 %v2345
  %v2347 = vlaneseq
  %v2348 = vshrl.u32 %v2347, 7
  %v2349 = vsub.s32 %v2346, %v2348
  %v2350 = vrot.slane %v2342, %v2349
  %v2352 = vunpack.c.l.s4 1966171168
  %v2353 = vunpack.c.0.s8 %v2352
  %v2354 = vlaneseq
  %v2355 = vshrl.u32 %v2354, 7
  %v2356 = vsub.s32 %v2353, %v2355
  %v2357 = vrot.slane %v2343, %v2356
  %vm2360 = vcmask 24576
  %2361 = vst.msk [vmem:[%s5] sm:$0x1] %vm2360, %v2350
  %2362 = vst.msk [vmem:[%s5 + $0x8] sm:$0x1] %vm2360, %v2357
  %v2363 = vcombine.high %v2350, %v2350
  %v2364 = vcombine.high %v2357, %v2357
  %2367 = vst.msk [vmem:[%s5 + $0x1] sm:$0x1] %vm2360, %v2363
  %2368 = vst.msk [vmem:[%s5 + $0x9] sm:$0x1] %vm2360, %v2364
  %v2369 = vcombine.high %v2333, %v2333
  %v2371 = vunpack.c.l.s4 1966171168
  %v2372 = vunpack.c.0.s8 %v2371
  %v2373 = vlaneseq
  %v2374 = vshrl.u32 %v2373, 7
  %v2375 = vsub.s32 %v2372, %v2374
  %v2376 = vrot.slane %v2369, %v2375
  %v2377 = vcombine.high %v2376, %v2376
  %v2379 = vunpack.c.l.s4 1966171168
  %v2380 = vunpack.c.0.s8 %v2379
  %v2381 = vlaneseq
  %v2382 = vshrl.u32 %v2381, 7
  %v2383 = vsub.s32 %v2380, %v2382
  %v2384 = vrot.slane %v2376, %v2383
  %v2386 = vunpack.c.l.s4 1966171168
  %v2387 = vunpack.c.0.s8 %v2386
  %v2388 = vlaneseq
  %v2389 = vshrl.u32 %v2388, 7
  %v2390 = vsub.s32 %v2387, %v2389
  %v2391 = vrot.slane %v2377, %v2390
  %2394 = vst.msk [vmem:[%s5 + $0x2] sm:$0x1] %vm2360, %v2384
  %2395 = vst.msk [vmem:[%s5 + $0xa] sm:$0x1] %vm2360, %v2391
  %v2396 = vcombine.high %v2384, %v2384
  %v2397 = vcombine.high %v2391, %v2391
  %2400 = vst.msk [vmem:[%s5 + $0x3] sm:$0x1] %vm2360, %v2396
  %2401 = vst.msk [vmem:[%s5 + $0xb] sm:$0x1] %vm2360, %v2397
  %v2404 = vunpack.c.l.s4 1966171168
  %v2405 = vunpack.c.0.s8 %v2404
  %v2406 = vlaneseq
  %v2407 = vshrl.u32 %v2406, 7
  %v2408 = vsub.s32 %v2405, %v2407
  %v2409 = vrot.slane %v2334, %v2408
  %v2410 = vcombine.high %v2409, %v2409
  %v2412 = vunpack.c.l.s4 1966171168
  %v2413 = vunpack.c.0.s8 %v2412
  %v2414 = vlaneseq
  %v2415 = vshrl.u32 %v2414, 7
  %v2416 = vsub.s32 %v2413, %v2415
  %v2417 = vrot.slane %v2409, %v2416
  %v2419 = vunpack.c.l.s4 1966171168
  %v2420 = vunpack.c.0.s8 %v2419
  %v2421 = vlaneseq
  %v2422 = vshrl.u32 %v2421, 7
  %v2423 = vsub.s32 %v2420, %v2422
  %v2424 = vrot.slane %v2410, %v2423
  %2427 = vst.msk [vmem:[%s5 + $0x4] sm:$0x1] %vm2360, %v2417
  %2428 = vst.msk [vmem:[%s5 + $0xc] sm:$0x1] %vm2360, %v2424
  %v2429 = vcombine.high %v2417, %v2417
  %v2430 = vcombine.high %v2424, %v2424
  %2433 = vst.msk [vmem:[%s5 + $0x5] sm:$0x1] %vm2360, %v2429
  %2434 = vst.msk [vmem:[%s5 + $0xd] sm:$0x1] %vm2360, %v2430
  %v2435 = vcombine.high %v2334, %v2334
  %v2437 = vunpack.c.l.s4 1966171168
  %v2438 = vunpack.c.0.s8 %v2437
  %v2439 = vlaneseq
  %v2440 = vshrl.u32 %v2439, 7
  %v2441 = vsub.s32 %v2438, %v2440
  %v2442 = vrot.slane %v2435, %v2441
  %v2443 = vcombine.high %v2442, %v2442
  %v2445 = vunpack.c.l.s4 1966171168
  %v2446 = vunpack.c.0.s8 %v2445
  %v2447 = vlaneseq
  %v2448 = vshrl.u32 %v2447, 7
  %v2449 = vsub.s32 %v2446, %v2448
  %v2450 = vrot.slane %v2442, %v2449
  %v2452 = vunpack.c.l.s4 1966171168
  %v2453 = vunpack.c.0.s8 %v2452
  %v2454 = vlaneseq
  %v2455 = vshrl.u32 %v2454, 7
  %v2456 = vsub.s32 %v2453, %v2455
  %v2457 = vrot.slane %v2443, %v2456
  %2460 = vst.msk [vmem:[%s5 + $0x6] sm:$0x1] %vm2360, %v2450
  %2461 = vst.msk [vmem:[%s5 + $0xe] sm:$0x1] %vm2360, %v2457
  %v2462 = vcombine.high %v2450, %v2450
  %v2463 = vcombine.high %v2457, %v2457
  %2466 = vst.msk [vmem:[%s5 + $0x7] sm:$0x1] %vm2360, %v2462
  %2467 = vst.msk [vmem:[%s5 + $0xf] sm:$0x1] %vm2360, %v2463
  // Predicated region
  $region22: #{gan_generator_forward.1} parent=0 // pred_check
    _
  $region23: #{gan_generator_forward.1} parent=0 // pred_check_branch
    %2469 = sbr.rel (0) target = $region25
  $region24: #{gan_generator_forward.1} parent=0 // pred_region
    _
  $region25: #{gan_generator_forward.1} parent=0 // pred_fallthru
    _
  // Predicated region
  $region26: #{gan_generator_forward.1} parent=0 // pred_check
    _
  $region27: #{gan_generator_forward.1} parent=0 // pred_check_branch
    %2471 = sbr.rel (0) target = $region29
  $region28: #{gan_generator_forward.1} parent=0 // pred_region
    _
  $region29: #{gan_generator_forward.1} parent=0 // pred_fallthru
    _

</llo_original>
